<compile_context>
chip_gen: v6e
topology: v6e:2x2x1
jax: 0.10.0
libtpu: 0.0.40
codegen_flags: <defaults>
</compile_context>

<pallas_src>
import functools

import jax
import jax.numpy as jnp
from jax.experimental import pallas as pl
from jax.experimental.pallas import tpu as pltpu

# ------------- static model configuration (Python constants, NOT traced) -----
BATCH = 2
SEQ = 16
HIDDEN = 128            # lane-dense (multiple of 128)
N_HEADS = 2
HEAD_DIM = HIDDEN // N_HEADS
FFN_DIM = 256
NUM_LAYERS = 4
N_CLS_LAYERS = 3        # CLS of last 3 layers -> Linear(3*HIDDEN, HIDDEN)
MID = 128               # mid_size (scaled down, lane-dense)
N_CLASSES = 2
VOCAB = 64
TYPE_VOCAB = 2
MAX_POS = 32
LN_EPS = 1e-12
BN_EPS = 1e-5
NEG_INF = -1e9
PACK = BATCH * N_HEADS * SEQ   # (batch, head) attention instances packed on sublanes


# ------------------------------ in-kernel helpers -----------------------------
def _ln(x, g, b, eps):
    mu = jnp.mean(x, axis=-1, keepdims=True)
    var = jnp.mean((x - mu) ** 2, axis=-1, keepdims=True)
    return (x - mu) * jax.lax.rsqrt(var + eps) * g + b


def _mm(a_bf16, w_ref):
    # bf16 operands on the MXU, f32 accumulation.
    return jnp.dot(a_bf16, w_ref[...], preferred_element_type=jnp.float32)


# --------------------------------- fused kernel -------------------------------
def _fused_bert_kernel(
        emb_ref, mask_ref, ln_e_g_ref, ln_e_b_ref,
        wqkv_ref, bqkv_ref, wo_ref, bo_ref, ln1g_ref, ln1b_ref,
        wf1_ref, bf1_ref, wf2_ref, bf2_ref, ln2g_ref, ln2b_ref,
        hw1_ref, hb1_ref, hs1_ref, ht1_ref,
        hw2_ref, hb2_ref, hs2_ref, ht2_ref,
        hw3_ref, hb3_ref,
        logits_ref, prob_ref,
        x_ref, cls_ref,
        *, batch, seq, n_heads, head_dim, eps):
    l = pl.program_id(0)
    hidden = n_heads * head_dim

    # -- grid step 0: embedding LayerNorm into the resident activation scratch
    @pl.when(l == 0)
    def _():
        x_ref[...] = _ln(emb_ref[...], ln_e_g_ref[...], ln_e_b_ref[...], eps)

    x = x_ref[...]                              # [B*S, H] f32, resident in VMEM
    xb = x.astype(jnp.bfloat16)                 # cast once per layer

    # -- fused QKV projection: one [H, 3H] matmul -------------------------------
    qkv = _mm(xb, wqkv_ref) + bqkv_ref[...]     # [B*S, 3H] f32
    q = qkv[:, 0 * hidden:1 * hidden]
    k = qkv[:, 1 * hidden:2 * hidden]
    v = qkv[:, 2 * hidden:3 * hidden]

    # -- pack all (batch, head) instances along sublanes -> [PACK, head_dim] ----
    def pack(t):
        return jnp.concatenate(
            [t[b * seq:(b + 1) * seq, h * head_dim:(h + 1) * head_dim]
             for b in range(batch) for h in range(n_heads)], axis=0)

    qp, kp, vp = pack(q), pack(k), pack(v)
    scale = 1.0 / float(head_dim) ** 0.5
    # mask_ref is block-diagonal over (b, h) blocks + key-padding bias.
    s = jnp.dot(qp, kp.T, preferred_element_type=jnp.float32) * scale + mask_ref[...]
    m = jnp.max(s, axis=-1, keepdims=True)
    p = jnp.exp(s - m)
    p = p * pl.reciprocal(jnp.sum(p, axis=-1, keepdims=True), approx=True)
    ctx_p = jnp.dot(p, vp, preferred_element_type=jnp.float32)    # [PACK, head_dim]

    # -- unpack to [B*S, H]: heads along lanes, batches along sublanes ----------
    ctx = jnp.concatenate(
        [jnp.concatenate(
            [ctx_p[(b * n_heads + h) * seq:(b * n_heads + h + 1) * seq, :]
             for h in range(n_heads)], axis=1)
         for b in range(batch)], axis=0)                          # [B*S, H]

    # -- single output projection, residual + LN --------------------------------
    attn = _mm(ctx.astype(jnp.bfloat16), wo_ref) + bo_ref[...]
    x1 = _ln(x + attn, ln1g_ref[...], ln1b_ref[...], eps)

    # -- FFN + residual + LN -----------------------------------------------------
    # TODO(synk): HF BERT uses exact erf-GELU; tanh approximation used here.
    hf = jax.nn.gelu(_mm(x1.astype(jnp.bfloat16), wf1_ref) + bf1_ref[...],
                     approximate=True)
    ffn = _mm(hf.astype(jnp.bfloat16), wf2_ref) + bf2_ref[...]
    x2 = _ln(x1 + ffn, ln2g_ref[...], ln2b_ref[...], eps)
    x_ref[...] = x2

    # -- stash CLS rows of the last N_CLS_LAYERS layers into the [B, 3H] scratch
    cls_rows = jnp.concatenate(
        [x2[b * seq:b * seq + 1, :] for b in range(batch)], axis=0)   # [B, H]
    for idx in range(N_CLS_LAYERS):
        layer_k = NUM_LAYERS - N_CLS_LAYERS + idx

        @pl.when(l == layer_k)
        def _(idx=idx):
            cls_ref[:, idx * HIDDEN:(idx + 1) * HIDDEN] = cls_rows

    # -- last step: classifier head (dropout identity in inference) -------------
    @pl.when(l == NUM_LAYERS - 1)
    def _():
        # TODO(synk): the 5-sample high_dropout ensemble mean collapses to a
        # single pass in eval mode (dropout = identity).
        xc = cls_ref[...].astype(jnp.bfloat16)                        # [B, 3H]
        h1 = _mm(xc, hw1_ref) + hb1_ref[...]                          # Linear(3H, H)
        h1 = jnp.maximum(h1 * hs1_ref[...] + ht1_ref[...], 0.0)       # folded BN + ReLU
        h2 = _mm(h1.astype(jnp.bfloat16), hw2_ref) + hb2_ref[...]     # Linear(H, MID)
        h2 = jnp.maximum(h2 * hs2_ref[...] + ht2_ref[...], 0.0)       # folded BN + ReLU
        logits = _mm(h2.astype(jnp.bfloat16), hw3_ref) + hb3_ref[...]  # Linear(MID, 2)
        logits_ref[...] = logits.astype(logits_ref.dtype)
        mx = jnp.max(logits, axis=-1, keepdims=True)
        e = jnp.exp(logits - mx)
        prob_ref[...] = (e / jnp.sum(e, axis=-1, keepdims=True)).astype(prob_ref.dtype)


# ------------------------------- BlockSpec helpers -----------------------------
def _resident(*dims):
    # full-array block, constant index map -> fetched once, stays in VMEM
    n = len(dims)
    return pl.BlockSpec(dims, lambda l: (0,) * n)


def _per_layer(*dims):
    # [NUM_LAYERS, ...] stacked weight; leading dim squeezed, indexed by layer
    n = len(dims)
    return pl.BlockSpec((None,) + dims, lambda l: (l,) + (0,) * n)


# --------------------------------- forward glue --------------------------------
def bert_classifier_forward(params, input_ids, input_types):
    batch, seq = input_ids.shape

    # Embedding gathers stay in plain JAX; all dense compute is one Pallas call.
    emb = (params["word_emb"][input_ids]
           + params["type_emb"][input_types]
           + params["pos_emb"][None, :seq, :]).reshape(batch * seq, HIDDEN)

    # Additive bias for the packed (batch, head) score matrix:
    # 0 within the same (b, h) block for non-padded keys, -1e9 elsewhere
    # (attention_mask = torch.ne(input_ids, 0) masks keys).
    pack = batch * N_HEADS * seq
    idx = jnp.arange(pack)
    same_block = (idx[:, None] // seq) == (idx[None, :] // seq)
    key_valid = input_ids[idx // (N_HEADS * seq), idx % seq] != 0
    attn_bias = jnp.where(same_block & key_valid[None, :], 0.0, NEG_INF
                          ).astype(jnp.float32)                      # [PACK, PACK]

    hp = params["head"]
    kernel = functools.partial(_fused_bert_kernel, batch=batch, seq=seq,
                               n_heads=N_HEADS, head_dim=HEAD_DIM, eps=LN_EPS)

    logits, probability = pl.pallas_call(
        kernel,
        out_shape=(jax.ShapeDtypeStruct((batch, N_CLASSES), jnp.float32),
                   jax.ShapeDtypeStruct((batch, N_CLASSES), jnp.float32)),
        grid=(NUM_LAYERS,),
        in_specs=[
            _resident(batch * seq, HIDDEN),                       # emb (step 0 only)
            _resident(pack, pack),                                # packed attn bias
            _resident(1, HIDDEN), _resident(1, HIDDEN),           # embedding LN
            _per_layer(HIDDEN, 3 * HIDDEN), _per_layer(1, 3 * HIDDEN),   # QKV
            _per_layer(HIDDEN, HIDDEN), _per_layer(1, HIDDEN),           # out proj
            _per_layer(1, HIDDEN), _per_layer(1, HIDDEN),                # LN1
            _per_layer(HIDDEN, FFN_DIM), _per_layer(1, FFN_DIM),         # FFN in
            _per_layer(FFN_DIM, HIDDEN), _per_layer(1, HIDDEN),          # FFN out
            _per_layer(1, HIDDEN), _per_layer(1, HIDDEN),                # LN2
            _resident(N_CLS_LAYERS * HIDDEN, HIDDEN), _resident(1, HIDDEN),  # head L1
            _resident(1, HIDDEN), _resident(1, HIDDEN),                      # BN1 folded
            _resident(HIDDEN, MID), _resident(1, MID),                       # head L2
            _resident(1, MID), _resident(1, MID),                            # BN2 folded
            _resident(MID, N_CLASSES), _resident(1, N_CLASSES),              # classifier
        ],
        out_specs=(_resident(batch, N_CLASSES), _resident(batch, N_CLASSES)),
        scratch_shapes=[
            pltpu.VMEM((batch * seq, HIDDEN), jnp.float32),           # resident activations
            pltpu.VMEM((batch, N_CLS_LAYERS * HIDDEN), jnp.float32),  # concatenated CLS
        ],
        compiler_params=pltpu.CompilerParams(
            dimension_semantics=("arbitrary",)),   # layers are sequential
    )(emb, attn_bias, params["ln_emb_g"], params["ln_emb_b"],
      params["wqkv"], params["bqkv"], params["wo"], params["bo"],
      params["ln1_g"], params["ln1_b"],
      params["w_ffn1"], params["b_ffn1"], params["w_ffn2"], params["b_ffn2"],
      params["ln2_g"], params["ln2_b"],
      hp["w1"], hp["b1"], hp["bn1_scale"], hp["bn1_shift"],
      hp["w2"], hp["b2"], hp["bn2_scale"], hp["bn2_shift"],
      hp["w3"], hp["b3"])
    return logits, probability


# --------------------------- deterministic parameter init ----------------------
def init_params(key):
    ks = iter(jax.random.split(key, 32))

    def dense(shape, scale=0.02):
        # matmul weights stored in bf16 (f32 accumulation inside the kernel)
        return (scale * jax.random.normal(next(ks), shape, jnp.float32)
                ).astype(jnp.bfloat16)

    def randf(shape, scale=0.05):
        return scale * jax.random.normal(next(ks), shape, jnp.float32)

    L = NUM_LAYERS
    p = {
        "word_emb": randf((VOCAB, HIDDEN), 0.02),
        "type_emb": randf((TYPE_VOCAB, HIDDEN), 0.02),
        "pos_emb": randf((MAX_POS, HIDDEN), 0.02),
        "ln_emb_g": jnp.ones((1, HIDDEN), jnp.float32),
        "ln_emb_b": jnp.zeros((1, HIDDEN), jnp.float32),
        # per-layer weights stacked on a leading layer axis (streamed by BlockSpec)
        "wqkv": dense((L, HIDDEN, 3 * HIDDEN)),
        "bqkv": jnp.zeros((L, 1, 3 * HIDDEN), jnp.float32),
        "wo": dense((L, HIDDEN, HIDDEN)),
        "bo": jnp.zeros((L, 1, HIDDEN), jnp.float32),
        "ln1_g": jnp.ones((L, 1, HIDDEN), jnp.float32),
        "ln1_b": jnp.zeros((L, 1, HIDDEN), jnp.float32),
        "w_ffn1": dense((L, HIDDEN, FFN_DIM)),
        "b_ffn1": jnp.zeros((L, 1, FFN_DIM), jnp.float32),
        "w_ffn2": dense((L, FFN_DIM, HIDDEN)),
        "b_ffn2": jnp.zeros((L, 1, HIDDEN), jnp.float32),
        "ln2_g": jnp.ones((L, 1, HIDDEN), jnp.float32),
        "ln2_b": jnp.zeros((L, 1, HIDDEN), jnp.float32),
    }

    def fold_bn(dim):
        # BatchNorm1d in inference mode, default running stats / affine init.
        gamma = jnp.ones((1, dim), jnp.float32)
        beta = jnp.zeros((1, dim), jnp.float32)
        mean = jnp.zeros((1, dim), jnp.float32)
        var = jnp.ones((1, dim), jnp.float32)
        scale = gamma * jax.lax.rsqrt(var + BN_EPS)
        return scale, beta - mean * scale

    bn1_s, bn1_t = fold_bn(HIDDEN)
    bn2_s, bn2_t = fold_bn(MID)
    # TODO(synk): reference slices hidden_layers[-4:] but feeds Linear(hidden*3);
    # we use the CLS of the last 3 layers so the shapes agree.
    p["head"] = {
        "w1": dense((N_CLS_LAYERS * HIDDEN, HIDDEN), 0.05),
        "b1": randf((1, HIDDEN)),
        "bn1_scale": bn1_s, "bn1_shift": bn1_t,
        "w2": dense((HIDDEN, MID), 0.05),
        "b2": randf((1, MID)),
        "bn2_scale": bn2_s, "bn2_shift": bn2_t,
        "w3": dense((MID, N_CLASSES), 0.05),
        "b3": randf((1, N_CLASSES)),
    }
    return p


# -------------------------------------------------------------------------------
if __name__ == "__main__":
    key = jax.random.PRNGKey(0)
    k_ids, k_types, k_params = jax.random.split(key, 3)

    input_ids = jax.random.randint(k_ids, (BATCH, SEQ), 1, VOCAB, dtype=jnp.int32)
    # introduce padding (id == 0) so the attention mask path is exercised
    input_ids = input_ids.at[1, -3:].set(0)
    input_types = jax.random.randint(k_types, (BATCH, SEQ), 0, TYPE_VOCAB,
                                     dtype=jnp.int32)

    params = init_params(k_params)

    fwd = jax.jit(bert_classifier_forward)
    logits, probability = fwd(params, input_ids, input_types)
    jax.block_until_ready((logits, probability))

    assert logits.shape == (BATCH, N_CLASSES)
    assert probability.shape == (BATCH, N_CLASSES)
    assert bool(jnp.all(jnp.isfinite(logits)))
    assert bool(jnp.all(jnp.isfinite(probability)))
    assert bool(jnp.allclose(jnp.sum(probability, axis=-1), 1.0, atol=1e-4))
    print("KERNEL_OK")
</pallas_src>

<mosaic_0001>
module attributes {stable_mosaic.version = 11 : i64} {
  func.func @_fused_bert_kernel(%arg0: i32, %arg1: memref<32x128xf32, #tpu.memory_space<vmem>>, %arg2: memref<64x64xf32, #tpu.memory_space<vmem>>, %arg3: memref<1x128xf32, #tpu.memory_space<vmem>>, %arg4: memref<1x128xf32, #tpu.memory_space<vmem>>, %arg5: memref<1x128x384xbf16, #tpu.memory_space<vmem>>, %arg6: memref<1x1x384xf32, #tpu.memory_space<vmem>>, %arg7: memref<1x128x128xbf16, #tpu.memory_space<vmem>>, %arg8: memref<1x1x128xf32, #tpu.memory_space<vmem>>, %arg9: memref<1x1x128xf32, #tpu.memory_space<vmem>>, %arg10: memref<1x1x128xf32, #tpu.memory_space<vmem>>, %arg11: memref<1x128x256xbf16, #tpu.memory_space<vmem>>, %arg12: memref<1x1x256xf32, #tpu.memory_space<vmem>>, %arg13: memref<1x256x128xbf16, #tpu.memory_space<vmem>>, %arg14: memref<1x1x128xf32, #tpu.memory_space<vmem>>, %arg15: memref<1x1x128xf32, #tpu.memory_space<vmem>>, %arg16: memref<1x1x128xf32, #tpu.memory_space<vmem>>, %arg17: memref<384x128xbf16, #tpu.memory_space<vmem>>, %arg18: memref<1x128xf32, #tpu.memory_space<vmem>>, %arg19: memref<1x128xf32, #tpu.memory_space<vmem>>, %arg20: memref<1x128xf32, #tpu.memory_space<vmem>>, %arg21: memref<128x128xbf16, #tpu.memory_space<vmem>>, %arg22: memref<1x128xf32, #tpu.memory_space<vmem>>, %arg23: memref<1x128xf32, #tpu.memory_space<vmem>>, %arg24: memref<1x128xf32, #tpu.memory_space<vmem>>, %arg25: memref<128x2xbf16, #tpu.memory_space<vmem>>, %arg26: memref<1x2xf32, #tpu.memory_space<vmem>>, %arg27: memref<2x2xf32, #tpu.memory_space<vmem>>, %arg28: memref<2x2xf32, #tpu.memory_space<vmem>>, %arg29: memref<32x128xf32, #tpu.memory_space<vmem>>, %arg30: memref<2x384xf32, #tpu.memory_space<vmem>>) attributes {dimension_semantics = [#tpu.dimension_semantics<arbitrary>], iteration_bounds = array<i64: 4>, scalar_prefetch = 0 : i64, scratch_operands = 2 : i64, tpu.core_type = #tpu.core_type<tc>, window_params = [{pipeline_mode = #tpu.pipeline_mode<synchronous>, transform_indices = @transform_0, window_bounds = array<i64: 32, 128>}, {pipeline_mode = #tpu.pipeline_mode<synchronous>, transform_indices = @transform_1, window_bounds = array<i64: 64, 64>}, {pipeline_mode = #tpu.pipeline_mode<synchronous>, transform_indices = @transform_2, window_bounds = array<i64: 1, 128>}, {pipeline_mode = #tpu.pipeline_mode<synchronous>, transform_indices = @transform_3, window_bounds = array<i64: 1, 128>}, {transform_indices = @transform_4, window_bounds = array<i64: 1, 128, 384>}, {transform_indices = @transform_5, window_bounds = array<i64: 1, 1, 384>}, {transform_indices = @transform_6, window_bounds = array<i64: 1, 128, 128>}, {transform_indices = @transform_7, window_bounds = array<i64: 1, 1, 128>}, {transform_indices = @transform_8, window_bounds = array<i64: 1, 1, 128>}, {transform_indices = @transform_9, window_bounds = array<i64: 1, 1, 128>}, {transform_indices = @transform_10, window_bounds = array<i64: 1, 128, 256>}, {transform_indices = @transform_11, window_bounds = array<i64: 1, 1, 256>}, {transform_indices = @transform_12, window_bounds = array<i64: 1, 256, 128>}, {transform_indices = @transform_13, window_bounds = array<i64: 1, 1, 128>}, {transform_indices = @transform_14, window_bounds = array<i64: 1, 1, 128>}, {transform_indices = @transform_15, window_bounds = array<i64: 1, 1, 128>}, {pipeline_mode = #tpu.pipeline_mode<synchronous>, transform_indices = @transform_16, window_bounds = array<i64: 384, 128>}, {pipeline_mode = #tpu.pipeline_mode<synchronous>, transform_indices = @transform_17, window_bounds = array<i64: 1, 128>}, {pipeline_mode = #tpu.pipeline_mode<synchronous>, transform_indices = @transform_18, window_bounds = array<i64: 1, 128>}, {pipeline_mode = #tpu.pipeline_mode<synchronous>, transform_indices = @transform_19, window_bounds = array<i64: 1, 128>}, {pipeline_mode = #tpu.pipeline_mode<synchronous>, transform_indices = @transform_20, window_bounds = array<i64: 128, 128>}, {pipeline_mode = #tpu.pipeline_mode<synchronous>, transform_indices = @transform_21, window_bounds = array<i64: 1, 128>}, {pipeline_mode = #tpu.pipeline_mode<synchronous>, transform_indices = @transform_22, window_bounds = array<i64: 1, 128>}, {pipeline_mode = #tpu.pipeline_mode<synchronous>, transform_indices = @transform_23, window_bounds = array<i64: 1, 128>}, {pipeline_mode = #tpu.pipeline_mode<synchronous>, transform_indices = @transform_24, window_bounds = array<i64: 128, 2>}, {pipeline_mode = #tpu.pipeline_mode<synchronous>, transform_indices = @transform_25, window_bounds = array<i64: 1, 2>}, {pipeline_mode = #tpu.pipeline_mode<synchronous>, transform_indices = @transform_26, window_bounds = array<i64: 2, 2>}, {pipeline_mode = #tpu.pipeline_mode<synchronous>, transform_indices = @transform_27, window_bounds = array<i64: 2, 2>}]} {
    %c0_i32 = arith.constant 0 : i32
    %0 = arith.cmpi eq, %arg0, %c0_i32 : i32
    %1 = arith.extui %0 : i1 to i32
    %c0_i32_0 = arith.constant 0 : i32
    %2 = arith.cmpi ne, %1, %c0_i32_0 : i32
    scf.if %2 {
      %c0_69 = arith.constant 0 : index
      %c0_70 = arith.constant 0 : index
      %161 = vector.load %arg1[%c0_69, %c0_70] : memref<32x128xf32, #tpu.memory_space<vmem>>, vector<32x128xf32>
      %c0_71 = arith.constant 0 : index
      %c0_72 = arith.constant 0 : index
      %162 = vector.load %arg3[%c0_71, %c0_72] : memref<1x128xf32, #tpu.memory_space<vmem>>, vector<1x128xf32>
      %c0_73 = arith.constant 0 : index
      %c0_74 = arith.constant 0 : index
      %163 = vector.load %arg4[%c0_73, %c0_74] : memref<1x128xf32, #tpu.memory_space<vmem>>, vector<1x128xf32>
      %cst_75 = arith.constant dense<0.000000e+00> : vector<32xf32>
      %164 = vector.multi_reduction <add>, %161, %cst_75 [1] : vector<32x128xf32> to vector<32xf32>
      %165 = vector.shape_cast %164 : vector<32xf32> to vector<32x1xf32>
      %cst_76 = arith.constant 1.280000e+02 : f32
      %166 = vector.broadcast %cst_76 : f32 to vector<32x1xf32>
      %167 = arith.divf %165, %166 : vector<32x1xf32>
      %168 = vector.broadcast %167 : vector<32x1xf32> to vector<32x128xf32>
      %169 = arith.subf %161, %168 : vector<32x128xf32>
      %170 = arith.mulf %169, %169 : vector<32x128xf32>
      %cst_77 = arith.constant dense<0.000000e+00> : vector<32xf32>
      %171 = vector.multi_reduction <add>, %170, %cst_77 [1] : vector<32x128xf32> to vector<32xf32>
      %172 = vector.shape_cast %171 : vector<32xf32> to vector<32x1xf32>
      %cst_78 = arith.constant 1.280000e+02 : f32
      %173 = vector.broadcast %cst_78 : f32 to vector<32x1xf32>
      %174 = arith.divf %172, %173 : vector<32x1xf32>
      %175 = vector.broadcast %167 : vector<32x1xf32> to vector<32x128xf32>
      %176 = arith.subf %161, %175 : vector<32x128xf32>
      %cst_79 = arith.constant 9.99999996E-13 : f32
      %177 = vector.broadcast %cst_79 : f32 to vector<32x1xf32>
      %178 = arith.addf %174, %177 : vector<32x1xf32>
      %179 = math.rsqrt %178 : vector<32x1xf32>
      %180 = vector.broadcast %179 : vector<32x1xf32> to vector<32x128xf32>
      %181 = arith.mulf %176, %180 : vector<32x128xf32>
      %182 = vector.broadcast %162 : vector<1x128xf32> to vector<32x128xf32>
      %183 = arith.mulf %181, %182 : vector<32x128xf32>
      %184 = vector.broadcast %163 : vector<1x128xf32> to vector<32x128xf32>
      %185 = arith.addf %183, %184 : vector<32x128xf32>
      %c0_80 = arith.constant 0 : index
      %c0_81 = arith.constant 0 : index
      %186 = vector.load %arg29[%c0_80, %c0_81] : memref<32x128xf32, #tpu.memory_space<vmem>>, vector<32x128xf32>
      tpu.vector_store %arg29[%c0_80, %c0_81], %185 {strides = array<i32>} : memref<32x128xf32, #tpu.memory_space<vmem>>, vector<32x128xf32>,
    } else {
    }
    %c0 = arith.constant 0 : index
    %c0_1 = arith.constant 0 : index
    %3 = vector.load %arg29[%c0, %c0_1] : memref<32x128xf32, #tpu.memory_space<vmem>>, vector<32x128xf32>
    %4 = arith.truncf %3 : vector<32x128xf32> to vector<32x128xbf16>
    %c0_2 = arith.constant 0 : index
    %c0_3 = arith.constant 0 : index
    %c0_4 = arith.constant 0 : index
    %5 = vector.load %arg5[%c0_2, %c0_3, %c0_4] : memref<1x128x384xbf16, #tpu.memory_space<vmem>>, vector<1x128x384xbf16>
    %6 = vector.shape_cast %5 : vector<1x128x384xbf16> to vector<128x384xbf16>
    %cst = arith.constant dense<0.000000e+00> : vector<32x384xf32>
    %7 = tpu.matmul %4, %6, %cst {dimension_numbers = #tpu.dot_dimension_numbers<[1], [0], [0], [1], [0, 0, 1, 1], [], []>} : vector<32x128xbf16>, vector<128x384xbf16>, vector<32x384xf32> -> vector<32x384xf32>
    %c0_5 = arith.constant 0 : index
    %c0_6 = arith.constant 0 : index
    %c0_7 = arith.constant 0 : index
    %8 = vector.load %arg6[%c0_5, %c0_6, %c0_7] : memref<1x1x384xf32, #tpu.memory_space<vmem>>, vector<1x1x384xf32>
    %9 = vector.shape_cast %8 : vector<1x1x384xf32> to vector<1x384xf32>
    %10 = vector.broadcast %9 : vector<1x384xf32> to vector<32x384xf32>
    %11 = arith.addf %7, %10 : vector<32x384xf32>
    %12 = vector.extract_strided_slice %11 {offsets = [0, 0], sizes = [32, 128], strides = [1, 1]} : vector<32x384xf32> to vector<32x128xf32>
    %13 = vector.extract_strided_slice %11 {offsets = [0, 128], sizes = [32, 128], strides = [1, 1]} : vector<32x384xf32> to vector<32x128xf32>
    %14 = vector.extract_strided_slice %11 {offsets = [0, 256], sizes = [32, 128], strides = [1, 1]} : vector<32x384xf32> to vector<32x128xf32>
    %15 = vector.extract_strided_slice %12 {offsets = [0, 0], sizes = [16, 64], strides = [1, 1]} : vector<32x128xf32> to vector<16x64xf32>
    %16 = vector.extract_strided_slice %12 {offsets = [0, 64], sizes = [16, 64], strides = [1, 1]} : vector<32x128xf32> to vector<16x64xf32>
    %17 = vector.extract_strided_slice %12 {offsets = [16, 0], sizes = [16, 64], strides = [1, 1]} : vector<32x128xf32> to vector<16x64xf32>
    %18 = vector.extract_strided_slice %12 {offsets = [16, 64], sizes = [16, 64], strides = [1, 1]} : vector<32x128xf32> to vector<16x64xf32>
    %19 = tpu.concatenate %15, %16, %17, %18 in 0 : vector<16x64xf32>, vector<16x64xf32>, vector<16x64xf32>, vector<16x64xf32> -> vector<64x64xf32>
    %20 = vector.extract_strided_slice %13 {offsets = [0, 0], sizes = [16, 64], strides = [1, 1]} : vector<32x128xf32> to vector<16x64xf32>
    %21 = vector.extract_strided_slice %13 {offsets = [0, 64], sizes = [16, 64], strides = [1, 1]} : vector<32x128xf32> to vector<16x64xf32>
    %22 = vector.extract_strided_slice %13 {offsets = [16, 0], sizes = [16, 64], strides = [1, 1]} : vector<32x128xf32> to vector<16x64xf32>
    %23 = vector.extract_strided_slice %13 {offsets = [16, 64], sizes = [16, 64], strides = [1, 1]} : vector<32x128xf32> to vector<16x64xf32>
    %24 = tpu.concatenate %20, %21, %22, %23 in 0 : vector<16x64xf32>, vector<16x64xf32>, vector<16x64xf32>, vector<16x64xf32> -> vector<64x64xf32>
    %25 = vector.extract_strided_slice %14 {offsets = [0, 0], sizes = [16, 64], strides = [1, 1]} : vector<32x128xf32> to vector<16x64xf32>
    %26 = vector.extract_strided_slice %14 {offsets = [0, 64], sizes = [16, 64], strides = [1, 1]} : vector<32x128xf32> to vector<16x64xf32>
    %27 = vector.extract_strided_slice %14 {offsets = [16, 0], sizes = [16, 64], strides = [1, 1]} : vector<32x128xf32> to vector<16x64xf32>
    %28 = vector.extract_strided_slice %14 {offsets = [16, 64], sizes = [16, 64], strides = [1, 1]} : vector<32x128xf32> to vector<16x64xf32>
    %29 = tpu.concatenate %25, %26, %27, %28 in 0 : vector<16x64xf32>, vector<16x64xf32>, vector<16x64xf32>, vector<16x64xf32> -> vector<64x64xf32>
    %30 = tpu.transpose %24, [1, 0] : vector<64x64xf32> -> vector<64x64xf32>
    %cst_8 = arith.constant dense<0.000000e+00> : vector<64x64xf32>
    %31 = tpu.matmul %19, %30, %cst_8 {dimension_numbers = #tpu.dot_dimension_numbers<[1], [0], [0], [1], [0, 0, 1, 1], [], []>} : vector<64x64xf32>, vector<64x64xf32>, vector<64x64xf32> -> vector<64x64xf32>
    %cst_9 = arith.constant 1.250000e-01 : f32
    %32 = vector.broadcast %cst_9 : f32 to vector<64x64xf32>
    %33 = arith.mulf %31, %32 : vector<64x64xf32>
    %c0_10 = arith.constant 0 : index
    %c0_11 = arith.constant 0 : index
    %34 = vector.load %arg2[%c0_10, %c0_11] : memref<64x64xf32, #tpu.memory_space<vmem>>, vector<64x64xf32>
    %35 = arith.addf %33, %34 : vector<64x64xf32>
    %cst_12 = arith.constant dense<0xFF800000> : vector<64xf32>
    %36 = vector.multi_reduction <maximumf>, %35, %cst_12 [1] : vector<64x64xf32> to vector<64xf32>
    %37 = vector.shape_cast %36 : vector<64xf32> to vector<64x1xf32>
    %38 = vector.broadcast %37 : vector<64x1xf32> to vector<64x64xf32>
    %39 = arith.subf %35, %38 : vector<64x64xf32>
    %40 = math.exp %39 : vector<64x64xf32>
    %cst_13 = arith.constant dense<0.000000e+00> : vector<64xf32>
    %41 = vector.multi_reduction <add>, %40, %cst_13 [1] : vector<64x64xf32> to vector<64xf32>
    %42 = vector.shape_cast %41 : vector<64xf32> to vector<64x1xf32>
    %43 = tpu.reciprocal %42 {approx = true} : vector<64x1xf32> -> vector<64x1xf32>
    %44 = vector.broadcast %43 : vector<64x1xf32> to vector<64x64xf32>
    %45 = arith.mulf %40, %44 : vector<64x64xf32>
    %cst_14 = arith.constant dense<0.000000e+00> : vector<64x64xf32>
    %46 = tpu.matmul %45, %29, %cst_14 {dimension_numbers = #tpu.dot_dimension_numbers<[1], [0], [0], [1], [0, 0, 1, 1], [], []>} : vector<64x64xf32>, vector<64x64xf32>, vector<64x64xf32> -> vector<64x64xf32>
    %47 = vector.extract_strided_slice %46 {offsets = [0, 0], sizes = [16, 64], strides = [1, 1]} : vector<64x64xf32> to vector<16x64xf32>
    %48 = vector.extract_strided_slice %46 {offsets = [16, 0], sizes = [16, 64], strides = [1, 1]} : vector<64x64xf32> to vector<16x64xf32>
    %49 = tpu.concatenate %47, %48 in 1 : vector<16x64xf32>, vector<16x64xf32> -> vector<16x128xf32>
    %50 = vector.extract_strided_slice %46 {offsets = [32, 0], sizes = [16, 64], strides = [1, 1]} : vector<64x64xf32> to vector<16x64xf32>
    %51 = vector.extract_strided_slice %46 {offsets = [48, 0], sizes = [16, 64], strides = [1, 1]} : vector<64x64xf32> to vector<16x64xf32>
    %52 = tpu.concatenate %50, %51 in 1 : vector<16x64xf32>, vector<16x64xf32> -> vector<16x128xf32>
    %53 = tpu.concatenate %49, %52 in 0 : vector<16x128xf32>, vector<16x128xf32> -> vector<32x128xf32>
    %54 = arith.truncf %53 : vector<32x128xf32> to vector<32x128xbf16>
    %c0_15 = arith.constant 0 : index
    %c0_16 = arith.constant 0 : index
    %c0_17 = arith.constant 0 : index
    %55 = vector.load %arg7[%c0_15, %c0_16, %c0_17] : memref<1x128x128xbf16, #tpu.memory_space<vmem>>, vector<1x128x128xbf16>
    %56 = vector.shape_cast %55 : vector<1x128x128xbf16> to vector<128x128xbf16>
    %cst_18 = arith.constant dense<0.000000e+00> : vector<32x128xf32>
    %57 = tpu.matmul %54, %56, %cst_18 {dimension_numbers = #tpu.dot_dimension_numbers<[1], [0], [0], [1], [0, 0, 1, 1], [], []>} : vector<32x128xbf16>, vector<128x128xbf16>, vector<32x128xf32> -> vector<32x128xf32>
    %c0_19 = arith.constant 0 : index
    %c0_20 = arith.constant 0 : index
    %c0_21 = arith.constant 0 : index
    %58 = vector.load %arg8[%c0_19, %c0_20, %c0_21] : memref<1x1x128xf32, #tpu.memory_space<vmem>>, vector<1x1x128xf32>
    %59 = vector.shape_cast %58 : vector<1x1x128xf32> to vector<1x128xf32>
    %60 = vector.broadcast %59 : vector<1x128xf32> to vector<32x128xf32>
    %61 = arith.addf %57, %60 : vector<32x128xf32>
    %62 = arith.addf %3, %61 : vector<32x128xf32>
    %c0_22 = arith.constant 0 : index
    %c0_23 = arith.constant 0 : index
    %c0_24 = arith.constant 0 : index
    %63 = vector.load %arg9[%c0_22, %c0_23, %c0_24] : memref<1x1x128xf32, #tpu.memory_space<vmem>>, vector<1x1x128xf32>
    %64 = vector.shape_cast %63 : vector<1x1x128xf32> to vector<1x128xf32>
    %c0_25 = arith.constant 0 : index
    %c0_26 = arith.constant 0 : index
    %c0_27 = arith.constant 0 : index
    %65 = vector.load %arg10[%c0_25, %c0_26, %c0_27] : memref<1x1x128xf32, #tpu.memory_space<vmem>>, vector<1x1x128xf32>
    %66 = vector.shape_cast %65 : vector<1x1x128xf32> to vector<1x128xf32>
    %cst_28 = arith.constant dense<0.000000e+00> : vector<32xf32>
    %67 = vector.multi_reduction <add>, %62, %cst_28 [1] : vector<32x128xf32> to vector<32xf32>
    %68 = vector.shape_cast %67 : vector<32xf32> to vector<32x1xf32>
    %cst_29 = arith.constant 1.280000e+02 : f32
    %69 = vector.broadcast %cst_29 : f32 to vector<32x1xf32>
    %70 = arith.divf %68, %69 : vector<32x1xf32>
    %71 = vector.broadcast %70 : vector<32x1xf32> to vector<32x128xf32>
    %72 = arith.subf %62, %71 : vector<32x128xf32>
    %73 = arith.mulf %72, %72 : vector<32x128xf32>
    %cst_30 = arith.constant dense<0.000000e+00> : vector<32xf32>
    %74 = vector.multi_reduction <add>, %73, %cst_30 [1] : vector<32x128xf32> to vector<32xf32>
    %75 = vector.shape_cast %74 : vector<32xf32> to vector<32x1xf32>
    %cst_31 = arith.constant 1.280000e+02 : f32
    %76 = vector.broadcast %cst_31 : f32 to vector<32x1xf32>
    %77 = arith.divf %75, %76 : vector<32x1xf32>
    %78 = vector.broadcast %70 : vector<32x1xf32> to vector<32x128xf32>
    %79 = arith.subf %62, %78 : vector<32x128xf32>
    %cst_32 = arith.constant 9.99999996E-13 : f32
    %80 = vector.broadcast %cst_32 : f32 to vector<32x1xf32>
    %81 = arith.addf %77, %80 : vector<32x1xf32>
    %82 = math.rsqrt %81 : vector<32x1xf32>
    %83 = vector.broadcast %82 : vector<32x1xf32> to vector<32x128xf32>
    %84 = arith.mulf %79, %83 : vector<32x128xf32>
    %85 = vector.broadcast %64 : vector<1x128xf32> to vector<32x128xf32>
    %86 = arith.mulf %84, %85 : vector<32x128xf32>
    %87 = vector.broadcast %66 : vector<1x128xf32> to vector<32x128xf32>
    %88 = arith.addf %86, %87 : vector<32x128xf32>
    %89 = arith.truncf %88 : vector<32x128xf32> to vector<32x128xbf16>
    %c0_33 = arith.constant 0 : index
    %c0_34 = arith.constant 0 : index
    %c0_35 = arith.constant 0 : index
    %90 = vector.load %arg11[%c0_33, %c0_34, %c0_35] : memref<1x128x256xbf16, #tpu.memory_space<vmem>>, vector<1x128x256xbf16>
    %91 = vector.shape_cast %90 : vector<1x128x256xbf16> to vector<128x256xbf16>
    %cst_36 = arith.constant dense<0.000000e+00> : vector<32x256xf32>
    %92 = tpu.matmul %89, %91, %cst_36 {dimension_numbers = #tpu.dot_dimension_numbers<[1], [0], [0], [1], [0, 0, 1, 1], [], []>} : vector<32x128xbf16>, vector<128x256xbf16>, vector<32x256xf32> -> vector<32x256xf32>
    %c0_37 = arith.constant 0 : index
    %c0_38 = arith.constant 0 : index
    %c0_39 = arith.constant 0 : index
    %93 = vector.load %arg12[%c0_37, %c0_38, %c0_39] : memref<1x1x256xf32, #tpu.memory_space<vmem>>, vector<1x1x256xf32>
    %94 = vector.shape_cast %93 : vector<1x1x256xf32> to vector<1x256xf32>
    %95 = vector.broadcast %94 : vector<1x256xf32> to vector<32x256xf32>
    %96 = arith.addf %92, %95 : vector<32x256xf32>
    %97 = arith.mulf %96, %96 : vector<32x256xf32>
    %98 = arith.mulf %96, %97 : vector<32x256xf32>
    %cst_40 = arith.constant 4.471500e-02 : f32
    %99 = vector.broadcast %cst_40 : f32 to vector<32x256xf32>
    %100 = arith.mulf %99, %98 : vector<32x256xf32>
    %101 = arith.addf %96, %100 : vector<32x256xf32>
    %cst_41 = arith.constant 0.797884583 : f32
    %102 = vector.broadcast %cst_41 : f32 to vector<32x256xf32>
    %103 = arith.mulf %102, %101 : vector<32x256xf32>
    %104 = math.tanh %103 : vector<32x256xf32>
    %cst_42 = arith.constant 1.000000e+00 : f32
    %105 = vector.broadcast %cst_42 : f32 to vector<32x256xf32>
    %106 = arith.addf %105, %104 : vector<32x256xf32>
    %cst_43 = arith.constant 5.000000e-01 : f32
    %107 = vector.broadcast %cst_43 : f32 to vector<32x256xf32>
    %108 = arith.mulf %107, %106 : vector<32x256xf32>
    %109 = arith.mulf %96, %108 : vector<32x256xf32>
    %110 = arith.truncf %109 : vector<32x256xf32> to vector<32x256xbf16>
    %c0_44 = arith.constant 0 : index
    %c0_45 = arith.constant 0 : index
    %c0_46 = arith.constant 0 : index
    %111 = vector.load %arg13[%c0_44, %c0_45, %c0_46] : memref<1x256x128xbf16, #tpu.memory_space<vmem>>, vector<1x256x128xbf16>
    %112 = vector.shape_cast %111 : vector<1x256x128xbf16> to vector<256x128xbf16>
    %cst_47 = arith.constant dense<0.000000e+00> : vector<32x128xf32>
    %113 = tpu.matmul %110, %112, %cst_47 {dimension_numbers = #tpu.dot_dimension_numbers<[1], [0], [0], [1], [0, 0, 1, 1], [], []>} : vector<32x256xbf16>, vector<256x128xbf16>, vector<32x128xf32> -> vector<32x128xf32>
    %c0_48 = arith.constant 0 : index
    %c0_49 = arith.constant 0 : index
    %c0_50 = arith.constant 0 : index
    %114 = vector.load %arg14[%c0_48, %c0_49, %c0_50] : memref<1x1x128xf32, #tpu.memory_space<vmem>>, vector<1x1x128xf32>
    %115 = vector.shape_cast %114 : vector<1x1x128xf32> to vector<1x128xf32>
    %116 = vector.broadcast %115 : vector<1x128xf32> to vector<32x128xf32>
    %117 = arith.addf %113, %116 : vector<32x128xf32>
    %118 = arith.addf %88, %117 : vector<32x128xf32>
    %c0_51 = arith.constant 0 : index
    %c0_52 = arith.constant 0 : index
    %c0_53 = arith.constant 0 : index
    %119 = vector.load %arg15[%c0_51, %c0_52, %c0_53] : memref<1x1x128xf32, #tpu.memory_space<vmem>>, vector<1x1x128xf32>
    %120 = vector.shape_cast %119 : vector<1x1x128xf32> to vector<1x128xf32>
    %c0_54 = arith.constant 0 : index
    %c0_55 = arith.constant 0 : index
    %c0_56 = arith.constant 0 : index
    %121 = vector.load %arg16[%c0_54, %c0_55, %c0_56] : memref<1x1x128xf32, #tpu.memory_space<vmem>>, vector<1x1x128xf32>
    %122 = vector.shape_cast %121 : vector<1x1x128xf32> to vector<1x128xf32>
    %cst_57 = arith.constant dense<0.000000e+00> : vector<32xf32>
    %123 = vector.multi_reduction <add>, %118, %cst_57 [1] : vector<32x128xf32> to vector<32xf32>
    %124 = vector.shape_cast %123 : vector<32xf32> to vector<32x1xf32>
    %cst_58 = arith.constant 1.280000e+02 : f32
    %125 = vector.broadcast %cst_58 : f32 to vector<32x1xf32>
    %126 = arith.divf %124, %125 : vector<32x1xf32>
    %127 = vector.broadcast %126 : vector<32x1xf32> to vector<32x128xf32>
    %128 = arith.subf %118, %127 : vector<32x128xf32>
    %129 = arith.mulf %128, %128 : vector<32x128xf32>
    %cst_59 = arith.constant dense<0.000000e+00> : vector<32xf32>
    %130 = vector.multi_reduction <add>, %129, %cst_59 [1] : vector<32x128xf32> to vector<32xf32>
    %131 = vector.shape_cast %130 : vector<32xf32> to vector<32x1xf32>
    %cst_60 = arith.constant 1.280000e+02 : f32
    %132 = vector.broadcast %cst_60 : f32 to vector<32x1xf32>
    %133 = arith.divf %131, %132 : vector<32x1xf32>
    %134 = vector.broadcast %126 : vector<32x1xf32> to vector<32x128xf32>
    %135 = arith.subf %118, %134 : vector<32x128xf32>
    %cst_61 = arith.constant 9.99999996E-13 : f32
    %136 = vector.broadcast %cst_61 : f32 to vector<32x1xf32>
    %137 = arith.addf %133, %136 : vector<32x1xf32>
    %138 = math.rsqrt %137 : vector<32x1xf32>
    %139 = vector.broadcast %138 : vector<32x1xf32> to vector<32x128xf32>
    %140 = arith.mulf %135, %139 : vector<32x128xf32>
    %141 = vector.broadcast %120 : vector<1x128xf32> to vector<32x128xf32>
    %142 = arith.mulf %140, %141 : vector<32x128xf32>
    %143 = vector.broadcast %122 : vector<1x128xf32> to vector<32x128xf32>
    %144 = arith.addf %142, %143 : vector<32x128xf32>
    %c0_62 = arith.constant 0 : index
    %c0_63 = arith.constant 0 : index
    %145 = vector.load %arg29[%c0_62, %c0_63] : memref<32x128xf32, #tpu.memory_space<vmem>>, vector<32x128xf32>
    tpu.vector_store %arg29[%c0_62, %c0_63], %144 {strides = array<i32>} : memref<32x128xf32, #tpu.memory_space<vmem>>, vector<32x128xf32>,
    %146 = vector.extract_strided_slice %144 {offsets = [0, 0], sizes = [1, 128], strides = [1, 1]} : vector<32x128xf32> to vector<1x128xf32>
    %147 = vector.extract_strided_slice %144 {offsets = [16, 0], sizes = [1, 128], strides = [1, 1]} : vector<32x128xf32> to vector<1x128xf32>
    %148 = tpu.concatenate %146, %147 in 0 : vector<1x128xf32>, vector<1x128xf32> -> vector<2x128xf32>
    %c1_i32 = arith.constant 1 : i32
    %149 = arith.cmpi eq, %arg0, %c1_i32 : i32
    %150 = arith.extui %149 : i1 to i32
    %c0_i32_64 = arith.constant 0 : i32
    %151 = arith.cmpi ne, %150, %c0_i32_64 : i32
    scf.if %151 {
      %c0_69 = arith.constant 0 : index
      %c0_70 = arith.constant 0 : index
      %161 = vector.load %arg30[%c0_69, %c0_70] : memref<2x384xf32, #tpu.memory_space<vmem>>, vector<2x128xf32>
      tpu.vector_store %arg30[%c0_69, %c0_70], %148 {strides = array<i32>} : memref<2x384xf32, #tpu.memory_space<vmem>>, vector<2x128xf32>,
    } else {
    }
    %c2_i32 = arith.constant 2 : i32
    %152 = arith.cmpi eq, %arg0, %c2_i32 : i32
    %153 = arith.extui %152 : i1 to i32
    %c0_i32_65 = arith.constant 0 : i32
    %154 = arith.cmpi ne, %153, %c0_i32_65 : i32
    scf.if %154 {
      %c0_69 = arith.constant 0 : index
      %c128 = arith.constant 128 : index
      %161 = vector.load %arg30[%c0_69, %c128] : memref<2x384xf32, #tpu.memory_space<vmem>>, vector<2x128xf32>
      tpu.vector_store %arg30[%c0_69, %c128], %148 {strides = array<i32>} : memref<2x384xf32, #tpu.memory_space<vmem>>, vector<2x128xf32>,
    } else {
    }
    %c3_i32 = arith.constant 3 : i32
    %155 = arith.cmpi eq, %arg0, %c3_i32 : i32
    %156 = arith.extui %155 : i1 to i32
    %c0_i32_66 = arith.constant 0 : i32
    %157 = arith.cmpi ne, %156, %c0_i32_66 : i32
    scf.if %157 {
      %c0_69 = arith.constant 0 : index
      %c256 = arith.constant 256 : index
      %161 = vector.load %arg30[%c0_69, %c256] : memref<2x384xf32, #tpu.memory_space<vmem>>, vector<2x128xf32>
      tpu.vector_store %arg30[%c0_69, %c256], %148 {strides = array<i32>} : memref<2x384xf32, #tpu.memory_space<vmem>>, vector<2x128xf32>,
    } else {
    }
    %c3_i32_67 = arith.constant 3 : i32
    %158 = arith.cmpi eq, %arg0, %c3_i32_67 : i32
    %159 = arith.extui %158 : i1 to i32
    %c0_i32_68 = arith.constant 0 : i32
    %160 = arith.cmpi ne, %159, %c0_i32_68 : i32
    scf.if %160 {
      %c0_69 = arith.constant 0 : index
      %c0_70 = arith.constant 0 : index
      %161 = vector.load %arg30[%c0_69, %c0_70] : memref<2x384xf32, #tpu.memory_space<vmem>>, vector<2x384xf32>
      %162 = arith.truncf %161 : vector<2x384xf32> to vector<2x384xbf16>
      %c0_71 = arith.constant 0 : index
      %c0_72 = arith.constant 0 : index
      %163 = vector.load %arg17[%c0_71, %c0_72] : memref<384x128xbf16, #tpu.memory_space<vmem>>, vector<384x128xbf16>
      %cst_73 = arith.constant dense<0.000000e+00> : vector<2x128xf32>
      %164 = tpu.matmul %162, %163, %cst_73 {dimension_numbers = #tpu.dot_dimension_numbers<[1], [0], [0], [1], [0, 0, 1, 1], [], []>} : vector<2x384xbf16>, vector<384x128xbf16>, vector<2x128xf32> -> vector<2x128xf32>
      %c0_74 = arith.constant 0 : index
      %c0_75 = arith.constant 0 : index
      %165 = vector.load %arg18[%c0_74, %c0_75] : memref<1x128xf32, #tpu.memory_space<vmem>>, vector<1x128xf32>
      %166 = vector.broadcast %165 : vector<1x128xf32> to vector<2x128xf32>
      %167 = arith.addf %164, %166 : vector<2x128xf32>
      %c0_76 = arith.constant 0 : index
      %c0_77 = arith.constant 0 : index
      %168 = vector.load %arg19[%c0_76, %c0_77] : memref<1x128xf32, #tpu.memory_space<vmem>>, vector<1x128xf32>
      %169 = vector.broadcast %168 : vector<1x128xf32> to vector<2x128xf32>
      %170 = arith.mulf %167, %169 : vector<2x128xf32>
      %c0_78 = arith.constant 0 : index
      %c0_79 = arith.constant 0 : index
      %171 = vector.load %arg20[%c0_78, %c0_79] : memref<1x128xf32, #tpu.memory_space<vmem>>, vector<1x128xf32>
      %172 = vector.broadcast %171 : vector<1x128xf32> to vector<2x128xf32>
      %173 = arith.addf %170, %172 : vector<2x128xf32>
      %cst_80 = arith.constant 0.000000e+00 : f32
      %174 = vector.broadcast %cst_80 : f32 to vector<2x128xf32>
      %175 = arith.maximumf %173, %174 : vector<2x128xf32>
      %176 = arith.truncf %175 : vector<2x128xf32> to vector<2x128xbf16>
      %c0_81 = arith.constant 0 : index
      %c0_82 = arith.constant 0 : index
      %177 = vector.load %arg21[%c0_81, %c0_82] : memref<128x128xbf16, #tpu.memory_space<vmem>>, vector<128x128xbf16>
      %cst_83 = arith.constant dense<0.000000e+00> : vector<2x128xf32>
      %178 = tpu.matmul %176, %177, %cst_83 {dimension_numbers = #tpu.dot_dimension_numbers<[1], [0], [0], [1], [0, 0, 1, 1], [], []>} : vector<2x128xbf16>, vector<128x128xbf16>, vector<2x128xf32> -> vector<2x128xf32>
      %c0_84 = arith.constant 0 : index
      %c0_85 = arith.constant 0 : index
      %179 = vector.load %arg22[%c0_84, %c0_85] : memref<1x128xf32, #tpu.memory_space<vmem>>, vector<1x128xf32>
      %180 = vector.broadcast %179 : vector<1x128xf32> to vector<2x128xf32>
      %181 = arith.addf %178, %180 : vector<2x128xf32>
      %c0_86 = arith.constant 0 : index
      %c0_87 = arith.constant 0 : index
      %182 = vector.load %arg23[%c0_86, %c0_87] : memref<1x128xf32, #tpu.memory_space<vmem>>, vector<1x128xf32>
      %183 = vector.broadcast %182 : vector<1x128xf32> to vector<2x128xf32>
      %184 = arith.mulf %181, %183 : vector<2x128xf32>
      %c0_88 = arith.constant 0 : index
      %c0_89 = arith.constant 0 : index
      %185 = vector.load %arg24[%c0_88, %c0_89] : memref<1x128xf32, #tpu.memory_space<vmem>>, vector<1x128xf32>
      %186 = vector.broadcast %185 : vector<1x128xf32> to vector<2x128xf32>
      %187 = arith.addf %184, %186 : vector<2x128xf32>
      %cst_90 = arith.constant 0.000000e+00 : f32
      %188 = vector.broadcast %cst_90 : f32 to vector<2x128xf32>
      %189 = arith.maximumf %187, %188 : vector<2x128xf32>
      %190 = arith.truncf %189 : vector<2x128xf32> to vector<2x128xbf16>
      %c0_91 = arith.constant 0 : index
      %c0_92 = arith.constant 0 : index
      %191 = vector.load %arg25[%c0_91, %c0_92] : memref<128x2xbf16, #tpu.memory_space<vmem>>, vector<128x2xbf16>
      %cst_93 = arith.constant dense<0.000000e+00> : vector<2x2xf32>
      %192 = tpu.matmul %190, %191, %cst_93 {dimension_numbers = #tpu.dot_dimension_numbers<[1], [0], [0], [1], [0, 0, 1, 1], [], []>} : vector<2x128xbf16>, vector<128x2xbf16>, vector<2x2xf32> -> vector<2x2xf32>
      %c0_94 = arith.constant 0 : index
      %c0_95 = arith.constant 0 : index
      %193 = vector.load %arg26[%c0_94, %c0_95] : memref<1x2xf32, #tpu.memory_space<vmem>>, vector<1x2xf32>
      %194 = vector.broadcast %193 : vector<1x2xf32> to vector<2x2xf32>
      %195 = arith.addf %192, %194 : vector<2x2xf32>
      %c0_96 = arith.constant 0 : index
      %c0_97 = arith.constant 0 : index
      %196 = vector.load %arg27[%c0_96, %c0_97] : memref<2x2xf32, #tpu.memory_space<vmem>>, vector<2x2xf32>
      tpu.vector_store %arg27[%c0_96, %c0_97], %195 {strides = array<i32>} : memref<2x2xf32, #tpu.memory_space<vmem>>, vector<2x2xf32>,
      %cst_98 = arith.constant dense<0xFF800000> : vector<2xf32>
      %197 = vector.multi_reduction <maximumf>, %195, %cst_98 [1] : vector<2x2xf32> to vector<2xf32>
      %198 = vector.shape_cast %197 : vector<2xf32> to vector<2x1xf32>
      %199 = vector.broadcast %198 : vector<2x1xf32> to vector<2x2xf32>
      %200 = arith.subf %195, %199 : vector<2x2xf32>
      %201 = math.exp %200 : vector<2x2xf32>
      %cst_99 = arith.constant dense<0.000000e+00> : vector<2xf32>
      %202 = vector.multi_reduction <add>, %201, %cst_99 [1] : vector<2x2xf32> to vector<2xf32>
      %203 = vector.shape_cast %202 : vector<2xf32> to vector<2x1xf32>
      %204 = vector.broadcast %203 : vector<2x1xf32> to vector<2x2xf32>
      %205 = arith.divf %201, %204 : vector<2x2xf32>
      %c0_100 = arith.constant 0 : index
      %c0_101 = arith.constant 0 : index
      %206 = vector.load %arg28[%c0_100, %c0_101] : memref<2x2xf32, #tpu.memory_space<vmem>>, vector<2x2xf32>
      tpu.vector_store %arg28[%c0_100, %c0_101], %205 {strides = array<i32>} : memref<2x2xf32, #tpu.memory_space<vmem>>, vector<2x2xf32>,
    } else {
    }
    return
  }
  func.func @transform_0(%arg0: i32) -> (i32, i32) {
    %c0_i32 = arith.constant 0 : i32
    %c0_i32_0 = arith.constant 0 : i32
    %c0_i32_1 = arith.constant 0 : i32
    return %c0_i32, %c0_i32_0 : i32, i32
  }
  func.func @transform_1(%arg0: i32) -> (i32, i32) {
    %c0_i32 = arith.constant 0 : i32
    %c0_i32_0 = arith.constant 0 : i32
    %c0_i32_1 = arith.constant 0 : i32
    return %c0_i32, %c0_i32_0 : i32, i32
  }
  func.func @transform_2(%arg0: i32) -> (i32, i32) {
    %c0_i32 = arith.constant 0 : i32
    %c0_i32_0 = arith.constant 0 : i32
    %c0_i32_1 = arith.constant 0 : i32
    return %c0_i32, %c0_i32_0 : i32, i32
  }
  func.func @transform_3(%arg0: i32) -> (i32, i32) {
    %c0_i32 = arith.constant 0 : i32
    %c0_i32_0 = arith.constant 0 : i32
    %c0_i32_1 = arith.constant 0 : i32
    return %c0_i32, %c0_i32_0 : i32, i32
  }
  func.func @transform_4(%arg0: i32) -> (i32, i32, i32) {
    %c0_i32 = arith.constant 0 : i32
    %c0_i32_0 = arith.constant 0 : i32
    %c0_i32_1 = arith.constant 0 : i32
    return %arg0, %c0_i32, %c0_i32_0 : i32, i32, i32
  }
  func.func @transform_5(%arg0: i32) -> (i32, i32, i32) {
    %c0_i32 = arith.constant 0 : i32
    %c0_i32_0 = arith.constant 0 : i32
    %c0_i32_1 = arith.constant 0 : i32
    return %arg0, %c0_i32, %c0_i32_0 : i32, i32, i32
  }
  func.func @transform_6(%arg0: i32) -> (i32, i32, i32) {
    %c0_i32 = arith.constant 0 : i32
    %c0_i32_0 = arith.constant 0 : i32
    %c0_i32_1 = arith.constant 0 : i32
    return %arg0, %c0_i32, %c0_i32_0 : i32, i32, i32
  }
  func.func @transform_7(%arg0: i32) -> (i32, i32, i32) {
    %c0_i32 = arith.constant 0 : i32
    %c0_i32_0 = arith.constant 0 : i32
    %c0_i32_1 = arith.constant 0 : i32
    return %arg0, %c0_i32, %c0_i32_0 : i32, i32, i32
  }
  func.func @transform_8(%arg0: i32) -> (i32, i32, i32) {
    %c0_i32 = arith.constant 0 : i32
    %c0_i32_0 = arith.constant 0 : i32
    %c0_i32_1 = arith.constant 0 : i32
    return %arg0, %c0_i32, %c0_i32_0 : i32, i32, i32
  }
  func.func @transform_9(%arg0: i32) -> (i32, i32, i32) {
    %c0_i32 = arith.constant 0 : i32
    %c0_i32_0 = arith.constant 0 : i32
    %c0_i32_1 = arith.constant 0 : i32
    return %arg0, %c0_i32, %c0_i32_0 : i32, i32, i32
  }
  func.func @transform_10(%arg0: i32) -> (i32, i32, i32) {
    %c0_i32 = arith.constant 0 : i32
    %c0_i32_0 = arith.constant 0 : i32
    %c0_i32_1 = arith.constant 0 : i32
    return %arg0, %c0_i32, %c0_i32_0 : i32, i32, i32
  }
  func.func @transform_11(%arg0: i32) -> (i32, i32, i32) {
    %c0_i32 = arith.constant 0 : i32
    %c0_i32_0 = arith.constant 0 : i32
    %c0_i32_1 = arith.constant 0 : i32
    return %arg0, %c0_i32, %c0_i32_0 : i32, i32, i32
  }
  func.func @transform_12(%arg0: i32) -> (i32, i32, i32) {
    %c0_i32 = arith.constant 0 : i32
    %c0_i32_0 = arith.constant 0 : i32
    %c0_i32_1 = arith.constant 0 : i32
    return %arg0, %c0_i32, %c0_i32_0 : i32, i32, i32
  }
  func.func @transform_13(%arg0: i32) -> (i32, i32, i32) {
    %c0_i32 = arith.constant 0 : i32
    %c0_i32_0 = arith.constant 0 : i32
    %c0_i32_1 = arith.constant 0 : i32
    return %arg0, %c0_i32, %c0_i32_0 : i32, i32, i32
  }
  func.func @transform_14(%arg0: i32) -> (i32, i32, i32) {
    %c0_i32 = arith.constant 0 : i32
    %c0_i32_0 = arith.constant 0 : i32
    %c0_i32_1 = arith.constant 0 : i32
    return %arg0, %c0_i32, %c0_i32_0 : i32, i32, i32
  }
  func.func @transform_15(%arg0: i32) -> (i32, i32, i32) {
    %c0_i32 = arith.constant 0 : i32
    %c0_i32_0 = arith.constant 0 : i32
    %c0_i32_1 = arith.constant 0 : i32
    return %arg0, %c0_i32, %c0_i32_0 : i32, i32, i32
  }
  func.func @transform_16(%arg0: i32) -> (i32, i32) {
    %c0_i32 = arith.constant 0 : i32
    %c0_i32_0 = arith.constant 0 : i32
    %c0_i32_1 = arith.constant 0 : i32
    return %c0_i32, %c0_i32_0 : i32, i32
  }
  func.func @transform_17(%arg0: i32) -> (i32, i32) {
    %c0_i32 = arith.constant 0 : i32
    %c0_i32_0 = arith.constant 0 : i32
    %c0_i32_1 = arith.constant 0 : i32
    return %c0_i32, %c0_i32_0 : i32, i32
  }
  func.func @transform_18(%arg0: i32) -> (i32, i32) {
    %c0_i32 = arith.constant 0 : i32
    %c0_i32_0 = arith.constant 0 : i32
    %c0_i32_1 = arith.constant 0 : i32
    return %c0_i32, %c0_i32_0 : i32, i32
  }
  func.func @transform_19(%arg0: i32) -> (i32, i32) {
    %c0_i32 = arith.constant 0 : i32
    %c0_i32_0 = arith.constant 0 : i32
    %c0_i32_1 = arith.constant 0 : i32
    return %c0_i32, %c0_i32_0 : i32, i32
  }
  func.func @transform_20(%arg0: i32) -> (i32, i32) {
    %c0_i32 = arith.constant 0 : i32
    %c0_i32_0 = arith.constant 0 : i32
    %c0_i32_1 = arith.constant 0 : i32
    return %c0_i32, %c0_i32_0 : i32, i32
  }
  func.func @transform_21(%arg0: i32) -> (i32, i32) {
    %c0_i32 = arith.constant 0 : i32
    %c0_i32_0 = arith.constant 0 : i32
    %c0_i32_1 = arith.constant 0 : i32
    return %c0_i32, %c0_i32_0 : i32, i32
  }
  func.func @transform_22(%arg0: i32) -> (i32, i32) {
    %c0_i32 = arith.constant 0 : i32
    %c0_i32_0 = arith.constant 0 : i32
    %c0_i32_1 = arith.constant 0 : i32
    return %c0_i32, %c0_i32_0 : i32, i32
  }
  func.func @transform_23(%arg0: i32) -> (i32, i32) {
    %c0_i32 = arith.constant 0 : i32
    %c0_i32_0 = arith.constant 0 : i32
    %c0_i32_1 = arith.constant 0 : i32
    return %c0_i32, %c0_i32_0 : i32, i32
  }
  func.func @transform_24(%arg0: i32) -> (i32, i32) {
    %c0_i32 = arith.constant 0 : i32
    %c0_i32_0 = arith.constant 0 : i32
    %c0_i32_1 = arith.constant 0 : i32
    return %c0_i32, %c0_i32_0 : i32, i32
  }
  func.func @transform_25(%arg0: i32) -> (i32, i32) {
    %c0_i32 = arith.constant 0 : i32
    %c0_i32_0 = arith.constant 0 : i32
    %c0_i32_1 = arith.constant 0 : i32
    return %c0_i32, %c0_i32_0 : i32, i32
  }
  func.func @transform_26(%arg0: i32) -> (i32, i32) {
    %c0_i32 = arith.constant 0 : i32
    %c0_i32_0 = arith.constant 0 : i32
    %c0_i32_1 = arith.constant 0 : i32
    return %c0_i32, %c0_i32_0 : i32, i32
  }
  func.func @transform_27(%arg0: i32) -> (i32, i32) {
    %c0_i32 = arith.constant 0 : i32
    %c0_i32_0 = arith.constant 0 : i32
    %c0_i32_1 = arith.constant 0 : i32
    return %c0_i32, %c0_i32_0 : i32, i32
  }
}

</mosaic_0001>

<llo_original>
// kernel: bert_classifier_forward.1
$region0: #{bert_classifier_forward.1}
  #allocation0 [shape = 'u32[]', space=smem, size = 0x4, offset = 0x4, fixed_abs, tag = 'smem constant byte address 0x4 - core index']
  #allocation1 [shape = 'u32[144,128]{1,0:T(1,128)}', space=vmem, size = 0x12000, scoped, tag = 'internal scratch']
  #allocation2 [shape = 'f32[32,128]{1,0:T(8,128)}', space=vmem, size = 0x4000, scoped, tag = 'scratch operand']
  #allocation3 [shape = 'f32[2,384]{1,0:T(2,128)}', space=vmem, size = 0xc00, scoped, tag = 'scratch operand']
  %s0 = inlined_call_operand.vmem [shape: f32[32,128], index: 0, kind: input, shape index: {}]
  %s1 = inlined_call_operand.vmem [shape: f32[64,64], index: 1, kind: input, shape index: {}]
  %s2 = inlined_call_operand.vmem [shape: f32[1,128], index: 2, kind: input, shape index: {}]
  %s3 = inlined_call_operand.vmem [shape: f32[1,128], index: 3, kind: input, shape index: {}]
  %s4 = inlined_call_operand.vmem [shape: bf16[4,128,384], index: 4, kind: input, shape index: {}]
  %s5 = inlined_call_operand.vmem [shape: f32[4,1,384], index: 5, kind: input, shape index: {}]
  %s6 = inlined_call_operand.vmem [shape: bf16[4,128,128], index: 6, kind: input, shape index: {}]
  %s7 = inlined_call_operand.vmem [shape: f32[4,1,128], index: 7, kind: input, shape index: {}]
  %s8 = inlined_call_operand.vmem [shape: f32[4,1,128], index: 8, kind: input, shape index: {}]
  %s9 = inlined_call_operand.vmem [shape: f32[4,1,128], index: 9, kind: input, shape index: {}]
  %s10 = inlined_call_operand.vmem [shape: bf16[4,128,256], index: 10, kind: input, shape index: {}]
  %s11 = inlined_call_operand.vmem [shape: f32[4,1,256], index: 11, kind: input, shape index: {}]
  %s12 = inlined_call_operand.hbm [shape: bf16[4,256,128], index: 12, kind: input, shape index: {}]
  %s13 = inlined_call_operand.vmem [shape: f32[4,1,128], index: 13, kind: input, shape index: {}]
  %s14 = inlined_call_operand.vmem [shape: f32[4,1,128], index: 14, kind: input, shape index: {}]
  %s15 = inlined_call_operand.vmem [shape: f32[4,1,128], index: 15, kind: input, shape index: {}]
  %s16 = inlined_call_operand.vmem [shape: bf16[384,128], index: 16, kind: input, shape index: {}]
  %s17 = inlined_call_operand.vmem [shape: f32[1,128], index: 17, kind: input, shape index: {}]
  %s18 = inlined_call_operand.vmem [shape: f32[1,128], index: 18, kind: input, shape index: {}]
  %s19 = inlined_call_operand.vmem [shape: f32[1,128], index: 19, kind: input, shape index: {}]
  %s20 = inlined_call_operand.vmem [shape: bf16[128,128], index: 20, kind: input, shape index: {}]
  %s21 = inlined_call_operand.vmem [shape: f32[1,128], index: 21, kind: input, shape index: {}]
  %s22 = inlined_call_operand.vmem [shape: f32[1,128], index: 22, kind: input, shape index: {}]
  %s23 = inlined_call_operand.vmem [shape: f32[1,128], index: 23, kind: input, shape index: {}]
  %s24 = inlined_call_operand.vmem [shape: bf16[128,2], index: 24, kind: input, shape index: {}]
  %s25 = inlined_call_operand.vmem [shape: f32[1,2], index: 25, kind: input, shape index: {}]
  %s26 = inlined_call_operand.hbm [shape: f32[2,2], index: 26, kind: output, shape index: {0}]
  %s27 = inlined_call_operand.hbm [shape: f32[2,2], index: 27, kind: output, shape index: {1}]
  %28 = xla_tuple %s26, %s27
  %s29 = sld [smem:[#allocation0]]
  $region165: #{bert_classifier_forward.1} parent=0
    _
  %s31 = ssub.s32 1, %s29
  %s32 = scalar_select 0, %s31, %s29
  $region1: #{bert_classifier_forward.1} parent=0
    #allocation4 [shape = 'u8[131072]{0}', space=vmem, size = 0x20000, scoped, tag = 'input window, operand 12']
    #allocation5 [shape = 's32[2]{0}', space=sflag, size = 0x8, scoped, tag = 'scoped memory for bert_classifier_forward.1']
    #allocation6 [shape = 's32[2]{0}', space=sflag, size = 0x8, scoped, tag = 'scoped memory for bert_classifier_forward.1']
    #allocation7 [shape = 'u8[1024]{0}', space=vmem, size = 0x400, scoped, tag = 'output window, operand 0, single buffered']
    #allocation8 [shape = 'u8[1024]{0}', space=vmem, size = 0x400, scoped, tag = 'output window, operand 1, single buffered']
    #allocation9 [shape = 's32[1]{0}', space=sflag, size = 0x4, scoped, tag = 'scoped memory for bert_classifier_forward.1']
    %33 = vsyncpa [#allocation5], 0
    %s34 = scalar_lea.sflag [#allocation5], 1
    %35 = vsyncpa %s34, 0
    %36 = vsyncpa [#allocation6], 0
    %37 = vsyncpa [#allocation9], 0
    loop: start=0, step=1, limit=6
    $region2: #{bert_classifier_forward.1} parent=1 // loop_pre_header
      _
    $region3: #{bert_classifier_forward.1} parent=1 // loop_header
      %s39 = sphi 0, %s43
      %p40 = scmp.ge.s32.totalorder %s39, 6
      %s47 = sphi 0, %s47
      %s49 = sphi 0, %s47
      %s50 = sphi 0, %s49
      %s64 = sphi 0, %s50
      %s68 = sphi 0, %s68
      %s70 = sphi 0, %s68
      %s71 = sphi 0, %s70
      %s85 = sphi 0, %s71
      %s89 = sphi 0, %s89
      %s91 = sphi 0, %s89
      %s92 = sphi 0, %s91
      %s106 = sphi 0, %s92
      %s110 = sphi 0, %s110
      %s112 = sphi 0, %s110
      %s113 = sphi 0, %s112
      %s127 = sphi 0, %s113
      %s133 = sphi 0, %s135
      %s136 = sphi 0, %s133
      %s137 = sphi 0, %s136
      %s153 = sphi 0, %s137
      %s159 = sphi 0, %s161
      %s162 = sphi 0, %s159
      %s163 = sphi 0, %s162
      %s179 = sphi 0, %s163
      %s185 = sphi 0, %s187
      %s188 = sphi 0, %s185
      %s189 = sphi 0, %s188
      %s205 = sphi 0, %s189
      %s211 = sphi 0, %s213
      %s214 = sphi 0, %s211
      %s215 = sphi 0, %s214
      %s231 = sphi 0, %s215
      %s237 = sphi 0, %s239
      %s240 = sphi 0, %s237
      %s241 = sphi 0, %s240
      %s257 = sphi 0, %s241
      %s263 = sphi 0, %s265
      %s266 = sphi 0, %s263
      %s267 = sphi 0, %s266
      %s283 = sphi 0, %s267
      %s289 = sphi 0, %s291
      %s292 = sphi 0, %s289
      %s293 = sphi 0, %s292
      %s309 = sphi 0, %s293
      %s315 = sphi 0, %s317
      %s318 = sphi 0, %s315
      %s319 = sphi 0, %s318
      %s335 = sphi 0, %s319
      %s341 = sphi 0, %s343
      %s344 = sphi 0, %s341
      %s345 = sphi 0, %s344
      %s361 = sphi 0, %s345
      %s367 = sphi 0, %s369
      %s370 = sphi 0, %s367
      %s371 = sphi 0, %s370
      %s387 = sphi 0, %s371
      %s393 = sphi 0, %s395
      %s396 = sphi 0, %s393
      %s397 = sphi 0, %s396
      %s413 = sphi 0, %s397
      %s419 = sphi 0, %s421
      %s422 = sphi 0, %s419
      %s423 = sphi 0, %s422
      %s439 = sphi 0, %s423
      %s443 = sphi 0, %s443
      %s445 = sphi 0, %s443
      %s446 = sphi 0, %s445
      %s460 = sphi 0, %s446
      %s464 = sphi 0, %s464
      %s466 = sphi 0, %s464
      %s467 = sphi 0, %s466
      %s481 = sphi 0, %s467
      %s485 = sphi 0, %s485
      %s487 = sphi 0, %s485
      %s488 = sphi 0, %s487
      %s502 = sphi 0, %s488
      %s506 = sphi 0, %s506
      %s508 = sphi 0, %s506
      %s509 = sphi 0, %s508
      %s523 = sphi 0, %s509
      %s527 = sphi 0, %s527
      %s529 = sphi 0, %s527
      %s530 = sphi 0, %s529
      %s544 = sphi 0, %s530
      %s548 = sphi 0, %s548
      %s550 = sphi 0, %s548
      %s551 = sphi 0, %s550
      %s565 = sphi 0, %s551
      %s569 = sphi 0, %s569
      %s571 = sphi 0, %s569
      %s572 = sphi 0, %s571
      %s586 = sphi 0, %s572
      %s590 = sphi 0, %s590
      %s592 = sphi 0, %s590
      %s593 = sphi 0, %s592
      %s607 = sphi 0, %s593
      %s611 = sphi 0, %s611
      %s613 = sphi 0, %s611
      %s614 = sphi 0, %s613
      %s628 = sphi 0, %s614
      %s632 = sphi 0, %s632
      %s634 = sphi 0, %s632
      %s635 = sphi 0, %s634
      %s649 = sphi 0, %s635
      %s653 = sphi 0, %s653
      %s655 = sphi 0, %s653
      %s656 = sphi 0, %s655
      %s670 = sphi 0, %s656
      %s674 = sphi 0, %s674
      %s676 = sphi 0, %s674
      %s677 = sphi 0, %s676
      %s691 = sphi 0, %s677
    $region4: #{bert_classifier_forward.1} parent=1 // loop_header_branch
      %42 = sbr.rel (%p40) target = $region8
    $region5: #{bert_classifier_forward.1} parent=1 // loop_body
      %s44 = ssub.s32 %s39, 1
      %s45 = ssub.s32 %s39, 2
      %s46 = sadd.s32 %s39, 1
      %s48 = sadd.s32 %s47, 1
      %p51 = scmp.eq.s32.totalorder %s39, 3
      %p52 = scmp.ne.s32.totalorder %s47, %s49
      %p53 = scmp.eq.s32.totalorder %s39, 0
      %p54 = por %p52, %p53
      %p55 = scmp.ne.s32.totalorder %s47, %s49
      %p56 = scmp.eq.s32.totalorder %s44, 3
      %p57 = por %p55, %p56
      %p58 = scmp.ne.s32.totalorder %s49, %s50
      %p59 = scmp.eq.s32.totalorder %s44, 0
      %p60 = por %p58, %p59
      %p61 = scmp.ne.s32.totalorder %s49, %s50
      %p62 = scmp.eq.s32.totalorder %s45, 3
      %p63 = por %p61, %p62
      %p65 = scmp.ne.s32.totalorder %s50, %s64
      %p66 = scmp.eq.s32.totalorder %s45, 0
      %p67 = por %p65, %p66
      %s69 = sadd.s32 %s68, 1
      %p72 = scmp.eq.s32.totalorder %s39, 3
      %p73 = scmp.ne.s32.totalorder %s68, %s70
      %p74 = scmp.eq.s32.totalorder %s39, 0
      %p75 = por %p73, %p74
      %p76 = scmp.ne.s32.totalorder %s68, %s70
      %p77 = scmp.eq.s32.totalorder %s44, 3
      %p78 = por %p76, %p77
      %p79 = scmp.ne.s32.totalorder %s70, %s71
      %p80 = scmp.eq.s32.totalorder %s44, 0
      %p81 = por %p79, %p80
      %p82 = scmp.ne.s32.totalorder %s70, %s71
      %p83 = scmp.eq.s32.totalorder %s45, 3
      %p84 = por %p82, %p83
      %p86 = scmp.ne.s32.totalorder %s71, %s85
      %p87 = scmp.eq.s32.totalorder %s45, 0
      %p88 = por %p86, %p87
      %s90 = sadd.s32 %s89, 1
      %p93 = scmp.eq.s32.totalorder %s39, 3
      %p94 = scmp.ne.s32.totalorder %s89, %s91
      %p95 = scmp.eq.s32.totalorder %s39, 0
      %p96 = por %p94, %p95
      %p97 = scmp.ne.s32.totalorder %s89, %s91
      %p98 = scmp.eq.s32.totalorder %s44, 3
      %p99 = por %p97, %p98
      %p100 = scmp.ne.s32.totalorder %s91, %s92
      %p101 = scmp.eq.s32.totalorder %s44, 0
      %p102 = por %p100, %p101
      %p103 = scmp.ne.s32.totalorder %s91, %s92
      %p104 = scmp.eq.s32.totalorder %s45, 3
      %p105 = por %p103, %p104
      %p107 = scmp.ne.s32.totalorder %s92, %s106
      %p108 = scmp.eq.s32.totalorder %s45, 0
      %p109 = por %p107, %p108
      %s111 = sadd.s32 %s110, 1
      %p114 = scmp.eq.s32.totalorder %s39, 3
      %p115 = scmp.ne.s32.totalorder %s110, %s112
      %p116 = scmp.eq.s32.totalorder %s39, 0
      %p117 = por %p115, %p116
      %p118 = scmp.ne.s32.totalorder %s110, %s112
      %p119 = scmp.eq.s32.totalorder %s44, 3
      %p120 = por %p118, %p119
      %p121 = scmp.ne.s32.totalorder %s112, %s113
      %p122 = scmp.eq.s32.totalorder %s44, 0
      %p123 = por %p121, %p122
      %p124 = scmp.ne.s32.totalorder %s112, %s113
      %p125 = scmp.eq.s32.totalorder %s45, 3
      %p126 = por %p124, %p125
      %p128 = scmp.ne.s32.totalorder %s113, %s127
      %p129 = scmp.eq.s32.totalorder %s45, 0
      %p130 = por %p128, %p129
      %s131 = ssub.s32 %s39, %s46
      %p132 = scmp.eq.s32.totalorder %s131, 0
      %s134 = sadd.s32 %s133, 1
      %s135 = scalar_select %p132, %s133, %s134
      %p138 = pneg %p132
      %p139 = scmp.eq.s32.totalorder %s39, 3
      %p140 = por %p138, %p139
      %p141 = scmp.ne.s32.totalorder %s133, %s136
      %p142 = scmp.eq.s32.totalorder %s39, 0
      %p143 = por %p141, %p142
      %p144 = scmp.ne.s32.totalorder %s133, %s136
      %p145 = scmp.eq.s32.totalorder %s44, 3
      %p146 = por %p144, %p145
      %p147 = scmp.ne.s32.totalorder %s136, %s137
      %p148 = scmp.eq.s32.totalorder %s44, 0
      %p149 = por %p147, %p148
      %p150 = scmp.ne.s32.totalorder %s136, %s137
      %p151 = scmp.eq.s32.totalorder %s45, 3
      %p152 = por %p150, %p151
      %p154 = scmp.ne.s32.totalorder %s137, %s153
      %p155 = scmp.eq.s32.totalorder %s45, 0
      %p156 = por %p154, %p155
      %s157 = ssub.s32 %s39, %s46
      %p158 = scmp.eq.s32.totalorder %s157, 0
      %s160 = sadd.s32 %s159, 1
      %s161 = scalar_select %p158, %s159, %s160
      %p164 = pneg %p158
      %p165 = scmp.eq.s32.totalorder %s39, 3
      %p166 = por %p164, %p165
      %p167 = scmp.ne.s32.totalorder %s159, %s162
      %p168 = scmp.eq.s32.totalorder %s39, 0
      %p169 = por %p167, %p168
      %p170 = scmp.ne.s32.totalorder %s159, %s162
      %p171 = scmp.eq.s32.totalorder %s44, 3
      %p172 = por %p170, %p171
      %p173 = scmp.ne.s32.totalorder %s162, %s163
      %p174 = scmp.eq.s32.totalorder %s44, 0
      %p175 = por %p173, %p174
      %p176 = scmp.ne.s32.totalorder %s162, %s163
      %p177 = scmp.eq.s32.totalorder %s45, 3
      %p178 = por %p176, %p177
      %p180 = scmp.ne.s32.totalorder %s163, %s179
      %p181 = scmp.eq.s32.totalorder %s45, 0
      %p182 = por %p180, %p181
      %s183 = ssub.s32 %s39, %s46
      %p184 = scmp.eq.s32.totalorder %s183, 0
      %s186 = sadd.s32 %s185, 1
      %s187 = scalar_select %p184, %s185, %s186
      %p190 = pneg %p184
      %p191 = scmp.eq.s32.totalorder %s39, 3
      %p192 = por %p190, %p191
      %p193 = scmp.ne.s32.totalorder %s185, %s188
      %p194 = scmp.eq.s32.totalorder %s39, 0
      %p195 = por %p193, %p194
      %p196 = scmp.ne.s32.totalorder %s185, %s188
      %p197 = scmp.eq.s32.totalorder %s44, 3
      %p198 = por %p196, %p197
      %p199 = scmp.ne.s32.totalorder %s188, %s189
      %p200 = scmp.eq.s32.totalorder %s44, 0
      %p201 = por %p199, %p200
      %p202 = scmp.ne.s32.totalorder %s188, %s189
      %p203 = scmp.eq.s32.totalorder %s45, 3
      %p204 = por %p202, %p203
      %p206 = scmp.ne.s32.totalorder %s189, %s205
      %p207 = scmp.eq.s32.totalorder %s45, 0
      %p208 = por %p206, %p207
      %s209 = ssub.s32 %s39, %s46
      %p210 = scmp.eq.s32.totalorder %s209, 0
      %s212 = sadd.s32 %s211, 1
      %s213 = scalar_select %p210, %s211, %s212
      %p216 = pneg %p210
      %p217 = scmp.eq.s32.totalorder %s39, 3
      %p218 = por %p216, %p217
      %p219 = scmp.ne.s32.totalorder %s211, %s214
      %p220 = scmp.eq.s32.totalorder %s39, 0
      %p221 = por %p219, %p220
      %p222 = scmp.ne.s32.totalorder %s211, %s214
      %p223 = scmp.eq.s32.totalorder %s44, 3
      %p224 = por %p222, %p223
      %p225 = scmp.ne.s32.totalorder %s214, %s215
      %p226 = scmp.eq.s32.totalorder %s44, 0
      %p227 = por %p225, %p226
      %p228 = scmp.ne.s32.totalorder %s214, %s215
      %p229 = scmp.eq.s32.totalorder %s45, 3
      %p230 = por %p228, %p229
      %p232 = scmp.ne.s32.totalorder %s215, %s231
      %p233 = scmp.eq.s32.totalorder %s45, 0
      %p234 = por %p232, %p233
      %s235 = ssub.s32 %s39, %s46
      %p236 = scmp.eq.s32.totalorder %s235, 0
      %s238 = sadd.s32 %s237, 1
      %s239 = scalar_select %p236, %s237, %s238
      %p242 = pneg %p236
      %p243 = scmp.eq.s32.totalorder %s39, 3
      %p244 = por %p242, %p243
      %p245 = scmp.ne.s32.totalorder %s237, %s240
      %p246 = scmp.eq.s32.totalorder %s39, 0
      %p247 = por %p245, %p246
      %p248 = scmp.ne.s32.totalorder %s237, %s240
      %p249 = scmp.eq.s32.totalorder %s44, 3
      %p250 = por %p248, %p249
      %p251 = scmp.ne.s32.totalorder %s240, %s241
      %p252 = scmp.eq.s32.totalorder %s44, 0
      %p253 = por %p251, %p252
      %p254 = scmp.ne.s32.totalorder %s240, %s241
      %p255 = scmp.eq.s32.totalorder %s45, 3
      %p256 = por %p254, %p255
      %p258 = scmp.ne.s32.totalorder %s241, %s257
      %p259 = scmp.eq.s32.totalorder %s45, 0
      %p260 = por %p258, %p259
      %s261 = ssub.s32 %s39, %s46
      %p262 = scmp.eq.s32.totalorder %s261, 0
      %s264 = sadd.s32 %s263, 1
      %s265 = scalar_select %p262, %s263, %s264
      %p268 = pneg %p262
      %p269 = scmp.eq.s32.totalorder %s39, 3
      %p270 = por %p268, %p269
      %p271 = scmp.ne.s32.totalorder %s263, %s266
      %p272 = scmp.eq.s32.totalorder %s39, 0
      %p273 = por %p271, %p272
      %p274 = scmp.ne.s32.totalorder %s263, %s266
      %p275 = scmp.eq.s32.totalorder %s44, 3
      %p276 = por %p274, %p275
      %p277 = scmp.ne.s32.totalorder %s266, %s267
      %p278 = scmp.eq.s32.totalorder %s44, 0
      %p279 = por %p277, %p278
      %p280 = scmp.ne.s32.totalorder %s266, %s267
      %p281 = scmp.eq.s32.totalorder %s45, 3
      %p282 = por %p280, %p281
      %p284 = scmp.ne.s32.totalorder %s267, %s283
      %p285 = scmp.eq.s32.totalorder %s45, 0
      %p286 = por %p284, %p285
      %s287 = ssub.s32 %s39, %s46
      %p288 = scmp.eq.s32.totalorder %s287, 0
      %s290 = sadd.s32 %s289, 1
      %s291 = scalar_select %p288, %s289, %s290
      %p294 = pneg %p288
      %p295 = scmp.eq.s32.totalorder %s39, 3
      %p296 = por %p294, %p295
      %p297 = scmp.ne.s32.totalorder %s289, %s292
      %p298 = scmp.eq.s32.totalorder %s39, 0
      %p299 = por %p297, %p298
      %p300 = scmp.ne.s32.totalorder %s289, %s292
      %p301 = scmp.eq.s32.totalorder %s44, 3
      %p302 = por %p300, %p301
      %p303 = scmp.ne.s32.totalorder %s292, %s293
      %p304 = scmp.eq.s32.totalorder %s44, 0
      %p305 = por %p303, %p304
      %p306 = scmp.ne.s32.totalorder %s292, %s293
      %p307 = scmp.eq.s32.totalorder %s45, 3
      %p308 = por %p306, %p307
      %p310 = scmp.ne.s32.totalorder %s293, %s309
      %p311 = scmp.eq.s32.totalorder %s45, 0
      %p312 = por %p310, %p311
      %s313 = ssub.s32 %s39, %s46
      %p314 = scmp.eq.s32.totalorder %s313, 0
      %s316 = sadd.s32 %s315, 1
      %s317 = scalar_select %p314, %s315, %s316
      %p320 = pneg %p314
      %p321 = scmp.eq.s32.totalorder %s39, 3
      %p322 = por %p320, %p321
      %p323 = scmp.ne.s32.totalorder %s315, %s318
      %p324 = scmp.eq.s32.totalorder %s39, 0
      %p325 = por %p323, %p324
      %p326 = scmp.ne.s32.totalorder %s315, %s318
      %p327 = scmp.eq.s32.totalorder %s44, 3
      %p328 = por %p326, %p327
      %p329 = scmp.ne.s32.totalorder %s318, %s319
      %p330 = scmp.eq.s32.totalorder %s44, 0
      %p331 = por %p329, %p330
      %p332 = scmp.ne.s32.totalorder %s318, %s319
      %p333 = scmp.eq.s32.totalorder %s45, 3
      %p334 = por %p332, %p333
      %p336 = scmp.ne.s32.totalorder %s319, %s335
      %p337 = scmp.eq.s32.totalorder %s45, 0
      %p338 = por %p336, %p337
      %s339 = ssub.s32 %s39, %s46
      %p340 = scmp.eq.s32.totalorder %s339, 0
      %s342 = sadd.s32 %s341, 1
      %s343 = scalar_select %p340, %s341, %s342
      %p346 = pneg %p340
      %p347 = scmp.eq.s32.totalorder %s39, 3
      %p348 = por %p346, %p347
      %p349 = scmp.ne.s32.totalorder %s341, %s344
      %p350 = scmp.eq.s32.totalorder %s39, 0
      %p351 = por %p349, %p350
      %p352 = scmp.ne.s32.totalorder %s341, %s344
      %p353 = scmp.eq.s32.totalorder %s44, 3
      %p354 = por %p352, %p353
      %p355 = scmp.ne.s32.totalorder %s344, %s345
      %p356 = scmp.eq.s32.totalorder %s44, 0
      %p357 = por %p355, %p356
      %p358 = scmp.ne.s32.totalorder %s344, %s345
      %p359 = scmp.eq.s32.totalorder %s45, 3
      %p360 = por %p358, %p359
      %p362 = scmp.ne.s32.totalorder %s345, %s361
      %p363 = scmp.eq.s32.totalorder %s45, 0
      %p364 = por %p362, %p363
      %s365 = ssub.s32 %s39, %s46
      %p366 = scmp.eq.s32.totalorder %s365, 0
      %s368 = sadd.s32 %s367, 1
      %s369 = scalar_select %p366, %s367, %s368
      %p372 = pneg %p366
      %p373 = scmp.eq.s32.totalorder %s39, 3
      %p374 = por %p372, %p373
      %p375 = scmp.ne.s32.totalorder %s367, %s370
      %p376 = scmp.eq.s32.totalorder %s39, 0
      %p377 = por %p375, %p376
      %p378 = scmp.ne.s32.totalorder %s367, %s370
      %p379 = scmp.eq.s32.totalorder %s44, 3
      %p380 = por %p378, %p379
      %p381 = scmp.ne.s32.totalorder %s370, %s371
      %p382 = scmp.eq.s32.totalorder %s44, 0
      %p383 = por %p381, %p382
      %p384 = scmp.ne.s32.totalorder %s370, %s371
      %p385 = scmp.eq.s32.totalorder %s45, 3
      %p386 = por %p384, %p385
      %p388 = scmp.ne.s32.totalorder %s371, %s387
      %p389 = scmp.eq.s32.totalorder %s45, 0
      %p390 = por %p388, %p389
      %s391 = ssub.s32 %s39, %s46
      %p392 = scmp.eq.s32.totalorder %s391, 0
      %s394 = sadd.s32 %s393, 1
      %s395 = scalar_select %p392, %s393, %s394
      %p398 = pneg %p392
      %p399 = scmp.eq.s32.totalorder %s39, 3
      %p400 = por %p398, %p399
      %p401 = scmp.ne.s32.totalorder %s393, %s396
      %p402 = scmp.eq.s32.totalorder %s39, 0
      %p403 = por %p401, %p402
      %p404 = scmp.ne.s32.totalorder %s393, %s396
      %p405 = scmp.eq.s32.totalorder %s44, 3
      %p406 = por %p404, %p405
      %p407 = scmp.ne.s32.totalorder %s396, %s397
      %p408 = scmp.eq.s32.totalorder %s44, 0
      %p409 = por %p407, %p408
      %p410 = scmp.ne.s32.totalorder %s396, %s397
      %p411 = scmp.eq.s32.totalorder %s45, 3
      %p412 = por %p410, %p411
      %p414 = scmp.ne.s32.totalorder %s397, %s413
      %p415 = scmp.eq.s32.totalorder %s45, 0
      %p416 = por %p414, %p415
      %s417 = ssub.s32 %s39, %s46
      %p418 = scmp.eq.s32.totalorder %s417, 0
      %s420 = sadd.s32 %s419, 1
      %s421 = scalar_select %p418, %s419, %s420
      %p424 = pneg %p418
      %p425 = scmp.eq.s32.totalorder %s39, 3
      %p426 = por %p424, %p425
      %p427 = scmp.ne.s32.totalorder %s419, %s422
      %p428 = scmp.eq.s32.totalorder %s39, 0
      %p429 = por %p427, %p428
      %p430 = scmp.ne.s32.totalorder %s419, %s422
      %p431 = scmp.eq.s32.totalorder %s44, 3
      %p432 = por %p430, %p431
      %p433 = scmp.ne.s32.totalorder %s422, %s423
      %p434 = scmp.eq.s32.totalorder %s44, 0
      %p435 = por %p433, %p434
      %p436 = scmp.ne.s32.totalorder %s422, %s423
      %p437 = scmp.eq.s32.totalorder %s45, 3
      %p438 = por %p436, %p437
      %p440 = scmp.ne.s32.totalorder %s423, %s439
      %p441 = scmp.eq.s32.totalorder %s45, 0
      %p442 = por %p440, %p441
      %s444 = sadd.s32 %s443, 1
      %p447 = scmp.eq.s32.totalorder %s39, 3
      %p448 = scmp.ne.s32.totalorder %s443, %s445
      %p449 = scmp.eq.s32.totalorder %s39, 0
      %p450 = por %p448, %p449
      %p451 = scmp.ne.s32.totalorder %s443, %s445
      %p452 = scmp.eq.s32.totalorder %s44, 3
      %p453 = por %p451, %p452
      %p454 = scmp.ne.s32.totalorder %s445, %s446
      %p455 = scmp.eq.s32.totalorder %s44, 0
      %p456 = por %p454, %p455
      %p457 = scmp.ne.s32.totalorder %s445, %s446
      %p458 = scmp.eq.s32.totalorder %s45, 3
      %p459 = por %p457, %p458
      %p461 = scmp.ne.s32.totalorder %s446, %s460
      %p462 = scmp.eq.s32.totalorder %s45, 0
      %p463 = por %p461, %p462
      %s465 = sadd.s32 %s464, 1
      %p468 = scmp.eq.s32.totalorder %s39, 3
      %p469 = scmp.ne.s32.totalorder %s464, %s466
      %p470 = scmp.eq.s32.totalorder %s39, 0
      %p471 = por %p469, %p470
      %p472 = scmp.ne.s32.totalorder %s464, %s466
      %p473 = scmp.eq.s32.totalorder %s44, 3
      %p474 = por %p472, %p473
      %p475 = scmp.ne.s32.totalorder %s466, %s467
      %p476 = scmp.eq.s32.totalorder %s44, 0
      %p477 = por %p475, %p476
      %p478 = scmp.ne.s32.totalorder %s466, %s467
      %p479 = scmp.eq.s32.totalorder %s45, 3
      %p480 = por %p478, %p479
      %p482 = scmp.ne.s32.totalorder %s467, %s481
      %p483 = scmp.eq.s32.totalorder %s45, 0
      %p484 = por %p482, %p483
      %s486 = sadd.s32 %s485, 1
      %p489 = scmp.eq.s32.totalorder %s39, 3
      %p490 = scmp.ne.s32.totalorder %s485, %s487
      %p491 = scmp.eq.s32.totalorder %s39, 0
      %p492 = por %p490, %p491
      %p493 = scmp.ne.s32.totalorder %s485, %s487
      %p494 = scmp.eq.s32.totalorder %s44, 3
      %p495 = por %p493, %p494
      %p496 = scmp.ne.s32.totalorder %s487, %s488
      %p497 = scmp.eq.s32.totalorder %s44, 0
      %p498 = por %p496, %p497
      %p499 = scmp.ne.s32.totalorder %s487, %s488
      %p500 = scmp.eq.s32.totalorder %s45, 3
      %p501 = por %p499, %p500
      %p503 = scmp.ne.s32.totalorder %s488, %s502
      %p504 = scmp.eq.s32.totalorder %s45, 0
      %p505 = por %p503, %p504
      %s507 = sadd.s32 %s506, 1
      %p510 = scmp.eq.s32.totalorder %s39, 3
      %p511 = scmp.ne.s32.totalorder %s506, %s508
      %p512 = scmp.eq.s32.totalorder %s39, 0
      %p513 = por %p511, %p512
      %p514 = scmp.ne.s32.totalorder %s506, %s508
      %p515 = scmp.eq.s32.totalorder %s44, 3
      %p516 = por %p514, %p515
      %p517 = scmp.ne.s32.totalorder %s508, %s509
      %p518 = scmp.eq.s32.totalorder %s44, 0
      %p519 = por %p517, %p518
      %p520 = scmp.ne.s32.totalorder %s508, %s509
      %p521 = scmp.eq.s32.totalorder %s45, 3
      %p522 = por %p520, %p521
      %p524 = scmp.ne.s32.totalorder %s509, %s523
      %p525 = scmp.eq.s32.totalorder %s45, 0
      %p526 = por %p524, %p525
      %s528 = sadd.s32 %s527, 1
      %p531 = scmp.eq.s32.totalorder %s39, 3
      %p532 = scmp.ne.s32.totalorder %s527, %s529
      %p533 = scmp.eq.s32.totalorder %s39, 0
      %p534 = por %p532, %p533
      %p535 = scmp.ne.s32.totalorder %s527, %s529
      %p536 = scmp.eq.s32.totalorder %s44, 3
      %p537 = por %p535, %p536
      %p538 = scmp.ne.s32.totalorder %s529, %s530
      %p539 = scmp.eq.s32.totalorder %s44, 0
      %p540 = por %p538, %p539
      %p541 = scmp.ne.s32.totalorder %s529, %s530
      %p542 = scmp.eq.s32.totalorder %s45, 3
      %p543 = por %p541, %p542
      %p545 = scmp.ne.s32.totalorder %s530, %s544
      %p546 = scmp.eq.s32.totalorder %s45, 0
      %p547 = por %p545, %p546
      %s549 = sadd.s32 %s548, 1
      %p552 = scmp.eq.s32.totalorder %s39, 3
      %p553 = scmp.ne.s32.totalorder %s548, %s550
      %p554 = scmp.eq.s32.totalorder %s39, 0
      %p555 = por %p553, %p554
      %p556 = scmp.ne.s32.totalorder %s548, %s550
      %p557 = scmp.eq.s32.totalorder %s44, 3
      %p558 = por %p556, %p557
      %p559 = scmp.ne.s32.totalorder %s550, %s551
      %p560 = scmp.eq.s32.totalorder %s44, 0
      %p561 = por %p559, %p560
      %p562 = scmp.ne.s32.totalorder %s550, %s551
      %p563 = scmp.eq.s32.totalorder %s45, 3
      %p564 = por %p562, %p563
      %p566 = scmp.ne.s32.totalorder %s551, %s565
      %p567 = scmp.eq.s32.totalorder %s45, 0
      %p568 = por %p566, %p567
      %s570 = sadd.s32 %s569, 1
      %p573 = scmp.eq.s32.totalorder %s39, 3
      %p574 = scmp.ne.s32.totalorder %s569, %s571
      %p575 = scmp.eq.s32.totalorder %s39, 0
      %p576 = por %p574, %p575
      %p577 = scmp.ne.s32.totalorder %s569, %s571
      %p578 = scmp.eq.s32.totalorder %s44, 3
      %p579 = por %p577, %p578
      %p580 = scmp.ne.s32.totalorder %s571, %s572
      %p581 = scmp.eq.s32.totalorder %s44, 0
      %p582 = por %p580, %p581
      %p583 = scmp.ne.s32.totalorder %s571, %s572
      %p584 = scmp.eq.s32.totalorder %s45, 3
      %p585 = por %p583, %p584
      %p587 = scmp.ne.s32.totalorder %s572, %s586
      %p588 = scmp.eq.s32.totalorder %s45, 0
      %p589 = por %p587, %p588
      %s591 = sadd.s32 %s590, 1
      %p594 = scmp.eq.s32.totalorder %s39, 3
      %p595 = scmp.ne.s32.totalorder %s590, %s592
      %p596 = scmp.eq.s32.totalorder %s39, 0
      %p597 = por %p595, %p596
      %p598 = scmp.ne.s32.totalorder %s590, %s592
      %p599 = scmp.eq.s32.totalorder %s44, 3
      %p600 = por %p598, %p599
      %p601 = scmp.ne.s32.totalorder %s592, %s593
      %p602 = scmp.eq.s32.totalorder %s44, 0
      %p603 = por %p601, %p602
      %p604 = scmp.ne.s32.totalorder %s592, %s593
      %p605 = scmp.eq.s32.totalorder %s45, 3
      %p606 = por %p604, %p605
      %p608 = scmp.ne.s32.totalorder %s593, %s607
      %p609 = scmp.eq.s32.totalorder %s45, 0
      %p610 = por %p608, %p609
      %s612 = sadd.s32 %s611, 1
      %p615 = scmp.eq.s32.totalorder %s39, 3
      %p616 = scmp.ne.s32.totalorder %s611, %s613
      %p617 = scmp.eq.s32.totalorder %s39, 0
      %p618 = por %p616, %p617
      %p619 = scmp.ne.s32.totalorder %s611, %s613
      %p620 = scmp.eq.s32.totalorder %s44, 3
      %p621 = por %p619, %p620
      %p622 = scmp.ne.s32.totalorder %s613, %s614
      %p623 = scmp.eq.s32.totalorder %s44, 0
      %p624 = por %p622, %p623
      %p625 = scmp.ne.s32.totalorder %s613, %s614
      %p626 = scmp.eq.s32.totalorder %s45, 3
      %p627 = por %p625, %p626
      %p629 = scmp.ne.s32.totalorder %s614, %s628
      %p630 = scmp.eq.s32.totalorder %s45, 0
      %p631 = por %p629, %p630
      %s633 = sadd.s32 %s632, 1
      %p636 = scmp.eq.s32.totalorder %s39, 3
      %p637 = scmp.ne.s32.totalorder %s632, %s634
      %p638 = scmp.eq.s32.totalorder %s39, 0
      %p639 = por %p637, %p638
      %p640 = scmp.ne.s32.totalorder %s632, %s634
      %p641 = scmp.eq.s32.totalorder %s44, 3
      %p642 = por %p640, %p641
      %p643 = scmp.ne.s32.totalorder %s634, %s635
      %p644 = scmp.eq.s32.totalorder %s44, 0
      %p645 = por %p643, %p644
      %p646 = scmp.ne.s32.totalorder %s634, %s635
      %p647 = scmp.eq.s32.totalorder %s45, 3
      %p648 = por %p646, %p647
      %p650 = scmp.ne.s32.totalorder %s635, %s649
      %p651 = scmp.eq.s32.totalorder %s45, 0
      %p652 = por %p650, %p651
      %s654 = sadd.s32 %s653, 1
      %p657 = scmp.eq.s32.totalorder %s39, 3
      %p658 = scmp.ne.s32.totalorder %s653, %s655
      %p659 = scmp.eq.s32.totalorder %s39, 0
      %p660 = por %p658, %p659
      %p661 = scmp.ne.s32.totalorder %s653, %s655
      %p662 = scmp.eq.s32.totalorder %s44, 3
      %p663 = por %p661, %p662
      %p664 = scmp.ne.s32.totalorder %s655, %s656
      %p665 = scmp.eq.s32.totalorder %s44, 0
      %p666 = por %p664, %p665
      %p667 = scmp.ne.s32.totalorder %s655, %s656
      %p668 = scmp.eq.s32.totalorder %s45, 3
      %p669 = por %p667, %p668
      %p671 = scmp.ne.s32.totalorder %s656, %s670
      %p672 = scmp.eq.s32.totalorder %s45, 0
      %p673 = por %p671, %p672
      %s675 = sadd.s32 %s674, 1
      %p678 = scmp.eq.s32.totalorder %s39, 3
      %p679 = scmp.ne.s32.totalorder %s674, %s676
      %p680 = scmp.eq.s32.totalorder %s39, 0
      %p681 = por %p679, %p680
      %p682 = scmp.ne.s32.totalorder %s674, %s676
      %p683 = scmp.eq.s32.totalorder %s44, 3
      %p684 = por %p682, %p683
      %p685 = scmp.ne.s32.totalorder %s676, %s677
      %p686 = scmp.eq.s32.totalorder %s44, 0
      %p687 = por %p685, %p686
      %p688 = scmp.ne.s32.totalorder %s676, %s677
      %p689 = scmp.eq.s32.totalorder %s45, 3
      %p690 = por %p688, %p689
      %p692 = scmp.ne.s32.totalorder %s677, %s691
      %p693 = scmp.eq.s32.totalorder %s45, 0
      %p694 = por %p692, %p693
      %p695 = scmp.le.s32.totalorder 1, %s39
      %p696 = scmp.lt.s32.totalorder %s39, 5
      %p697 = pnand %p695, %p696
      %p698 = pneg %p697
      // Predicated region
      $region9: #{bert_classifier_forward.1} parent=5 // pred_check
        _
      $region10: #{bert_classifier_forward.1} parent=5 // pred_check_branch
        %700 = sbr.rel (%p697) target = $region12
      $region11: #{bert_classifier_forward.1} parent=5 // pred_region
        %s701 = ssub.s32 %s39, 1
        // Predicated region
        $region13: #{bert_classifier_forward.1} parent=11 // pred_check
          %p702 = pneg %p60
        $region14: #{bert_classifier_forward.1} parent=11 // pred_check_branch
          %704 = sbr.rel (%p702) target = $region16
        $region15: #{bert_classifier_forward.1} parent=11 // pred_region
          _
        $region16: #{bert_classifier_forward.1} parent=11 // pred_fallthru
          _
        // Predicated region
        $region17: #{bert_classifier_forward.1} parent=11 // pred_check
          %p705 = pneg %p81
        $region18: #{bert_classifier_forward.1} parent=11 // pred_check_branch
          %707 = sbr.rel (%p705) target = $region20
        $region19: #{bert_classifier_forward.1} parent=11 // pred_region
          _
        $region20: #{bert_classifier_forward.1} parent=11 // pred_fallthru
          _
        // Predicated region
        $region21: #{bert_classifier_forward.1} parent=11 // pred_check
          %p708 = pneg %p102
        $region22: #{bert_classifier_forward.1} parent=11 // pred_check_branch
          %710 = sbr.rel (%p708) target = $region24
        $region23: #{bert_classifier_forward.1} parent=11 // pred_region
          _
        $region24: #{bert_classifier_forward.1} parent=11 // pred_fallthru
          _
        // Predicated region
        $region25: #{bert_classifier_forward.1} parent=11 // pred_check
          %p711 = pneg %p123
        $region26: #{bert_classifier_forward.1} parent=11 // pred_check_branch
          %713 = sbr.rel (%p711) target = $region28
        $region27: #{bert_classifier_forward.1} parent=11 // pred_region
          _
        $region28: #{bert_classifier_forward.1} parent=11 // pred_fallthru
          _
        // Predicated region
        $region29: #{bert_classifier_forward.1} parent=11 // pred_check
          %p714 = pneg %p456
        $region30: #{bert_classifier_forward.1} parent=11 // pred_check_branch
          %716 = sbr.rel (%p714) target = $region32
        $region31: #{bert_classifier_forward.1} parent=11 // pred_region
          _
        $region32: #{bert_classifier_forward.1} parent=11 // pred_fallthru
          _
        // Predicated region
        $region33: #{bert_classifier_forward.1} parent=11 // pred_check
          %p717 = pneg %p477
        $region34: #{bert_classifier_forward.1} parent=11 // pred_check_branch
          %719 = sbr.rel (%p717) target = $region36
        $region35: #{bert_classifier_forward.1} parent=11 // pred_region
          _
        $region36: #{bert_classifier_forward.1} parent=11 // pred_fallthru
          _
        // Predicated region
        $region37: #{bert_classifier_forward.1} parent=11 // pred_check
          %p720 = pneg %p498
        $region38: #{bert_classifier_forward.1} parent=11 // pred_check_branch
          %722 = sbr.rel (%p720) target = $region40
        $region39: #{bert_classifier_forward.1} parent=11 // pred_region
          _
        $region40: #{bert_classifier_forward.1} parent=11 // pred_fallthru
          _
        // Predicated region
        $region41: #{bert_classifier_forward.1} parent=11 // pred_check
          %p723 = pneg %p519
        $region42: #{bert_classifier_forward.1} parent=11 // pred_check_branch
          %725 = sbr.rel (%p723) target = $region44
        $region43: #{bert_classifier_forward.1} parent=11 // pred_region
          _
        $region44: #{bert_classifier_forward.1} parent=11 // pred_fallthru
          _
        // Predicated region
        $region45: #{bert_classifier_forward.1} parent=11 // pred_check
          %p726 = pneg %p540
        $region46: #{bert_classifier_forward.1} parent=11 // pred_check_branch
          %728 = sbr.rel (%p726) target = $region48
        $region47: #{bert_classifier_forward.1} parent=11 // pred_region
          _
        $region48: #{bert_classifier_forward.1} parent=11 // pred_fallthru
          _
        // Predicated region
        $region49: #{bert_classifier_forward.1} parent=11 // pred_check
          %p729 = pneg %p561
        $region50: #{bert_classifier_forward.1} parent=11 // pred_check_branch
          %731 = sbr.rel (%p729) target = $region52
        $region51: #{bert_classifier_forward.1} parent=11 // pred_region
          _
        $region52: #{bert_classifier_forward.1} parent=11 // pred_fallthru
          _
        // Predicated region
        $region53: #{bert_classifier_forward.1} parent=11 // pred_check
          %p732 = pneg %p582
        $region54: #{bert_classifier_forward.1} parent=11 // pred_check_branch
          %734 = sbr.rel (%p732) target = $region56
        $region55: #{bert_classifier_forward.1} parent=11 // pred_region
          _
        $region56: #{bert_classifier_forward.1} parent=11 // pred_fallthru
          _
        // Predicated region
        $region57: #{bert_classifier_forward.1} parent=11 // pred_check
          %p735 = pneg %p603
        $region58: #{bert_classifier_forward.1} parent=11 // pred_check_branch
          %737 = sbr.rel (%p735) target = $region60
        $region59: #{bert_classifier_forward.1} parent=11 // pred_region
          _
        $region60: #{bert_classifier_forward.1} parent=11 // pred_fallthru
          _
        // Predicated region
        $region61: #{bert_classifier_forward.1} parent=11 // pred_check
          %p738 = pneg %p624
        $region62: #{bert_classifier_forward.1} parent=11 // pred_check_branch
          %740 = sbr.rel (%p738) target = $region64
        $region63: #{bert_classifier_forward.1} parent=11 // pred_region
          _
        $region64: #{bert_classifier_forward.1} parent=11 // pred_fallthru
          _
        // Predicated region
        $region65: #{bert_classifier_forward.1} parent=11 // pred_check
          %p741 = pneg %p645
        $region66: #{bert_classifier_forward.1} parent=11 // pred_check_branch
          %743 = sbr.rel (%p741) target = $region68
        $region67: #{bert_classifier_forward.1} parent=11 // pred_region
          _
        $region68: #{bert_classifier_forward.1} parent=11 // pred_fallthru
          _
      $region12: #{bert_classifier_forward.1} parent=5 // pred_fallthru
        _
      %p744 = scmp.lt.s32.totalorder %s39, 4
      // Predicated region
      $region69: #{bert_classifier_forward.1} parent=5 // pred_check
        %p745 = pneg %p744
      $region70: #{bert_classifier_forward.1} parent=5 // pred_check_branch
        %747 = sbr.rel (%p745) target = $region72
      $region71: #{bert_classifier_forward.1} parent=5 // pred_region
        // Predicated region
        $region73: #{bert_classifier_forward.1} parent=71 // pred_check
          %p748 = pneg %p143
        $region74: #{bert_classifier_forward.1} parent=71 // pred_check_branch
          %750 = sbr.rel (%p748) target = $region76
        $region75: #{bert_classifier_forward.1} parent=71 // pred_region
          %p751 = scmp.lt.s32.totalorder %s39, 3
          %s752 = scalar_select %p751, %s39, 3
          %s753 = smul.addr %s752, 48
          %s754 = smul.addr %s753, 4
          %s755 = scalar_lea.vmem %s4, %s754
        $region76: #{bert_classifier_forward.1} parent=71 // pred_fallthru
          _
        // Predicated region
        $region77: #{bert_classifier_forward.1} parent=71 // pred_check
          %p756 = pneg %p169
        $region78: #{bert_classifier_forward.1} parent=71 // pred_check_branch
          %758 = sbr.rel (%p756) target = $region80
        $region79: #{bert_classifier_forward.1} parent=71 // pred_region
          %p759 = scmp.lt.s32.totalorder %s39, 3
          %s760 = scalar_select %p759, %s39, 3
          %s761 = smul.addr %s760, 3
          %s762 = scalar_lea.vmem %s5, %s761
        $region80: #{bert_classifier_forward.1} parent=71 // pred_fallthru
          _
        // Predicated region
        $region81: #{bert_classifier_forward.1} parent=71 // pred_check
          %p763 = pneg %p195
        $region82: #{bert_classifier_forward.1} parent=71 // pred_check_branch
          %765 = sbr.rel (%p763) target = $region84
        $region83: #{bert_classifier_forward.1} parent=71 // pred_region
          %p766 = scmp.lt.s32.totalorder %s39, 3
          %s767 = scalar_select %p766, %s39, 3
          %s768 = smul.addr %s767, 16
          %s769 = smul.addr %s768, 4
          %s770 = scalar_lea.vmem %s6, %s769
        $region84: #{bert_classifier_forward.1} parent=71 // pred_fallthru
          _
        // Predicated region
        $region85: #{bert_classifier_forward.1} parent=71 // pred_check
          %p771 = pneg %p221
        $region86: #{bert_classifier_forward.1} parent=71 // pred_check_branch
          %773 = sbr.rel (%p771) target = $region88
        $region87: #{bert_classifier_forward.1} parent=71 // pred_region
          %p774 = scmp.lt.s32.totalorder %s39, 3
          %s775 = scalar_select %p774, %s39, 3
          %s776 = scalar_lea.vmem %s7, %s775
        $region88: #{bert_classifier_forward.1} parent=71 // pred_fallthru
          _
        // Predicated region
        $region89: #{bert_classifier_forward.1} parent=71 // pred_check
          %p777 = pneg %p247
        $region90: #{bert_classifier_forward.1} parent=71 // pred_check_branch
          %779 = sbr.rel (%p777) target = $region92
        $region91: #{bert_classifier_forward.1} parent=71 // pred_region
          %p780 = scmp.lt.s32.totalorder %s39, 3
          %s781 = scalar_select %p780, %s39, 3
          %s782 = scalar_lea.vmem %s8, %s781
        $region92: #{bert_classifier_forward.1} parent=71 // pred_fallthru
          _
        // Predicated region
        $region93: #{bert_classifier_forward.1} parent=71 // pred_check
          %p783 = pneg %p273
        $region94: #{bert_classifier_forward.1} parent=71 // pred_check_branch
          %785 = sbr.rel (%p783) target = $region96
        $region95: #{bert_classifier_forward.1} parent=71 // pred_region
          %p786 = scmp.lt.s32.totalorder %s39, 3
          %s787 = scalar_select %p786, %s39, 3
          %s788 = scalar_lea.vmem %s9, %s787
        $region96: #{bert_classifier_forward.1} parent=71 // pred_fallthru
          _
        // Predicated region
        $region97: #{bert_classifier_forward.1} parent=71 // pred_check
          %p789 = pneg %p299
        $region98: #{bert_classifier_forward.1} parent=71 // pred_check_branch
          %791 = sbr.rel (%p789) target = $region100
        $region99: #{bert_classifier_forward.1} parent=71 // pred_region
          %p792 = scmp.lt.s32.totalorder %s39, 3
          %s793 = scalar_select %p792, %s39, 3
          %s794 = smul.addr %s793, 32
          %s795 = smul.addr %s794, 4
          %s796 = scalar_lea.vmem %s10, %s795
        $region100: #{bert_classifier_forward.1} parent=71 // pred_fallthru
          _
        // Predicated region
        $region101: #{bert_classifier_forward.1} parent=71 // pred_check
          %p797 = pneg %p325
        $region102: #{bert_classifier_forward.1} parent=71 // pred_check_branch
          %799 = sbr.rel (%p797) target = $region104
        $region103: #{bert_classifier_forward.1} parent=71 // pred_region
          %p800 = scmp.lt.s32.totalorder %s39, 3
          %s801 = scalar_select %p800, %s39, 3
          %s802 = smul.addr %s801, 2
          %s803 = scalar_lea.vmem %s11, %s802
        $region104: #{bert_classifier_forward.1} parent=71 // pred_fallthru
          _
        // Predicated region
        $region105: #{bert_classifier_forward.1} parent=71 // pred_check
          %p804 = pneg %p351
        $region106: #{bert_classifier_forward.1} parent=71 // pred_check_branch
          %806 = sbr.rel (%p804) target = $region108
        $region107: #{bert_classifier_forward.1} parent=71 // pred_region
          %s807 = sand.u32 %s341, 1
          %s808 = scalar_lea.sflag [#allocation5], %s807
          %s809 = sand.u32 %s341, 1
          %s810 = smul.addr %s809, 128
          %s811 = scalar_lea.vmem [#allocation4], %s810
          %s813 = ssub.s32 2048, 2048
          %814 = vsyncadd %s808, %s813
          %s815 = smul.addr %s39, 32
          %s816 = smul.addr %s815, 64
          %s817 = scalar_lea.hbm %s12, %s816
          %s818 = sshll.u32 %s811, 4
          %s819 = int_to_ptr.vmem [resolvable:$true] %s818
          %824 = dma.hbm_to_vmem [thread:$0]  %s817, 2048, %s819, %s808, 64, 64, 4
        $region108: #{bert_classifier_forward.1} parent=71 // pred_fallthru
          _
        // Predicated region
        $region109: #{bert_classifier_forward.1} parent=71 // pred_check
          %p825 = pneg %p377
        $region110: #{bert_classifier_forward.1} parent=71 // pred_check_branch
          %827 = sbr.rel (%p825) target = $region112
        $region111: #{bert_classifier_forward.1} parent=71 // pred_region
          %p828 = scmp.lt.s32.totalorder %s39, 3
          %s829 = scalar_select %p828, %s39, 3
          %s830 = scalar_lea.vmem %s13, %s829
        $region112: #{bert_classifier_forward.1} parent=71 // pred_fallthru
          _
        // Predicated region
        $region113: #{bert_classifier_forward.1} parent=71 // pred_check
          %p831 = pneg %p403
        $region114: #{bert_classifier_forward.1} parent=71 // pred_check_branch
          %833 = sbr.rel (%p831) target = $region116
        $region115: #{bert_classifier_forward.1} parent=71 // pred_region
          %p834 = scmp.lt.s32.totalorder %s39, 3
          %s835 = scalar_select %p834, %s39, 3
          %s836 = scalar_lea.vmem %s14, %s835
        $region116: #{bert_classifier_forward.1} parent=71 // pred_fallthru
          _
        // Predicated region
        $region117: #{bert_classifier_forward.1} parent=71 // pred_check
          %p837 = pneg %p429
        $region118: #{bert_classifier_forward.1} parent=71 // pred_check_branch
          %839 = sbr.rel (%p837) target = $region120
        $region119: #{bert_classifier_forward.1} parent=71 // pred_region
          %p840 = scmp.lt.s32.totalorder %s39, 3
          %s841 = scalar_select %p840, %s39, 3
          %s842 = scalar_lea.vmem %s15, %s841
        $region120: #{bert_classifier_forward.1} parent=71 // pred_fallthru
          _
      $region72: #{bert_classifier_forward.1} parent=5 // pred_fallthru
        _
      %p843 = scmp.le.s32.totalorder 1, %s39
      %p844 = scmp.lt.s32.totalorder %s39, 5
      %p845 = pnand %p843, %p844
      %p846 = pneg %p845
      // Predicated region
      $region121: #{bert_classifier_forward.1} parent=5 // pred_check
        _
      $region122: #{bert_classifier_forward.1} parent=5 // pred_check_branch
        %848 = sbr.rel (%p845) target = $region124
      $region123: #{bert_classifier_forward.1} parent=5 // pred_region
        %s849 = ssub.s32 %s39, 1
        %s850 = sand.u32 %s344, 1
        %s851 = scalar_lea.sflag [#allocation5], %s850
        %s852 = sand.u32 %s344, 1
        %s853 = smul.addr %s852, 128
        %s854 = scalar_lea.vmem [#allocation4], %s853
        // Predicated region
        $region125: #{bert_classifier_forward.1} parent=123 // pred_check
          %p855 = pneg %p357
        $region126: #{bert_classifier_forward.1} parent=123 // pred_check_branch
          %857 = sbr.rel (%p855) target = $region128
        $region127: #{bert_classifier_forward.1} parent=123 // pred_region
          %858 = dma.done %s851, 2048
        $region128: #{bert_classifier_forward.1} parent=123 // pred_fallthru
          _
        %p859 = pneg %p60
        %p860 = pneg %p57
        %p861 = pneg %p81
        %p862 = pneg %p78
        %p863 = pneg %p102
        %p864 = pneg %p99
        %p865 = pneg %p123
        %p866 = pneg %p120
        %p867 = scmp.lt.s32.totalorder %s44, 3
        %s868 = scalar_select %p867, %s44, 3
        %s869 = smul.addr %s868, 48
        %s870 = smul.addr %s869, 4
        %s871 = scalar_lea.vmem %s4, %s870
        %p872 = pneg %p149
        %p873 = pneg %p146
        %p874 = scmp.lt.s32.totalorder %s44, 3
        %s875 = scalar_select %p874, %s44, 3
        %s876 = smul.addr %s875, 3
        %s877 = scalar_lea.vmem %s5, %s876
        %p878 = pneg %p175
        %p879 = pneg %p172
        %p880 = scmp.lt.s32.totalorder %s44, 3
        %s881 = scalar_select %p880, %s44, 3
        %s882 = smul.addr %s881, 16
        %s883 = smul.addr %s882, 4
        %s884 = scalar_lea.vmem %s6, %s883
        %p885 = pneg %p201
        %p886 = pneg %p198
        %p887 = scmp.lt.s32.totalorder %s44, 3
        %s888 = scalar_select %p887, %s44, 3
        %s889 = scalar_lea.vmem %s7, %s888
        %p890 = pneg %p227
        %p891 = pneg %p224
        %p892 = scmp.lt.s32.totalorder %s44, 3
        %s893 = scalar_select %p892, %s44, 3
        %s894 = scalar_lea.vmem %s8, %s893
        %p895 = pneg %p253
        %p896 = pneg %p250
        %p897 = scmp.lt.s32.totalorder %s44, 3
        %s898 = scalar_select %p897, %s44, 3
        %s899 = scalar_lea.vmem %s9, %s898
        %p900 = pneg %p279
        %p901 = pneg %p276
        %p902 = scmp.lt.s32.totalorder %s44, 3
        %s903 = scalar_select %p902, %s44, 3
        %s904 = smul.addr %s903, 32
        %s905 = smul.addr %s904, 4
        %s906 = scalar_lea.vmem %s10, %s905
        %p907 = pneg %p305
        %p908 = pneg %p302
        %p909 = scmp.lt.s32.totalorder %s44, 3
        %s910 = scalar_select %p909, %s44, 3
        %s911 = smul.addr %s910, 2
        %s912 = scalar_lea.vmem %s11, %s911
        %p913 = pneg %p331
        %p914 = pneg %p328
        %s915 = sand.u32 %s344, 1
        %s916 = scalar_lea.sflag [#allocation5], %s915
        %s917 = sand.u32 %s344, 1
        %s918 = smul.addr %s917, 128
        %s919 = scalar_lea.vmem [#allocation4], %s918
        %p920 = pneg %p357
        %p921 = pneg %p354
        %p922 = scmp.lt.s32.totalorder %s44, 3
        %s923 = scalar_select %p922, %s44, 3
        %s924 = scalar_lea.vmem %s13, %s923
        %p925 = pneg %p383
        %p926 = pneg %p380
        %p927 = scmp.lt.s32.totalorder %s44, 3
        %s928 = scalar_select %p927, %s44, 3
        %s929 = scalar_lea.vmem %s14, %s928
        %p930 = pneg %p409
        %p931 = pneg %p406
        %p932 = scmp.lt.s32.totalorder %s44, 3
        %s933 = scalar_select %p932, %s44, 3
        %s934 = scalar_lea.vmem %s15, %s933
        %p935 = pneg %p435
        %p936 = pneg %p432
        %p937 = pneg %p456
        %p938 = pneg %p453
        %p939 = pneg %p477
        %p940 = pneg %p474
        %p941 = pneg %p498
        %p942 = pneg %p495
        %p943 = pneg %p519
        %p944 = pneg %p516
        %p945 = pneg %p540
        %p946 = pneg %p537
        %p947 = pneg %p561
        %p948 = pneg %p558
        %p949 = pneg %p582
        %p950 = pneg %p579
        %p951 = pneg %p603
        %p952 = pneg %p600
        %p953 = pneg %p624
        %p954 = pneg %p621
        %p955 = pneg %p645
        %p956 = pneg %p642
        %p957 = pneg %p666
        %p958 = pneg %p663
        %p959 = pneg %p687
        %p960 = pneg %p684
        %p961 = scmp.lt.s32.totalorder %s44, 3
        %s962 = scalar_select %p961, %s44, 3
        %s963 = smul.addr %s962, 48
        %s964 = smul.addr %s963, 4
        %s965 = scalar_lea.vmem %s4, %s964
        %p966 = scmp.lt.s32.totalorder %s44, 3
        %s967 = scalar_select %p966, %s44, 3
        %s968 = smul.addr %s967, 3
        %s969 = scalar_lea.vmem %s5, %s968
        %p970 = scmp.lt.s32.totalorder %s44, 3
        %s971 = scalar_select %p970, %s44, 3
        %s972 = smul.addr %s971, 16
        %s973 = smul.addr %s972, 4
        %s974 = scalar_lea.vmem %s6, %s973
        %p975 = scmp.lt.s32.totalorder %s44, 3
        %s976 = scalar_select %p975, %s44, 3
        %s977 = scalar_lea.vmem %s7, %s976
        %p978 = scmp.lt.s32.totalorder %s44, 3
        %s979 = scalar_select %p978, %s44, 3
        %s980 = scalar_lea.vmem %s8, %s979
        %p981 = scmp.lt.s32.totalorder %s44, 3
        %s982 = scalar_select %p981, %s44, 3
        %s983 = scalar_lea.vmem %s9, %s982
        %p984 = scmp.lt.s32.totalorder %s44, 3
        %s985 = scalar_select %p984, %s44, 3
        %s986 = smul.addr %s985, 32
        %s987 = smul.addr %s986, 4
        %s988 = scalar_lea.vmem %s10, %s987
        %p989 = scmp.lt.s32.totalorder %s44, 3
        %s990 = scalar_select %p989, %s44, 3
        %s991 = smul.addr %s990, 2
        %s992 = scalar_lea.vmem %s11, %s991
        %p993 = scmp.lt.s32.totalorder %s44, 3
        %s994 = scalar_select %p993, %s44, 3
        %s995 = scalar_lea.vmem %s13, %s994
        %p996 = scmp.lt.s32.totalorder %s44, 3
        %s997 = scalar_select %p996, %s44, 3
        %s998 = scalar_lea.vmem %s14, %s997
        %p999 = scmp.lt.s32.totalorder %s44, 3
        %s1000 = scalar_select %p999, %s44, 3
        %s1001 = scalar_lea.vmem %s15, %s1000
        %p1003 = scmp.eq.s32.totalorder %s44, 0
        // Predicated region
        $region129: #{bert_classifier_forward.1} parent=123 // pred_check
          %p1004 = pneg %p1003
        $region130: #{bert_classifier_forward.1} parent=123 // pred_check_branch
          %1006 = sbr.rel (%p1004) target = $region132
        $region131: #{bert_classifier_forward.1} parent=123 // pred_region
          %v1007 = vld [vmem:[%s0] sm:$0xff]
          %v1008 = vld [vmem:[%s0 + $0x8] sm:$0xff]
          %v1009 = vld [vmem:[%s0 + $0x10] sm:$0xff]
          %v1010 = vld [vmem:[%s0 + $0x18] sm:$0xff]
          %v1011 = vld [vmem:[%s2] sm:$0x1]
          %v1012 = vld [vmem:[%s3] sm:$0x1]
          %1013 = vadd.xlane.f32.xlu0 %v1007
          %v1014 = vpop.xlane.xlu0 %1013
          %1015 = vadd.xlane.f32.xlu0 %v1008
          %v1016 = vpop.xlane.xlu0 %1015
          %1017 = vadd.xlane.f32.xlu0 %v1009
          %v1018 = vpop.xlane.xlu0 %1017
          %1019 = vadd.xlane.f32.xlu0 %v1010
          %v1020 = vpop.xlane.xlu0 %1019
          %v1021 = vrcp.pop 128.0
          %v1022 = vmul.f32 %v1014, %v1021
          %v1023 = vmul.f32 %v1016, %v1021
          %v1024 = vmul.f32 %v1018, %v1021
          %v1025 = vmul.f32 %v1020, %v1021
          %v1026 = vsub.f32 %v1007, %v1022
          %v1027 = vsub.f32 %v1008, %v1023
          %v1028 = vsub.f32 %v1009, %v1024
          %v1029 = vsub.f32 %v1010, %v1025
          %v1030 = vmul.f32 %v1026, %v1026
          %v1031 = vmul.f32 %v1027, %v1027
          %v1032 = vmul.f32 %v1028, %v1028
          %v1033 = vmul.f32 %v1029, %v1029
          %1034 = vadd.xlane.f32.xlu0 %v1030
          %v1035 = vpop.xlane.xlu0 %1034
          %1036 = vadd.xlane.f32.xlu0 %v1031
          %v1037 = vpop.xlane.xlu0 %1036
          %1038 = vadd.xlane.f32.xlu0 %v1032
          %v1039 = vpop.xlane.xlu0 %1038
          %1040 = vadd.xlane.f32.xlu0 %v1033
          %v1041 = vpop.xlane.xlu0 %1040
          %v1042 = vmul.f32 %v1035, %v1021
          %v1043 = vmul.f32 %v1037, %v1021
          %v1044 = vmul.f32 %v1039, %v1021
          %v1045 = vmul.f32 %v1041, %v1021
          %v1046 = vadd.f32 %v1042, 1e-12
          %v1047 = vadd.f32 %v1043, 1e-12
          %v1048 = vadd.f32 %v1044, 1e-12
          %v1049 = vadd.f32 %v1045, 1e-12
          %v1050 = vrsqrt.pop %v1046
          %v1051 = vrsqrt.pop %v1047
          %v1052 = vrsqrt.pop %v1048
          %v1053 = vrsqrt.pop %v1049
          %v1054 = vmul.f32 %v1026, %v1050
          %v1055 = vmul.f32 %v1027, %v1051
          %v1056 = vmul.f32 %v1028, %v1052
          %v1057 = vmul.f32 %v1029, %v1053
          %v1059 = vlaneseq
          %v1060 = vshrl.u32 %v1059, 7
          %v1061 = vsub.s32 0, %v1060
          %v1062 = vrot.slane %v1011, %v1061
          %v1064 = vmul.f32 %v1054, %v1062
          %v1065 = vmul.f32 %v1055, %v1062
          %v1066 = vmul.f32 %v1056, %v1062
          %v1067 = vmul.f32 %v1057, %v1062
          %v1069 = vlaneseq
          %v1070 = vshrl.u32 %v1069, 7
          %v1071 = vsub.s32 0, %v1070
          %v1072 = vrot.slane %v1012, %v1071
          %v1074 = vadd.f32 %v1064, %v1072
          %v1075 = vadd.f32 %v1065, %v1072
          %v1076 = vadd.f32 %v1066, %v1072
          %v1077 = vadd.f32 %v1067, %v1072
          %1078 = vst [vmem:[#allocation2] sm:$0xff] %v1074
          %1079 = vst [vmem:[#allocation2 + $0x8] sm:$0xff] %v1075
          %1080 = vst [vmem:[#allocation2 + $0x10] sm:$0xff] %v1076
          %1081 = vst [vmem:[#allocation2 + $0x18] sm:$0xff] %v1077
        $region132: #{bert_classifier_forward.1} parent=123 // pred_fallthru
          _
        %v1082 = vld [vmem:[#allocation2] sm:$0xff]
        %v1083 = vld [vmem:[#allocation2 + $0x8] sm:$0xff]
        %v1084 = vld [vmem:[#allocation2 + $0x10] sm:$0xff]
        %v1085 = vld [vmem:[#allocation2 + $0x18] sm:$0xff]
        %v1086 = vpack.c.bf16 %v1083, %v1082
        %v1087 = vpack.c.bf16 %v1085, %v1084
        %v1088 = vld [vmem:[%s965] sm:$0xff]
        %v1089 = vld [vmem:[%s965 + $0x8] sm:$0xf]
        %v1090 = vld [vmem:[%s965 + $0xc] sm:$0xff]
        %v1091 = vld [vmem:[%s965 + $0x14] sm:$0xf]
        %v1092 = vld [vmem:[%s965 + $0x18] sm:$0xff]
        %v1093 = vld [vmem:[%s965 + $0x20] sm:$0xf]
        %v1094 = vld [vmem:[%s965 + $0x24] sm:$0xff]
        %v1095 = vld [vmem:[%s965 + $0x2c] sm:$0xf]
        %v1096 = vld [vmem:[%s965 + $0x30] sm:$0xff]
        %v1097 = vld [vmem:[%s965 + $0x38] sm:$0xf]
        %v1098 = vld [vmem:[%s965 + $0x3c] sm:$0xff]
        %v1099 = vld [vmem:[%s965 + $0x44] sm:$0xf]
        %v1100 = vld [vmem:[%s965 + $0x48] sm:$0xff]
        %v1101 = vld [vmem:[%s965 + $0x50] sm:$0xf]
        %v1102 = vld [vmem:[%s965 + $0x54] sm:$0xff]
        %v1103 = vld [vmem:[%s965 + $0x5c] sm:$0xf]
        %v1104 = vld [vmem:[%s965 + $0x60] sm:$0xff]
        %v1105 = vld [vmem:[%s965 + $0x68] sm:$0xf]
        %v1106 = vld [vmem:[%s965 + $0x6c] sm:$0xff]
        %v1107 = vld [vmem:[%s965 + $0x74] sm:$0xf]
        %v1108 = vld [vmem:[%s965 + $0x78] sm:$0xff]
        %v1109 = vld [vmem:[%s965 + $0x80] sm:$0xf]
        %v1110 = vld [vmem:[%s965 + $0x84] sm:$0xff]
        %v1111 = vld [vmem:[%s965 + $0x8c] sm:$0xf]
        %v1112 = vld [vmem:[%s965 + $0x90] sm:$0xff]
        %v1113 = vld [vmem:[%s965 + $0x98] sm:$0xf]
        %v1114 = vld [vmem:[%s965 + $0x9c] sm:$0xff]
        %v1115 = vld [vmem:[%s965 + $0xa4] sm:$0xf]
        %v1116 = vld [vmem:[%s965 + $0xa8] sm:$0xff]
        %v1117 = vld [vmem:[%s965 + $0xb0] sm:$0xf]
        %v1118 = vld [vmem:[%s965 + $0xb4] sm:$0xff]
        %v1119 = vld [vmem:[%s965 + $0xbc] sm:$0xf]
        %v1120 = vld [vmem:[%s969] sm:$0x7]
        %v1122 = vlaneseq
        %v1123 = vshrl.u32 %v1122, 7
        %v1124 = vsub.s32 0, %v1123
        %v1125 = vrot.slane %v1120, %v1124
        %v1126 = vlaneseq
        %v1127 = vshrl.u32 %v1126, 7
        %v1128 = vsub.s32 1, %v1127
        %v1129 = vrot.slane %v1120, %v1128
        %v1130 = vlaneseq
        %v1131 = vshrl.u32 %v1130, 7
        %v1132 = vsub.s32 2, %v1131
        %v1133 = vrot.slane %v1120, %v1132
        %v1169 = vunpack.c.l.b16 %v1088
        %v1170 = vunpack.c.h.b16 %v1088
        %v1171 = vunpack.c.l.b16 %v1089
        %v1172 = vunpack.c.l.b16 %v1090
        %v1173 = vunpack.c.h.b16 %v1090
        %v1174 = vunpack.c.l.b16 %v1091
        %v1175 = vunpack.c.l.b16 %v1092
        %v1176 = vunpack.c.h.b16 %v1092
        %v1177 = vunpack.c.l.b16 %v1093
        %v1178 = vunpack.c.l.b16 %v1094
        %v1179 = vunpack.c.h.b16 %v1094
        %v1180 = vunpack.c.l.b16 %v1095
        %v1181 = vunpack.c.l.b16 %v1096
        %v1182 = vunpack.c.h.b16 %v1096
        %v1183 = vunpack.c.l.b16 %v1097
        %v1184 = vunpack.c.l.b16 %v1098
        %v1185 = vunpack.c.h.b16 %v1098
        %v1186 = vunpack.c.l.b16 %v1099
        %v1187 = vunpack.c.l.b16 %v1100
        %v1188 = vunpack.c.h.b16 %v1100
        %v1189 = vunpack.c.l.b16 %v1101
        %v1190 = vunpack.c.l.b16 %v1102
        %v1191 = vunpack.c.h.b16 %v1102
        %v1192 = vunpack.c.l.b16 %v1103
        %v1193 = vunpack.c.l.b16 %v1104
        %v1194 = vunpack.c.h.b16 %v1104
        %v1195 = vunpack.c.l.b16 %v1105
        %v1196 = vunpack.c.l.b16 %v1106
        %v1197 = vunpack.c.h.b16 %v1106
        %v1198 = vunpack.c.l.b16 %v1107
        %v1199 = vunpack.c.l.b16 %v1108
        %v1200 = vunpack.c.h.b16 %v1108
        %v1201 = vunpack.c.l.b16 %v1109
        %v1202 = vunpack.c.l.b16 %v1110
        %v1203 = vunpack.c.h.b16 %v1110
        %v1204 = vunpack.c.l.b16 %v1111
        %v1205 = vunpack.c.l.b16 %v1112
        %v1206 = vunpack.c.h.b16 %v1112
        %v1207 = vunpack.c.l.b16 %v1113
        %v1208 = vunpack.c.l.b16 %v1114
        %v1209 = vunpack.c.h.b16 %v1114
        %v1210 = vunpack.c.l.b16 %v1115
        %v1211 = vunpack.c.l.b16 %v1116
        %v1212 = vunpack.c.h.b16 %v1116
        %v1213 = vunpack.c.l.b16 %v1117
        %v1214 = vunpack.c.l.b16 %v1118
        %v1215 = vunpack.c.h.b16 %v1118
        %v1216 = vunpack.c.l.b16 %v1119
        %v1217 = vpack.c.b16 %v1172, %v1169
        %v1218 = vpack.c.b16 %v1173, %v1170
        %v1219 = vpack.c.b16 %v1174, %v1171
        %v1220 = vpack.c.b16 %v1178, %v1175
        %v1221 = vpack.c.b16 %v1179, %v1176
        %v1222 = vpack.c.b16 %v1180, %v1177
        %v1223 = vpack.c.b16 %v1184, %v1181
        %v1224 = vpack.c.b16 %v1185, %v1182
        %v1225 = vpack.c.b16 %v1186, %v1183
        %v1226 = vpack.c.b16 %v1190, %v1187
        %v1227 = vpack.c.b16 %v1191, %v1188
        %v1228 = vpack.c.b16 %v1192, %v1189
        %v1229 = vpack.c.b16 %v1196, %v1193
        %v1230 = vpack.c.b16 %v1197, %v1194
        %v1231 = vpack.c.b16 %v1198, %v1195
        %v1232 = vpack.c.b16 %v1202, %v1199
        %v1233 = vpack.c.b16 %v1203, %v1200
        %v1234 = vpack.c.b16 %v1204, %v1201
        %v1235 = vpack.c.b16 %v1208, %v1205
        %v1236 = vpack.c.b16 %v1209, %v1206
        %v1237 = vpack.c.b16 %v1210, %v1207
        %v1238 = vpack.c.b16 %v1214, %v1211
        %v1239 = vpack.c.b16 %v1215, %v1212
        %v1240 = vpack.c.b16 %v1216, %v1213
        %1265 = vmatprep.subr.bf16.mxu0 %v1239
        %1266 = vmatpush1.bf16.msra.mxu0 %v1238
        %1267 = vmatprep.subr.bf16.mxu0 %v1236
        %1268 = vmatpush1.bf16.msra.mxu0 %v1235
        %1269 = vmatprep.subr.bf16.mxu0 %v1233
        %1270 = vmatpush1.bf16.msra.mxu0 %v1232
        %1271 = vmatprep.subr.bf16.mxu0 %v1230
        %1272 = vmatpush1.bf16.msra.mxu0 %v1229
        %1273 = vmatprep.subr.bf16.mxu0 %v1227
        %1274 = vmatpush1.bf16.msra.mxu0 %v1226
        %1275 = vmatprep.subr.bf16.mxu0 %v1224
        %1276 = vmatpush1.bf16.msra.mxu0 %v1223
        %1277 = vmatprep.subr.bf16.mxu0 %v1221
        %1278 = vmatpush1.bf16.msra.mxu0 %v1220
        %1279 = vmatprep.subr.bf16.mxu0 %v1218
        %1280 = vmatpush1.bf16.msra.mxu0 %v1217
        %1281 = vmatprep.subr.bf16.mxu0 0
        %1282 = vmatpush2.bf16.msra.mxu0 0
        %1283 = vmatprep.subr.bf16.mxu0 0
        %1284 = vmatpush2.bf16.msra.mxu0 0
        %1285 = vmatprep.subr.bf16.mxu0 0
        %1286 = vmatpush2.bf16.msra.mxu0 0
        %1287 = vmatprep.subr.bf16.mxu0 0
        %1288 = vmatpush2.bf16.msra.mxu0 0
        %1289 = vmatprep.subr.bf16.mxu0 0
        %1290 = vmatpush2.bf16.msra.mxu0 0
        %1291 = vmatprep.subr.bf16.mxu0 0
        %1292 = vmatpush2.bf16.msra.mxu0 0
        %1293 = vmatprep.subr.bf16.mxu0 0
        %1294 = vmatpush2.bf16.msra.mxu0 0
        %1295 = vmatprep.subr.bf16.mxu0 0
        %1296 = vmatpush2.bf16.msra.mxu0 0
        %1297 = vmatprep.mubr.bf16.mxu0 0
        %1298 = vmatmul.mubr.bf16.gmra.mxu0 %v1086
        %v1299 = vpop.f32.mrf.mxu0
        %v1300 = vadd.f32 %v1125, %v1299
        %v1301 = vpop.f32.mrf.mxu0
        %v1302 = vadd.f32 %v1129, %v1301
        %v1303 = vpop.f32.mrf.mxu0
        %v1304 = vadd.f32 %v1125, %v1303
        %v1305 = vpop.f32.mrf.mxu0
        %v1306 = vadd.f32 %v1129, %v1305
        %1307 = vmatprep.mubr.bf16.mxu0 0
        %1308 = vmatmul.mubr.bf16.gmra.mxu0 %v1087
        %v1309 = vpop.f32.mrf.mxu0
        %v1310 = vadd.f32 %v1125, %v1309
        %v1311 = vpop.f32.mrf.mxu0
        %v1312 = vadd.f32 %v1129, %v1311
        %v1313 = vpop.f32.mrf.mxu0
        %v1314 = vadd.f32 %v1125, %v1313
        %v1315 = vpop.f32.mrf.mxu0
        %v1316 = vadd.f32 %v1129, %v1315
        %1317 = vdwg.mxu0
        %1318 = vmatprep.subr.bf16.mxu0 0
        %1319 = vmatpush1.bf16.msra.mxu0 %v1240
        %1320 = vmatprep.subr.bf16.mxu0 0
        %1321 = vmatpush1.bf16.msra.mxu0 %v1237
        %1322 = vmatprep.subr.bf16.mxu0 0
        %1323 = vmatpush1.bf16.msra.mxu0 %v1234
        %1324 = vmatprep.subr.bf16.mxu0 0
        %1325 = vmatpush1.bf16.msra.mxu0 %v1231
        %1326 = vmatprep.subr.bf16.mxu0 0
        %1327 = vmatpush1.bf16.msra.mxu0 %v1228
        %1328 = vmatprep.subr.bf16.mxu0 0
        %1329 = vmatpush1.bf16.msra.mxu0 %v1225
        %1330 = vmatprep.subr.bf16.mxu0 0
        %1331 = vmatpush1.bf16.msra.mxu0 %v1222
        %1332 = vmatprep.subr.bf16.mxu0 0
        %1333 = vmatpush1.bf16.msra.mxu0 %v1219
        %1334 = vmatprep.subr.bf16.mxu0 0
        %1335 = vmatpush2.bf16.msra.mxu0 0
        %1336 = vmatprep.subr.bf16.mxu0 0
        %1337 = vmatpush2.bf16.msra.mxu0 0
        %1338 = vmatprep.subr.bf16.mxu0 0
        %1339 = vmatpush2.bf16.msra.mxu0 0
        %1340 = vmatprep.subr.bf16.mxu0 0
        %1341 = vmatpush2.bf16.msra.mxu0 0
        %1342 = vmatprep.subr.bf16.mxu0 0
        %1343 = vmatpush2.bf16.msra.mxu0 0
        %1344 = vmatprep.subr.bf16.mxu0 0
        %1345 = vmatpush2.bf16.msra.mxu0 0
        %1346 = vmatprep.subr.bf16.mxu0 0
        %1347 = vmatpush2.bf16.msra.mxu0 0
        %1348 = vmatprep.subr.bf16.mxu0 0
        %1349 = vmatpush2.bf16.msra.mxu0 0
        %1350 = vmatprep.mubr.bf16.mxu0 0
        %1351 = vmatmul.mubr.bf16.gmra.mxu0 %v1086
        %v1352 = vpop.f32.mrf.mxu0
        %v1353 = vadd.f32 %v1133, %v1352
        %v1354 = vpop.f32.mrf.mxu0
        %v1355 = vpop.f32.mrf.mxu0
        %v1356 = vadd.f32 %v1133, %v1355
        %v1357 = vpop.f32.mrf.mxu0
        %1358 = vmatprep.mubr.bf16.mxu0 0
        %1359 = vmatmul.mubr.bf16.gmra.mxu0 %v1087
        %v1360 = vpop.f32.mrf.mxu0
        %v1361 = vadd.f32 %v1133, %v1360
        %v1362 = vpop.f32.mrf.mxu0
        %v1363 = vpop.f32.mrf.mxu0
        %v1364 = vadd.f32 %v1133, %v1363
        %v1365 = vpop.f32.mrf.mxu0
        %1366 = vdwg.mxu0
        %1369 = vrot.lane.b32.xlu0 %v1300, 64
        %v1370 = vpop.permute.xlu0 %1369
        %1371 = vrot.lane.b32.xlu0 %v1304, 64
        %v1372 = vpop.permute.xlu0 %1371
        %1375 = vrot.lane.b32.xlu0 %v1310, 64
        %v1376 = vpop.permute.xlu0 %1375
        %1377 = vrot.lane.b32.xlu0 %v1314, 64
        %v1378 = vpop.permute.xlu0 %1377
        %1381 = vrot.lane.b32.xlu0 %v1302, 64
        %v1382 = vpop.permute.xlu0 %1381
        %1383 = vrot.lane.b32.xlu0 %v1306, 64
        %v1384 = vpop.permute.xlu0 %1383
        %1387 = vrot.lane.b32.xlu0 %v1312, 64
        %v1388 = vpop.permute.xlu0 %1387
        %1389 = vrot.lane.b32.xlu0 %v1316, 64
        %v1390 = vpop.permute.xlu0 %1389
        %1393 = vrot.lane.b32.xlu0 %v1353, 64
        %v1394 = vpop.permute.xlu0 %1393
        %1395 = vrot.lane.b32.xlu0 %v1356, 64
        %v1396 = vpop.permute.xlu0 %1395
        %1401 = vrot.lane.b32.xlu0 %v1361, 64
        %v1402 = vpop.permute.xlu0 %1401
        %1403 = vrot.lane.b32.xlu0 %v1364, 64
        %v1404 = vpop.permute.xlu0 %1403
        %vm1407 = vcmask 523264
        %v1408 = vsel %vm1407, %v1300, 0
        %v1410 = vsel %vm1407, %v1304, 0
        %v1412 = vsel %vm1407, %v1370, 0
        %v1414 = vsel %vm1407, %v1372, 0
        %v1416 = vsel %vm1407, %v1310, 0
        %v1418 = vsel %vm1407, %v1314, 0
        %v1420 = vsel %vm1407, %v1376, 0
        %v1422 = vsel %vm1407, %v1378, 0
        %v1424 = vsel %vm1407, %v1302, 0
        %v1426 = vsel %vm1407, %v1306, 0
        %v1428 = vsel %vm1407, %v1382, 0
        %v1430 = vsel %vm1407, %v1384, 0
        %v1432 = vsel %vm1407, %v1312, 0
        %v1434 = vsel %vm1407, %v1316, 0
        %v1436 = vsel %vm1407, %v1388, 0
        %v1438 = vsel %vm1407, %v1390, 0
        %1440 = vmatprep.subr.mxu0 0.0
        %1441 = vmatpush1.xpose.msra.mxu0 0.0
        %1442 = vmatprep.subr.mxu0 0.0
        %1443 = vmatpush1.xpose.msra.mxu0 0.0
        %1444 = vmatprep.subr.mxu0 0.0
        %1445 = vmatpush1.xpose.msra.mxu0 0.0
        %1446 = vmatprep.subr.mxu0 0.0
        %1447 = vmatpush1.xpose.msra.mxu0 0.0
        %1448 = vmatprep.subr.mxu0 0.0
        %1449 = vmatpush1.xpose.msra.mxu0 0.0
        %1450 = vmatprep.subr.mxu0 0.0
        %1451 = vmatpush1.xpose.msra.mxu0 0.0
        %1452 = vmatprep.subr.mxu0 0.0
        %1453 = vmatpush1.xpose.msra.mxu0 0.0
        %1454 = vmatprep.subr.mxu0 0.0
        %1455 = vmatpush1.xpose.msra.mxu0 0.0
        %1456 = vmatprep.subr.mxu0 0.0
        %1457 = vmatpush1.xpose.msra.mxu0 %v1438
        %1458 = vmatprep.subr.mxu0 0.0
        %1459 = vmatpush1.xpose.msra.mxu0 %v1436
        %1460 = vmatprep.subr.mxu0 0.0
        %1461 = vmatpush1.xpose.msra.mxu0 %v1434
        %1462 = vmatprep.subr.mxu0 0.0
        %1463 = vmatpush1.xpose.msra.mxu0 %v1432
        %1464 = vmatprep.subr.mxu0 0.0
        %1465 = vmatpush1.xpose.msra.mxu0 %v1430
        %1466 = vmatprep.subr.mxu0 0.0
        %1467 = vmatpush1.xpose.msra.mxu0 %v1428
        %1468 = vmatprep.subr.mxu0 0.0
        %1469 = vmatpush1.xpose.msra.mxu0 %v1426
        %1470 = vmatprep.subr.mxu0 0.0
        %1471 = vmatpush1.xpose.msra.mxu0 %v1424
        %1472 = vmatprep.subr.mxu0 0.0
        %1473 = vmatpush2.xpose.msra.mxu0 0.0
        %1474 = vmatprep.subr.mxu0 0.0
        %1475 = vmatpush2.xpose.msra.mxu0 0.0
        %1476 = vmatprep.subr.mxu0 0.0
        %1477 = vmatpush2.xpose.msra.mxu0 0.0
        %1478 = vmatprep.subr.mxu0 0.0
        %1479 = vmatpush2.xpose.msra.mxu0 0.0
        %1480 = vmatprep.subr.mxu0 0.0
        %1481 = vmatpush2.xpose.msra.mxu0 0.0
        %1482 = vmatprep.subr.mxu0 0.0
        %1483 = vmatpush2.xpose.msra.mxu0 0.0
        %1484 = vmatprep.subr.mxu0 0.0
        %1485 = vmatpush2.xpose.msra.mxu0 0.0
        %1486 = vmatprep.subr.mxu0 0.0
        %1487 = vmatpush2.xpose.msra.mxu0 0.0
        %1488 = vmatprep.subr.mxu0 0.0
        %1489 = vmatpush2.xpose.msra.mxu0 0.0
        %1490 = vmatprep.subr.mxu0 0.0
        %1491 = vmatpush2.xpose.msra.mxu0 0.0
        %1492 = vmatprep.subr.mxu0 0.0
        %1493 = vmatpush2.xpose.msra.mxu0 0.0
        %1494 = vmatprep.subr.mxu0 0.0
        %1495 = vmatpush2.xpose.msra.mxu0 0.0
        %1496 = vmatprep.subr.mxu0 0.0
        %1497 = vmatpush2.xpose.msra.mxu0 0.0
        %1498 = vmatprep.subr.mxu0 0.0
        %1499 = vmatpush2.xpose.msra.mxu0 0.0
        %1500 = vmatprep.subr.mxu0 0.0
        %1501 = vmatpush2.xpose.msra.mxu0 0.0
        %1502 = vmatprep.subr.mxu0 0.0
        %1503 = vmatpush2.xpose.msra.mxu0 0.0
        %1504 = vmatprep.mubr.f32.mxu0 0.0
        %1505 = vmatmul.mubr.f32.gmra.mxu0 %v1408
        %v1506 = vpop.f32.mrf.mxu0
        %v1507 = vadd.f32 0.0, %v1506
        %v1508 = vpop.f32.mrf.mxu0
        %1509 = vmatprep.mubr.f32.mxu0 0.0
        %1510 = vmatmul.mubr.f32.gmra.mxu0 %v1410
        %v1511 = vpop.f32.mrf.mxu0
        %v1512 = vadd.f32 0.0, %v1511
        %v1513 = vpop.f32.mrf.mxu0
        %1514 = vmatprep.mubr.f32.mxu0 0.0
        %1515 = vmatmul.mubr.f32.gmra.mxu0 %v1412
        %v1516 = vpop.f32.mrf.mxu0
        %v1517 = vadd.f32 0.0, %v1516
        %v1518 = vpop.f32.mrf.mxu0
        %1519 = vmatprep.mubr.f32.mxu0 0.0
        %1520 = vmatmul.mubr.f32.gmra.mxu0 %v1414
        %v1521 = vpop.f32.mrf.mxu0
        %v1522 = vadd.f32 0.0, %v1521
        %v1523 = vpop.f32.mrf.mxu0
        %1524 = vmatprep.mubr.f32.mxu0 0.0
        %1525 = vmatmul.mubr.f32.gmra.mxu0 %v1416
        %v1526 = vpop.f32.mrf.mxu0
        %v1527 = vadd.f32 0.0, %v1526
        %v1528 = vpop.f32.mrf.mxu0
        %1529 = vmatprep.mubr.f32.mxu0 0.0
        %1530 = vmatmul.mubr.f32.gmra.mxu0 %v1418
        %v1531 = vpop.f32.mrf.mxu0
        %v1532 = vadd.f32 0.0, %v1531
        %v1533 = vpop.f32.mrf.mxu0
        %1534 = vmatprep.mubr.f32.mxu0 0.0
        %1535 = vmatmul.mubr.f32.gmra.mxu0 %v1420
        %v1536 = vpop.f32.mrf.mxu0
        %v1537 = vadd.f32 0.0, %v1536
        %v1538 = vpop.f32.mrf.mxu0
        %1539 = vmatprep.mubr.f32.mxu0 0.0
        %1540 = vmatmul.mubr.f32.gmra.mxu0 %v1422
        %v1541 = vpop.f32.mrf.mxu0
        %v1542 = vadd.f32 0.0, %v1541
        %v1543 = vpop.f32.mrf.mxu0
        %1544 = vdwg.mxu0
        %v1545 = vmul.f32 %v1507, 0.125
        %v1546 = vmul.f32 %v1512, 0.125
        %v1547 = vmul.f32 %v1517, 0.125
        %v1548 = vmul.f32 %v1522, 0.125
        %v1549 = vmul.f32 %v1527, 0.125
        %v1550 = vmul.f32 %v1532, 0.125
        %v1551 = vmul.f32 %v1537, 0.125
        %v1552 = vmul.f32 %v1542, 0.125
        %v1553 = vld [vmem:[%s1] sm:$0xff]
        %v1554 = vld [vmem:[%s1 + $0x8] sm:$0xff]
        %v1555 = vld [vmem:[%s1 + $0x10] sm:$0xff]
        %v1556 = vld [vmem:[%s1 + $0x18] sm:$0xff]
        %v1557 = vld [vmem:[%s1 + $0x20] sm:$0xff]
        %v1558 = vld [vmem:[%s1 + $0x28] sm:$0xff]
        %v1559 = vld [vmem:[%s1 + $0x30] sm:$0xff]
        %v1560 = vld [vmem:[%s1 + $0x38] sm:$0xff]
        %v1561 = vadd.f32 %v1545, %v1553
        %v1562 = vadd.f32 %v1546, %v1554
        %v1563 = vadd.f32 %v1547, %v1555
        %v1564 = vadd.f32 %v1548, %v1556
        %v1565 = vadd.f32 %v1549, %v1557
        %v1566 = vadd.f32 %v1550, %v1558
        %v1567 = vadd.f32 %v1551, %v1559
        %v1568 = vadd.f32 %v1552, %v1560
        %v1569 = vsel %vm1407, %v1561, -inf
        %1570 = vmax.xlane.f32.xlu0 %v1569
        %v1571 = vpop.xlane.xlu0 %1570
        %v1572 = vsel %vm1407, %v1562, -inf
        %1573 = vmax.xlane.f32.xlu0 %v1572
        %v1574 = vpop.xlane.xlu0 %1573
        %v1575 = vsel %vm1407, %v1563, -inf
        %1576 = vmax.xlane.f32.xlu0 %v1575
        %v1577 = vpop.xlane.xlu0 %1576
        %v1578 = vsel %vm1407, %v1564, -inf
        %1579 = vmax.xlane.f32.xlu0 %v1578
        %v1580 = vpop.xlane.xlu0 %1579
        %v1581 = vsel %vm1407, %v1565, -inf
        %1582 = vmax.xlane.f32.xlu0 %v1581
        %v1583 = vpop.xlane.xlu0 %1582
        %v1584 = vsel %vm1407, %v1566, -inf
        %1585 = vmax.xlane.f32.xlu0 %v1584
        %v1586 = vpop.xlane.xlu0 %1585
        %v1587 = vsel %vm1407, %v1567, -inf
        %1588 = vmax.xlane.f32.xlu0 %v1587
        %v1589 = vpop.xlane.xlu0 %1588
        %v1590 = vsel %vm1407, %v1568, -inf
        %1591 = vmax.xlane.f32.xlu0 %v1590
        %v1592 = vpop.xlane.xlu0 %1591
        %v1593 = vsub.f32 %v1561, %v1571
        %v1594 = vsub.f32 %v1562, %v1574
        %v1595 = vsub.f32 %v1563, %v1577
        %v1596 = vsub.f32 %v1564, %v1580
        %v1597 = vsub.f32 %v1565, %v1583
        %v1598 = vsub.f32 %v1566, %v1586
        %v1599 = vsub.f32 %v1567, %v1589
        %v1600 = vsub.f32 %v1568, %v1592
        %v1601 = vmul.f32 %v1593, 1.442695
        %v1602 = vpow.pop %v1601
        %v1603 = vmul.f32 %v1594, 1.442695
        %v1604 = vpow.pop %v1603
        %v1605 = vmul.f32 %v1595, 1.442695
        %v1606 = vpow.pop %v1605
        %v1607 = vmul.f32 %v1596, 1.442695
        %v1608 = vpow.pop %v1607
        %v1609 = vmul.f32 %v1597, 1.442695
        %v1610 = vpow.pop %v1609
        %v1611 = vmul.f32 %v1598, 1.442695
        %v1612 = vpow.pop %v1611
        %v1613 = vmul.f32 %v1599, 1.442695
        %v1614 = vpow.pop %v1613
        %v1615 = vmul.f32 %v1600, 1.442695
        %v1616 = vpow.pop %v1615
        %v1617 = vsel %vm1407, %v1602, 0.0
        %1618 = vadd.xlane.f32.xlu0 %v1617
        %v1619 = vpop.xlane.xlu0 %1618
        %v1620 = vsel %vm1407, %v1604, 0.0
        %1621 = vadd.xlane.f32.xlu0 %v1620
        %v1622 = vpop.xlane.xlu0 %1621
        %v1623 = vsel %vm1407, %v1606, 0.0
        %1624 = vadd.xlane.f32.xlu0 %v1623
        %v1625 = vpop.xlane.xlu0 %1624
        %v1626 = vsel %vm1407, %v1608, 0.0
        %1627 = vadd.xlane.f32.xlu0 %v1626
        %v1628 = vpop.xlane.xlu0 %1627
        %v1629 = vsel %vm1407, %v1610, 0.0
        %1630 = vadd.xlane.f32.xlu0 %v1629
        %v1631 = vpop.xlane.xlu0 %1630
        %v1632 = vsel %vm1407, %v1612, 0.0
        %1633 = vadd.xlane.f32.xlu0 %v1632
        %v1634 = vpop.xlane.xlu0 %1633
        %v1635 = vsel %vm1407, %v1614, 0.0
        %1636 = vadd.xlane.f32.xlu0 %v1635
        %v1637 = vpop.xlane.xlu0 %1636
        %v1638 = vsel %vm1407, %v1616, 0.0
        %1639 = vadd.xlane.f32.xlu0 %v1638
        %v1640 = vpop.xlane.xlu0 %1639
        %v1641 = vrcp.pop %v1619
        %v1642 = vrcp.pop %v1622
        %v1643 = vrcp.pop %v1625
        %v1644 = vrcp.pop %v1628
        %v1645 = vrcp.pop %v1631
        %v1646 = vrcp.pop %v1634
        %v1647 = vrcp.pop %v1637
        %v1648 = vrcp.pop %v1640
        %v1649 = vmul.f32 %v1602, %v1641
        %v1650 = vmul.f32 %v1604, %v1642
        %v1651 = vmul.f32 %v1606, %v1643
        %v1652 = vmul.f32 %v1608, %v1644
        %v1653 = vmul.f32 %v1610, %v1645
        %v1654 = vmul.f32 %v1612, %v1646
        %v1655 = vmul.f32 %v1614, %v1647
        %v1656 = vmul.f32 %v1616, %v1648
        %v1658 = vsel %vm1407, %v1649, 0
        %v1661 = vsel %vm1407, %v1650, 0
        %v1664 = vsel %vm1407, %v1651, 0
        %v1667 = vsel %vm1407, %v1652, 0
        %v1670 = vsel %vm1407, %v1653, 0
        %v1673 = vsel %vm1407, %v1654, 0
        %v1676 = vsel %vm1407, %v1655, 0
        %v1679 = vsel %vm1407, %v1656, 0
        %1681 = vmatprep.subr.mxu0 0.0
        %1682 = vmatpush1.msra.mxu0 0.0
        %1683 = vmatprep.subr.mxu0 0.0
        %1684 = vmatpush1.msra.mxu0 0.0
        %1685 = vmatprep.subr.mxu0 0.0
        %1686 = vmatpush1.msra.mxu0 0.0
        %1687 = vmatprep.subr.mxu0 0.0
        %1688 = vmatpush1.msra.mxu0 0.0
        %1689 = vmatprep.subr.mxu0 0.0
        %1690 = vmatpush1.msra.mxu0 0.0
        %1691 = vmatprep.subr.mxu0 0.0
        %1692 = vmatpush1.msra.mxu0 0.0
        %1693 = vmatprep.subr.mxu0 0.0
        %1694 = vmatpush1.msra.mxu0 0.0
        %1695 = vmatprep.subr.mxu0 0.0
        %1696 = vmatpush1.msra.mxu0 0.0
        %1697 = vmatprep.subr.mxu0 0.0
        %1698 = vmatpush1.msra.mxu0 %v1404
        %1699 = vmatprep.subr.mxu0 0.0
        %1700 = vmatpush1.msra.mxu0 %v1402
        %1701 = vmatprep.subr.mxu0 0.0
        %1702 = vmatpush1.msra.mxu0 %v1364
        %1703 = vmatprep.subr.mxu0 0.0
        %1704 = vmatpush1.msra.mxu0 %v1361
        %1705 = vmatprep.subr.mxu0 0.0
        %1706 = vmatpush1.msra.mxu0 %v1396
        %1707 = vmatprep.subr.mxu0 0.0
        %1708 = vmatpush1.msra.mxu0 %v1394
        %1709 = vmatprep.subr.mxu0 0.0
        %1710 = vmatpush1.msra.mxu0 %v1356
        %1711 = vmatprep.subr.mxu0 0.0
        %1712 = vmatpush1.msra.mxu0 %v1353
        %1713 = vmatprep.subr.mxu0 0.0
        %1714 = vmatpush2.msra.mxu0 0.0
        %1715 = vmatprep.subr.mxu0 0.0
        %1716 = vmatpush2.msra.mxu0 0.0
        %1717 = vmatprep.subr.mxu0 0.0
        %1718 = vmatpush2.msra.mxu0 0.0
        %1719 = vmatprep.subr.mxu0 0.0
        %1720 = vmatpush2.msra.mxu0 0.0
        %1721 = vmatprep.subr.mxu0 0.0
        %1722 = vmatpush2.msra.mxu0 0.0
        %1723 = vmatprep.subr.mxu0 0.0
        %1724 = vmatpush2.msra.mxu0 0.0
        %1725 = vmatprep.subr.mxu0 0.0
        %1726 = vmatpush2.msra.mxu0 0.0
        %1727 = vmatprep.subr.mxu0 0.0
        %1728 = vmatpush2.msra.mxu0 0.0
        %1729 = vmatprep.subr.mxu0 0.0
        %1730 = vmatpush2.msra.mxu0 0.0
        %1731 = vmatprep.subr.mxu0 0.0
        %1732 = vmatpush2.msra.mxu0 0.0
        %1733 = vmatprep.subr.mxu0 0.0
        %1734 = vmatpush2.msra.mxu0 0.0
        %1735 = vmatprep.subr.mxu0 0.0
        %1736 = vmatpush2.msra.mxu0 0.0
        %1737 = vmatprep.subr.mxu0 0.0
        %1738 = vmatpush2.msra.mxu0 0.0
        %1739 = vmatprep.subr.mxu0 0.0
        %1740 = vmatpush2.msra.mxu0 0.0
        %1741 = vmatprep.subr.mxu0 0.0
        %1742 = vmatpush2.msra.mxu0 0.0
        %1743 = vmatprep.subr.mxu0 0.0
        %1744 = vmatpush2.msra.mxu0 0.0
        %1745 = vmatprep.mubr.f32.mxu0 0.0
        %1746 = vmatmul.mubr.f32.gmra.mxu0 %v1658
        %v1747 = vpop.f32.mrf.mxu0
        %v1748 = vadd.f32 0.0, %v1747
        %v1749 = vpop.f32.mrf.mxu0
        %1750 = vmatprep.mubr.f32.mxu0 0.0
        %1751 = vmatmul.mubr.f32.gmra.mxu0 %v1661
        %v1752 = vpop.f32.mrf.mxu0
        %v1753 = vadd.f32 0.0, %v1752
        %v1754 = vpop.f32.mrf.mxu0
        %1755 = vmatprep.mubr.f32.mxu0 0.0
        %1756 = vmatmul.mubr.f32.gmra.mxu0 %v1664
        %v1757 = vpop.f32.mrf.mxu0
        %v1758 = vadd.f32 0.0, %v1757
        %v1759 = vpop.f32.mrf.mxu0
        %1760 = vmatprep.mubr.f32.mxu0 0.0
        %1761 = vmatmul.mubr.f32.gmra.mxu0 %v1667
        %v1762 = vpop.f32.mrf.mxu0
        %v1763 = vadd.f32 0.0, %v1762
        %v1764 = vpop.f32.mrf.mxu0
        %1765 = vmatprep.mubr.f32.mxu0 0.0
        %1766 = vmatmul.mubr.f32.gmra.mxu0 %v1670
        %v1767 = vpop.f32.mrf.mxu0
        %v1768 = vadd.f32 0.0, %v1767
        %v1769 = vpop.f32.mrf.mxu0
        %1770 = vmatprep.mubr.f32.mxu0 0.0
        %1771 = vmatmul.mubr.f32.gmra.mxu0 %v1673
        %v1772 = vpop.f32.mrf.mxu0
        %v1773 = vadd.f32 0.0, %v1772
        %v1774 = vpop.f32.mrf.mxu0
        %1775 = vmatprep.mubr.f32.mxu0 0.0
        %1776 = vmatmul.mubr.f32.gmra.mxu0 %v1676
        %v1777 = vpop.f32.mrf.mxu0
        %v1778 = vadd.f32 0.0, %v1777
        %v1779 = vpop.f32.mrf.mxu0
        %1780 = vmatprep.mubr.f32.mxu0 0.0
        %1781 = vmatmul.mubr.f32.gmra.mxu0 %v1679
        %v1782 = vpop.f32.mrf.mxu0
        %v1783 = vadd.f32 0.0, %v1782
        %v1784 = vpop.f32.mrf.mxu0
        %1785 = vdwg.mxu0
        %1788 = vrot.lane.b32.xlu0 %v1758, 64
        %v1789 = vpop.permute.xlu0 %1788
        %1790 = vrot.lane.b32.xlu0 %v1763, 64
        %v1791 = vpop.permute.xlu0 %1790
        %v1794 = vsel %vm1407, %v1748, %v1789
        %v1795 = vsel %vm1407, %v1753, %v1791
        %1798 = vrot.lane.b32.xlu0 %v1778, 64
        %v1799 = vpop.permute.xlu0 %1798
        %1800 = vrot.lane.b32.xlu0 %v1783, 64
        %v1801 = vpop.permute.xlu0 %1800
        %v1804 = vsel %vm1407, %v1768, %v1799
        %v1805 = vsel %vm1407, %v1773, %v1801
        %v1806 = vpack.c.bf16 %v1795, %v1794
        %v1807 = vpack.c.bf16 %v1805, %v1804
        %v1808 = vld [vmem:[%s974] sm:$0xf]
        %v1809 = vld [vmem:[%s974 + $0x4] sm:$0xf]
        %v1810 = vld [vmem:[%s974 + $0x8] sm:$0xf]
        %v1811 = vld [vmem:[%s974 + $0xc] sm:$0xf]
        %v1812 = vld [vmem:[%s974 + $0x10] sm:$0xf]
        %v1813 = vld [vmem:[%s974 + $0x14] sm:$0xf]
        %v1814 = vld [vmem:[%s974 + $0x18] sm:$0xf]
        %v1815 = vld [vmem:[%s974 + $0x1c] sm:$0xf]
        %v1816 = vld [vmem:[%s974 + $0x20] sm:$0xf]
        %v1817 = vld [vmem:[%s974 + $0x24] sm:$0xf]
        %v1818 = vld [vmem:[%s974 + $0x28] sm:$0xf]
        %v1819 = vld [vmem:[%s974 + $0x2c] sm:$0xf]
        %v1820 = vld [vmem:[%s974 + $0x30] sm:$0xf]
        %v1821 = vld [vmem:[%s974 + $0x34] sm:$0xf]
        %v1822 = vld [vmem:[%s974 + $0x38] sm:$0xf]
        %v1823 = vld [vmem:[%s974 + $0x3c] sm:$0xf]
        %v1824 = vld [vmem:[%s977] sm:$0x1]
        %v1826 = vlaneseq
        %v1827 = vshrl.u32 %v1826, 7
        %v1828 = vsub.s32 0, %v1827
        %v1829 = vrot.slane %v1824, %v1828
        %v1847 = vunpack.c.l.b16 %v1808
        %v1848 = vunpack.c.l.b16 %v1809
        %v1849 = vunpack.c.l.b16 %v1810
        %v1850 = vunpack.c.l.b16 %v1811
        %v1851 = vunpack.c.l.b16 %v1812
        %v1852 = vunpack.c.l.b16 %v1813
        %v1853 = vunpack.c.l.b16 %v1814
        %v1854 = vunpack.c.l.b16 %v1815
        %v1855 = vunpack.c.l.b16 %v1816
        %v1856 = vunpack.c.l.b16 %v1817
        %v1857 = vunpack.c.l.b16 %v1818
        %v1858 = vunpack.c.l.b16 %v1819
        %v1859 = vunpack.c.l.b16 %v1820
        %v1860 = vunpack.c.l.b16 %v1821
        %v1861 = vunpack.c.l.b16 %v1822
        %v1862 = vunpack.c.l.b16 %v1823
        %v1863 = vpack.c.b16 %v1848, %v1847
        %v1864 = vpack.c.b16 %v1850, %v1849
        %v1865 = vpack.c.b16 %v1852, %v1851
        %v1866 = vpack.c.b16 %v1854, %v1853
        %v1867 = vpack.c.b16 %v1856, %v1855
        %v1868 = vpack.c.b16 %v1858, %v1857
        %v1869 = vpack.c.b16 %v1860, %v1859
        %v1870 = vpack.c.b16 %v1862, %v1861
        %1879 = vmatprep.subr.bf16.mxu0 0
        %1880 = vmatpush1.bf16.msra.mxu0 %v1870
        %1881 = vmatprep.subr.bf16.mxu0 0
        %1882 = vmatpush1.bf16.msra.mxu0 %v1869
        %1883 = vmatprep.subr.bf16.mxu0 0
        %1884 = vmatpush1.bf16.msra.mxu0 %v1868
        %1885 = vmatprep.subr.bf16.mxu0 0
        %1886 = vmatpush1.bf16.msra.mxu0 %v1867
        %1887 = vmatprep.subr.bf16.mxu0 0
        %1888 = vmatpush1.bf16.msra.mxu0 %v1866
        %1889 = vmatprep.subr.bf16.mxu0 0
        %1890 = vmatpush1.bf16.msra.mxu0 %v1865
        %1891 = vmatprep.subr.bf16.mxu0 0
        %1892 = vmatpush1.bf16.msra.mxu0 %v1864
        %1893 = vmatprep.subr.bf16.mxu0 0
        %1894 = vmatpush1.bf16.msra.mxu0 %v1863
        %1895 = vmatprep.subr.bf16.mxu0 0
        %1896 = vmatpush2.bf16.msra.mxu0 0
        %1897 = vmatprep.subr.bf16.mxu0 0
        %1898 = vmatpush2.bf16.msra.mxu0 0
        %1899 = vmatprep.subr.bf16.mxu0 0
        %1900 = vmatpush2.bf16.msra.mxu0 0
        %1901 = vmatprep.subr.bf16.mxu0 0
        %1902 = vmatpush2.bf16.msra.mxu0 0
        %1903 = vmatprep.subr.bf16.mxu0 0
        %1904 = vmatpush2.bf16.msra.mxu0 0
        %1905 = vmatprep.subr.bf16.mxu0 0
        %1906 = vmatpush2.bf16.msra.mxu0 0
        %1907 = vmatprep.subr.bf16.mxu0 0
        %1908 = vmatpush2.bf16.msra.mxu0 0
        %1909 = vmatprep.subr.bf16.mxu0 0
        %1910 = vmatpush2.bf16.msra.mxu0 0
        %1911 = vmatprep.mubr.bf16.mxu0 0
        %1912 = vmatmul.mubr.bf16.gmra.mxu0 %v1806
        %v1913 = vpop.f32.mrf.mxu0
        %v1914 = vadd.f32 %v1829, %v1913
        %v1915 = vpop.f32.mrf.mxu0
        %v1916 = vpop.f32.mrf.mxu0
        %v1917 = vadd.f32 %v1829, %v1916
        %v1918 = vpop.f32.mrf.mxu0
        %1919 = vmatprep.mubr.bf16.mxu0 0
        %1920 = vmatmul.mubr.bf16.gmra.mxu0 %v1807
        %v1921 = vpop.f32.mrf.mxu0
        %v1922 = vadd.f32 %v1829, %v1921
        %v1923 = vpop.f32.mrf.mxu0
        %v1924 = vpop.f32.mrf.mxu0
        %v1925 = vadd.f32 %v1829, %v1924
        %v1926 = vpop.f32.mrf.mxu0
        %1927 = vdwg.mxu0
        %v1928 = vadd.f32 %v1082, %v1914
        %v1929 = vadd.f32 %v1083, %v1917
        %v1930 = vadd.f32 %v1084, %v1922
        %v1931 = vadd.f32 %v1085, %v1925
        %v1932 = vld [vmem:[%s980] sm:$0x1]
        %v1933 = vld [vmem:[%s983] sm:$0x1]
        %1934 = vadd.xlane.f32.xlu0 %v1928
        %v1935 = vpop.xlane.xlu0 %1934
        %1936 = vadd.xlane.f32.xlu0 %v1929
        %v1937 = vpop.xlane.xlu0 %1936
        %1938 = vadd.xlane.f32.xlu0 %v1930
        %v1939 = vpop.xlane.xlu0 %1938
        %1940 = vadd.xlane.f32.xlu0 %v1931
        %v1941 = vpop.xlane.xlu0 %1940
        %v1942 = vrcp.pop 128.0
        %v1943 = vmul.f32 %v1935, %v1942
        %v1944 = vmul.f32 %v1937, %v1942
        %v1945 = vmul.f32 %v1939, %v1942
        %v1946 = vmul.f32 %v1941, %v1942
        %v1947 = vsub.f32 %v1928, %v1943
        %v1948 = vsub.f32 %v1929, %v1944
        %v1949 = vsub.f32 %v1930, %v1945
        %v1950 = vsub.f32 %v1931, %v1946
        %v1951 = vmul.f32 %v1947, %v1947
        %v1952 = vmul.f32 %v1948, %v1948
        %v1953 = vmul.f32 %v1949, %v1949
        %v1954 = vmul.f32 %v1950, %v1950
        %1955 = vadd.xlane.f32.xlu0 %v1951
        %v1956 = vpop.xlane.xlu0 %1955
        %1957 = vadd.xlane.f32.xlu0 %v1952
        %v1958 = vpop.xlane.xlu0 %1957
        %1959 = vadd.xlane.f32.xlu0 %v1953
        %v1960 = vpop.xlane.xlu0 %1959
        %1961 = vadd.xlane.f32.xlu0 %v1954
        %v1962 = vpop.xlane.xlu0 %1961
        %v1963 = vmul.f32 %v1956, %v1942
        %v1964 = vmul.f32 %v1958, %v1942
        %v1965 = vmul.f32 %v1960, %v1942
        %v1966 = vmul.f32 %v1962, %v1942
        %v1967 = vadd.f32 %v1963, 1e-12
        %v1968 = vadd.f32 %v1964, 1e-12
        %v1969 = vadd.f32 %v1965, 1e-12
        %v1970 = vadd.f32 %v1966, 1e-12
        %v1971 = vrsqrt.pop %v1967
        %v1972 = vrsqrt.pop %v1968
        %v1973 = vrsqrt.pop %v1969
        %v1974 = vrsqrt.pop %v1970
        %v1975 = vmul.f32 %v1947, %v1971
        %v1976 = vmul.f32 %v1948, %v1972
        %v1977 = vmul.f32 %v1949, %v1973
        %v1978 = vmul.f32 %v1950, %v1974
        %v1980 = vlaneseq
        %v1981 = vshrl.u32 %v1980, 7
        %v1982 = vsub.s32 0, %v1981
        %v1983 = vrot.slane %v1932, %v1982
        %v1985 = vmul.f32 %v1975, %v1983
        %v1986 = vmul.f32 %v1976, %v1983
        %v1987 = vmul.f32 %v1977, %v1983
        %v1988 = vmul.f32 %v1978, %v1983
        %v1990 = vlaneseq
        %v1991 = vshrl.u32 %v1990, 7
        %v1992 = vsub.s32 0, %v1991
        %v1993 = vrot.slane %v1933, %v1992
        %v1995 = vadd.f32 %v1985, %v1993
        %v1996 = vadd.f32 %v1986, %v1993
        %v1997 = vadd.f32 %v1987, %v1993
        %v1998 = vadd.f32 %v1988, %v1993
        %v1999 = vpack.c.bf16 %v1996, %v1995
        %v2000 = vpack.c.bf16 %v1998, %v1997
        %v2001 = vld [vmem:[%s988] sm:$0xff]
        %v2002 = vld [vmem:[%s988 + $0x8] sm:$0xff]
        %v2003 = vld [vmem:[%s988 + $0x10] sm:$0xff]
        %v2004 = vld [vmem:[%s988 + $0x18] sm:$0xff]
        %v2005 = vld [vmem:[%s988 + $0x20] sm:$0xff]
        %v2006 = vld [vmem:[%s988 + $0x28] sm:$0xff]
        %v2007 = vld [vmem:[%s988 + $0x30] sm:$0xff]
        %v2008 = vld [vmem:[%s988 + $0x38] sm:$0xff]
        %v2009 = vld [vmem:[%s988 + $0x40] sm:$0xff]
        %v2010 = vld [vmem:[%s988 + $0x48] sm:$0xff]
        %v2011 = vld [vmem:[%s988 + $0x50] sm:$0xff]
        %v2012 = vld [vmem:[%s988 + $0x58] sm:$0xff]
        %v2013 = vld [vmem:[%s988 + $0x60] sm:$0xff]
        %v2014 = vld [vmem:[%s988 + $0x68] sm:$0xff]
        %v2015 = vld [vmem:[%s988 + $0x70] sm:$0xff]
        %v2016 = vld [vmem:[%s988 + $0x78] sm:$0xff]
        %v2017 = vld [vmem:[%s992] sm:$0x3]
        %v2019 = vlaneseq
        %v2020 = vshrl.u32 %v2019, 7
        %v2021 = vsub.s32 0, %v2020
        %v2022 = vrot.slane %v2017, %v2021
        %v2023 = vlaneseq
        %v2024 = vshrl.u32 %v2023, 7
        %v2025 = vsub.s32 1, %v2024
        %v2026 = vrot.slane %v2017, %v2025
        %v2045 = vunpack.c.l.b16 %v2001
        %v2046 = vunpack.c.h.b16 %v2001
        %v2047 = vunpack.c.l.b16 %v2002
        %v2048 = vunpack.c.h.b16 %v2002
        %v2049 = vunpack.c.l.b16 %v2003
        %v2050 = vunpack.c.h.b16 %v2003
        %v2051 = vunpack.c.l.b16 %v2004
        %v2052 = vunpack.c.h.b16 %v2004
        %v2053 = vunpack.c.l.b16 %v2005
        %v2054 = vunpack.c.h.b16 %v2005
        %v2055 = vunpack.c.l.b16 %v2006
        %v2056 = vunpack.c.h.b16 %v2006
        %v2057 = vunpack.c.l.b16 %v2007
        %v2058 = vunpack.c.h.b16 %v2007
        %v2059 = vunpack.c.l.b16 %v2008
        %v2060 = vunpack.c.h.b16 %v2008
        %v2061 = vunpack.c.l.b16 %v2009
        %v2062 = vunpack.c.h.b16 %v2009
        %v2063 = vunpack.c.l.b16 %v2010
        %v2064 = vunpack.c.h.b16 %v2010
        %v2065 = vunpack.c.l.b16 %v2011
        %v2066 = vunpack.c.h.b16 %v2011
        %v2067 = vunpack.c.l.b16 %v2012
        %v2068 = vunpack.c.h.b16 %v2012
        %v2069 = vunpack.c.l.b16 %v2013
        %v2070 = vunpack.c.h.b16 %v2013
        %v2071 = vunpack.c.l.b16 %v2014
        %v2072 = vunpack.c.h.b16 %v2014
        %v2073 = vunpack.c.l.b16 %v2015
        %v2074 = vunpack.c.h.b16 %v2015
        %v2075 = vunpack.c.l.b16 %v2016
        %v2076 = vunpack.c.h.b16 %v2016
        %v2077 = vpack.c.b16 %v2047, %v2045
        %v2078 = vpack.c.b16 %v2048, %v2046
        %v2079 = vpack.c.b16 %v2051, %v2049
        %v2080 = vpack.c.b16 %v2052, %v2050
        %v2081 = vpack.c.b16 %v2055, %v2053
        %v2082 = vpack.c.b16 %v2056, %v2054
        %v2083 = vpack.c.b16 %v2059, %v2057
        %v2084 = vpack.c.b16 %v2060, %v2058
        %v2085 = vpack.c.b16 %v2063, %v2061
        %v2086 = vpack.c.b16 %v2064, %v2062
        %v2087 = vpack.c.b16 %v2067, %v2065
        %v2088 = vpack.c.b16 %v2068, %v2066
        %v2089 = vpack.c.b16 %v2071, %v2069
        %v2090 = vpack.c.b16 %v2072, %v2070
        %v2091 = vpack.c.b16 %v2075, %v2073
        %v2092 = vpack.c.b16 %v2076, %v2074
        %2109 = vmatprep.subr.bf16.mxu0 %v2092
        %2110 = vmatpush1.bf16.msra.mxu0 %v2091
        %2111 = vmatprep.subr.bf16.mxu0 %v2090
        %2112 = vmatpush1.bf16.msra.mxu0 %v2089
        %2113 = vmatprep.subr.bf16.mxu0 %v2088
        %2114 = vmatpush1.bf16.msra.mxu0 %v2087
        %2115 = vmatprep.subr.bf16.mxu0 %v2086
        %2116 = vmatpush1.bf16.msra.mxu0 %v2085
        %2117 = vmatprep.subr.bf16.mxu0 %v2084
        %2118 = vmatpush1.bf16.msra.mxu0 %v2083
        %2119 = vmatprep.subr.bf16.mxu0 %v2082
        %2120 = vmatpush1.bf16.msra.mxu0 %v2081
        %2121 = vmatprep.subr.bf16.mxu0 %v2080
        %2122 = vmatpush1.bf16.msra.mxu0 %v2079
        %2123 = vmatprep.subr.bf16.mxu0 %v2078
        %2124 = vmatpush1.bf16.msra.mxu0 %v2077
        %2125 = vmatprep.subr.bf16.mxu0 0
        %2126 = vmatpush2.bf16.msra.mxu0 0
        %2127 = vmatprep.subr.bf16.mxu0 0
        %2128 = vmatpush2.bf16.msra.mxu0 0
        %2129 = vmatprep.subr.bf16.mxu0 0
        %2130 = vmatpush2.bf16.msra.mxu0 0
        %2131 = vmatprep.subr.bf16.mxu0 0
        %2132 = vmatpush2.bf16.msra.mxu0 0
        %2133 = vmatprep.subr.bf16.mxu0 0
        %2134 = vmatpush2.bf16.msra.mxu0 0
        %2135 = vmatprep.subr.bf16.mxu0 0
        %2136 = vmatpush2.bf16.msra.mxu0 0
        %2137 = vmatprep.subr.bf16.mxu0 0
        %2138 = vmatpush2.bf16.msra.mxu0 0
        %2139 = vmatprep.subr.bf16.mxu0 0
        %2140 = vmatpush2.bf16.msra.mxu0 0
        %2141 = vmatprep.mubr.bf16.mxu0 0
        %2142 = vmatmul.mubr.bf16.gmra.mxu0 %v1999
        %v2143 = vpop.f32.mrf.mxu0
        %v2144 = vadd.f32 %v2022, %v2143
        %v2145 = vpop.f32.mrf.mxu0
        %v2146 = vadd.f32 %v2026, %v2145
        %v2147 = vpop.f32.mrf.mxu0
        %v2148 = vadd.f32 %v2022, %v2147
        %v2149 = vpop.f32.mrf.mxu0
        %v2150 = vadd.f32 %v2026, %v2149
        %2151 = vmatprep.mubr.bf16.mxu0 0
        %2152 = vmatmul.mubr.bf16.gmra.mxu0 %v2000
        %v2153 = vpop.f32.mrf.mxu0
        %v2154 = vadd.f32 %v2022, %v2153
        %v2155 = vpop.f32.mrf.mxu0
        %v2156 = vadd.f32 %v2026, %v2155
        %v2157 = vpop.f32.mrf.mxu0
        %v2158 = vadd.f32 %v2022, %v2157
        %v2159 = vpop.f32.mrf.mxu0
        %v2160 = vadd.f32 %v2026, %v2159
        %2161 = vdwg.mxu0
        %v2162 = vmul.f32 %v2144, %v2144
        %v2163 = vmul.f32 %v2146, %v2146
        %v2164 = vmul.f32 %v2148, %v2148
        %v2165 = vmul.f32 %v2150, %v2150
        %v2166 = vmul.f32 %v2154, %v2154
        %v2167 = vmul.f32 %v2156, %v2156
        %v2168 = vmul.f32 %v2158, %v2158
        %v2169 = vmul.f32 %v2160, %v2160
        %v2170 = vmul.f32 %v2144, %v2162
        %v2171 = vmul.f32 %v2146, %v2163
        %v2172 = vmul.f32 %v2148, %v2164
        %v2173 = vmul.f32 %v2150, %v2165
        %v2174 = vmul.f32 %v2154, %v2166
        %v2175 = vmul.f32 %v2156, %v2167
        %v2176 = vmul.f32 %v2158, %v2168
        %v2177 = vmul.f32 %v2160, %v2169
        %v2178 = vmul.f32 %v2170, 0.044715
        %v2179 = vmul.f32 %v2171, 0.044715
        %v2180 = vmul.f32 %v2172, 0.044715
        %v2181 = vmul.f32 %v2173, 0.044715
        %v2182 = vmul.f32 %v2174, 0.044715
        %v2183 = vmul.f32 %v2175, 0.044715
        %v2184 = vmul.f32 %v2176, 0.044715
        %v2185 = vmul.f32 %v2177, 0.044715
        %v2186 = vadd.f32 %v2144, %v2178
        %v2187 = vadd.f32 %v2146, %v2179
        %v2188 = vadd.f32 %v2148, %v2180
        %v2189 = vadd.f32 %v2150, %v2181
        %v2190 = vadd.f32 %v2154, %v2182
        %v2191 = vadd.f32 %v2156, %v2183
        %v2192 = vadd.f32 %v2158, %v2184
        %v2193 = vadd.f32 %v2160, %v2185
        %v2194 = vmul.f32 %v2186, 0.7978846
        %v2195 = vmul.f32 %v2187, 0.7978846
        %v2196 = vmul.f32 %v2188, 0.7978846
        %v2197 = vmul.f32 %v2189, 0.7978846
        %v2198 = vmul.f32 %v2190, 0.7978846
        %v2199 = vmul.f32 %v2191, 0.7978846
        %v2200 = vmul.f32 %v2192, 0.7978846
        %v2201 = vmul.f32 %v2193, 0.7978846
        %v2202 = vtanh.pop %v2194
        %v2203 = vtanh.pop %v2195
        %v2204 = vtanh.pop %v2196
        %v2205 = vtanh.pop %v2197
        %v2206 = vtanh.pop %v2198
        %v2207 = vtanh.pop %v2199
        %v2208 = vtanh.pop %v2200
        %v2209 = vtanh.pop %v2201
        %v2210 = vadd.f32 %v2202, 1.0
        %v2211 = vadd.f32 %v2203, 1.0
        %v2212 = vadd.f32 %v2204, 1.0
        %v2213 = vadd.f32 %v2205, 1.0
        %v2214 = vadd.f32 %v2206, 1.0
        %v2215 = vadd.f32 %v2207, 1.0
        %v2216 = vadd.f32 %v2208, 1.0
        %v2217 = vadd.f32 %v2209, 1.0
        %v2218 = vmul.f32 %v2210, 0.5
        %v2219 = vmul.f32 %v2211, 0.5
        %v2220 = vmul.f32 %v2212, 0.5
        %v2221 = vmul.f32 %v2213, 0.5
        %v2222 = vmul.f32 %v2214, 0.5
        %v2223 = vmul.f32 %v2215, 0.5
        %v2224 = vmul.f32 %v2216, 0.5
        %v2225 = vmul.f32 %v2217, 0.5
        %v2226 = vmul.f32 %v2144, %v2218
        %v2227 = vmul.f32 %v2146, %v2219
        %v2228 = vmul.f32 %v2148, %v2220
        %v2229 = vmul.f32 %v2150, %v2221
        %v2230 = vmul.f32 %v2154, %v2222
        %v2231 = vmul.f32 %v2156, %v2223
        %v2232 = vmul.f32 %v2158, %v2224
        %v2233 = vmul.f32 %v2160, %v2225
        %v2234 = vpack.c.bf16 %v2228, %v2226
        %v2235 = vpack.c.bf16 %v2229, %v2227
        %v2236 = vpack.c.bf16 %v2232, %v2230
        %v2237 = vpack.c.bf16 %v2233, %v2231
        %v2238 = vld [vmem:[%s854] sm:$0xf]
        %v2239 = vld [vmem:[%s854 + $0x4] sm:$0xf]
        %v2240 = vld [vmem:[%s854 + $0x8] sm:$0xf]
        %v2241 = vld [vmem:[%s854 + $0xc] sm:$0xf]
        %v2242 = vld [vmem:[%s854 + $0x10] sm:$0xf]
        %v2243 = vld [vmem:[%s854 + $0x14] sm:$0xf]
        %v2244 = vld [vmem:[%s854 + $0x18] sm:$0xf]
        %v2245 = vld [vmem:[%s854 + $0x1c] sm:$0xf]
        %v2246 = vld [vmem:[%s854 + $0x20] sm:$0xf]
        %v2247 = vld [vmem:[%s854 + $0x24] sm:$0xf]
        %v2248 = vld [vmem:[%s854 + $0x28] sm:$0xf]
        %v2249 = vld [vmem:[%s854 + $0x2c] sm:$0xf]
        %v2250 = vld [vmem:[%s854 + $0x30] sm:$0xf]
        %v2251 = vld [vmem:[%s854 + $0x34] sm:$0xf]
        %v2252 = vld [vmem:[%s854 + $0x38] sm:$0xf]
        %v2253 = vld [vmem:[%s854 + $0x3c] sm:$0xf]
        %v2254 = vld [vmem:[%s854 + $0x40] sm:$0xf]
        %v2255 = vld [vmem:[%s854 + $0x44] sm:$0xf]
        %v2256 = vld [vmem:[%s854 + $0x48] sm:$0xf]
        %v2257 = vld [vmem:[%s854 + $0x4c] sm:$0xf]
        %v2258 = vld [vmem:[%s854 + $0x50] sm:$0xf]
        %v2259 = vld [vmem:[%s854 + $0x54] sm:$0xf]
        %v2260 = vld [vmem:[%s854 + $0x58] sm:$0xf]
        %v2261 = vld [vmem:[%s854 + $0x5c] sm:$0xf]
        %v2262 = vld [vmem:[%s854 + $0x60] sm:$0xf]
        %v2263 = vld [vmem:[%s854 + $0x64] sm:$0xf]
        %v2264 = vld [vmem:[%s854 + $0x68] sm:$0xf]
        %v2265 = vld [vmem:[%s854 + $0x6c] sm:$0xf]
        %v2266 = vld [vmem:[%s854 + $0x70] sm:$0xf]
        %v2267 = vld [vmem:[%s854 + $0x74] sm:$0xf]
        %v2268 = vld [vmem:[%s854 + $0x78] sm:$0xf]
        %v2269 = vld [vmem:[%s854 + $0x7c] sm:$0xf]
        %v2270 = vld [vmem:[%s995] sm:$0x1]
        %v2272 = vlaneseq
        %v2273 = vshrl.u32 %v2272, 7
        %v2274 = vsub.s32 0, %v2273
        %v2275 = vrot.slane %v2270, %v2274
        %v2309 = vunpack.c.l.b16 %v2238
        %v2310 = vunpack.c.l.b16 %v2239
        %v2311 = vunpack.c.l.b16 %v2240
        %v2312 = vunpack.c.l.b16 %v2241
        %v2313 = vunpack.c.l.b16 %v2242
        %v2314 = vunpack.c.l.b16 %v2243
        %v2315 = vunpack.c.l.b16 %v2244
        %v2316 = vunpack.c.l.b16 %v2245
        %v2317 = vunpack.c.l.b16 %v2246
        %v2318 = vunpack.c.l.b16 %v2247
        %v2319 = vunpack.c.l.b16 %v2248
        %v2320 = vunpack.c.l.b16 %v2249
        %v2321 = vunpack.c.l.b16 %v2250
        %v2322 = vunpack.c.l.b16 %v2251
        %v2323 = vunpack.c.l.b16 %v2252
        %v2324 = vunpack.c.l.b16 %v2253
        %v2325 = vunpack.c.l.b16 %v2254
        %v2326 = vunpack.c.l.b16 %v2255
        %v2327 = vunpack.c.l.b16 %v2256
        %v2328 = vunpack.c.l.b16 %v2257
        %v2329 = vunpack.c.l.b16 %v2258
        %v2330 = vunpack.c.l.b16 %v2259
        %v2331 = vunpack.c.l.b16 %v2260
        %v2332 = vunpack.c.l.b16 %v2261
        %v2333 = vunpack.c.l.b16 %v2262
        %v2334 = vunpack.c.l.b16 %v2263
        %v2335 = vunpack.c.l.b16 %v2264
        %v2336 = vunpack.c.l.b16 %v2265
        %v2337 = vunpack.c.l.b16 %v2266
        %v2338 = vunpack.c.l.b16 %v2267
        %v2339 = vunpack.c.l.b16 %v2268
        %v2340 = vunpack.c.l.b16 %v2269
        %v2341 = vpack.c.b16 %v2310, %v2309
        %v2342 = vpack.c.b16 %v2312, %v2311
        %v2343 = vpack.c.b16 %v2314, %v2313
        %v2344 = vpack.c.b16 %v2316, %v2315
        %v2345 = vpack.c.b16 %v2318, %v2317
        %v2346 = vpack.c.b16 %v2320, %v2319
        %v2347 = vpack.c.b16 %v2322, %v2321
        %v2348 = vpack.c.b16 %v2324, %v2323
        %v2349 = vpack.c.b16 %v2326, %v2325
        %v2350 = vpack.c.b16 %v2328, %v2327
        %v2351 = vpack.c.b16 %v2330, %v2329
        %v2352 = vpack.c.b16 %v2332, %v2331
        %v2353 = vpack.c.b16 %v2334, %v2333
        %v2354 = vpack.c.b16 %v2336, %v2335
        %v2355 = vpack.c.b16 %v2338, %v2337
        %v2356 = vpack.c.b16 %v2340, %v2339
        %2373 = vmatprep.subr.bf16.mxu0 0
        %2374 = vmatpush1.bf16.msra.mxu0 %v2348
        %2375 = vmatprep.subr.bf16.mxu0 0
        %2376 = vmatpush1.bf16.msra.mxu0 %v2347
        %2377 = vmatprep.subr.bf16.mxu0 0
        %2378 = vmatpush1.bf16.msra.mxu0 %v2346
        %2379 = vmatprep.subr.bf16.mxu0 0
        %2380 = vmatpush1.bf16.msra.mxu0 %v2345
        %2381 = vmatprep.subr.bf16.mxu0 0
        %2382 = vmatpush1.bf16.msra.mxu0 %v2344
        %2383 = vmatprep.subr.bf16.mxu0 0
        %2384 = vmatpush1.bf16.msra.mxu0 %v2343
        %2385 = vmatprep.subr.bf16.mxu0 0
        %2386 = vmatpush1.bf16.msra.mxu0 %v2342
        %2387 = vmatprep.subr.bf16.mxu0 0
        %2388 = vmatpush1.bf16.msra.mxu0 %v2341
        %2389 = vmatprep.subr.bf16.mxu0 0
        %2390 = vmatpush2.bf16.msra.mxu0 %v2356
        %2391 = vmatprep.subr.bf16.mxu0 0
        %2392 = vmatpush2.bf16.msra.mxu0 %v2355
        %2393 = vmatprep.subr.bf16.mxu0 0
        %2394 = vmatpush2.bf16.msra.mxu0 %v2354
        %2395 = vmatprep.subr.bf16.mxu0 0
        %2396 = vmatpush2.bf16.msra.mxu0 %v2353
        %2397 = vmatprep.subr.bf16.mxu0 0
        %2398 = vmatpush2.bf16.msra.mxu0 %v2352
        %2399 = vmatprep.subr.bf16.mxu0 0
        %2400 = vmatpush2.bf16.msra.mxu0 %v2351
        %2401 = vmatprep.subr.bf16.mxu0 0
        %2402 = vmatpush2.bf16.msra.mxu0 %v2350
        %2403 = vmatprep.subr.bf16.mxu0 0
        %2404 = vmatpush2.bf16.msra.mxu0 %v2349
        %2405 = vmatprep.mubr.bf16.mxu0 %v2235
        %2406 = vmatmul.mubr.bf16.gmra.mxu0 %v2234
        %v2407 = vpop.f32.mrf.mxu0
        %v2408 = vadd.f32 %v2275, %v2407
        %v2409 = vpop.f32.mrf.mxu0
        %v2410 = vpop.f32.mrf.mxu0
        %v2411 = vadd.f32 %v2275, %v2410
        %v2412 = vpop.f32.mrf.mxu0
        %2413 = vmatprep.mubr.bf16.mxu0 %v2237
        %2414 = vmatmul.mubr.bf16.gmra.mxu0 %v2236
        %v2415 = vpop.f32.mrf.mxu0
        %v2416 = vadd.f32 %v2275, %v2415
        %v2417 = vpop.f32.mrf.mxu0
        %v2418 = vpop.f32.mrf.mxu0
        %v2419 = vadd.f32 %v2275, %v2418
        %v2420 = vpop.f32.mrf.mxu0
        %2421 = vdwg.mxu0
        %v2422 = vadd.f32 %v1995, %v2408
        %v2423 = vadd.f32 %v1996, %v2411
        %v2424 = vadd.f32 %v1997, %v2416
        %v2425 = vadd.f32 %v1998, %v2419
        %v2426 = vld [vmem:[%s998] sm:$0x1]
        %v2427 = vld [vmem:[%s1001] sm:$0x1]
        %2428 = vadd.xlane.f32.xlu0 %v2422
        %v2429 = vpop.xlane.xlu0 %2428
        %2430 = vadd.xlane.f32.xlu0 %v2423
        %v2431 = vpop.xlane.xlu0 %2430
        %2432 = vadd.xlane.f32.xlu0 %v2424
        %v2433 = vpop.xlane.xlu0 %2432
        %2434 = vadd.xlane.f32.xlu0 %v2425
        %v2435 = vpop.xlane.xlu0 %2434
        %v2436 = vmul.f32 %v2429, %v1942
        %v2437 = vmul.f32 %v2431, %v1942
        %v2438 = vmul.f32 %v2433, %v1942
        %v2439 = vmul.f32 %v2435, %v1942
        %v2440 = vsub.f32 %v2422, %v2436
        %v2441 = vsub.f32 %v2423, %v2437
        %v2442 = vsub.f32 %v2424, %v2438
        %v2443 = vsub.f32 %v2425, %v2439
        %v2444 = vmul.f32 %v2440, %v2440
        %v2445 = vmul.f32 %v2441, %v2441
        %v2446 = vmul.f32 %v2442, %v2442
        %v2447 = vmul.f32 %v2443, %v2443
        %2448 = vadd.xlane.f32.xlu0 %v2444
        %v2449 = vpop.xlane.xlu0 %2448
        %2450 = vadd.xlane.f32.xlu0 %v2445
        %v2451 = vpop.xlane.xlu0 %2450
        %2452 = vadd.xlane.f32.xlu0 %v2446
        %v2453 = vpop.xlane.xlu0 %2452
        %2454 = vadd.xlane.f32.xlu0 %v2447
        %v2455 = vpop.xlane.xlu0 %2454
        %v2456 = vmul.f32 %v2449, %v1942
        %v2457 = vmul.f32 %v2451, %v1942
        %v2458 = vmul.f32 %v2453, %v1942
        %v2459 = vmul.f32 %v2455, %v1942
        %v2460 = vadd.f32 %v2456, 1e-12
        %v2461 = vadd.f32 %v2457, 1e-12
        %v2462 = vadd.f32 %v2458, 1e-12
        %v2463 = vadd.f32 %v2459, 1e-12
        %v2464 = vrsqrt.pop %v2460
        %v2465 = vrsqrt.pop %v2461
        %v2466 = vrsqrt.pop %v2462
        %v2467 = vrsqrt.pop %v2463
        %v2468 = vmul.f32 %v2440, %v2464
        %v2469 = vmul.f32 %v2441, %v2465
        %v2470 = vmul.f32 %v2442, %v2466
        %v2471 = vmul.f32 %v2443, %v2467
        %v2473 = vlaneseq
        %v2474 = vshrl.u32 %v2473, 7
        %v2475 = vsub.s32 0, %v2474
        %v2476 = vrot.slane %v2426, %v2475
        %v2478 = vmul.f32 %v2468, %v2476
        %v2479 = vmul.f32 %v2469, %v2476
        %v2480 = vmul.f32 %v2470, %v2476
        %v2481 = vmul.f32 %v2471, %v2476
        %v2483 = vlaneseq
        %v2484 = vshrl.u32 %v2483, 7
        %v2485 = vsub.s32 0, %v2484
        %v2486 = vrot.slane %v2427, %v2485
        %v2488 = vadd.f32 %v2478, %v2486
        %v2489 = vadd.f32 %v2479, %v2486
        %v2490 = vadd.f32 %v2480, %v2486
        %v2491 = vadd.f32 %v2481, %v2486
        %2492 = vst [vmem:[#allocation2] sm:$0xff] %v2488
        %2493 = vst [vmem:[#allocation2 + $0x8] sm:$0xff] %v2489
        %2494 = vst [vmem:[#allocation2 + $0x10] sm:$0xff] %v2490
        %2495 = vst [vmem:[#allocation2 + $0x18] sm:$0xff] %v2491
        %v2497 = vrot.slane %v2490, 7
        %vm2499 = vcmask 1040384
        %v2500 = vsel %vm2499, %v2488, %v2497
        %p2501 = scmp.eq.s32.totalorder %s44, 1
        // Predicated region
        $region133: #{bert_classifier_forward.1} parent=123 // pred_check
          %p2502 = pneg %p2501
        $region134: #{bert_classifier_forward.1} parent=123 // pred_check_branch
          %2504 = sbr.rel (%p2502) target = $region136
        $region135: #{bert_classifier_forward.1} parent=123 // pred_region
          %2505 = vst [vmem:[#allocation3] sm:$0x3] %v2500
        $region136: #{bert_classifier_forward.1} parent=123 // pred_fallthru
          _
        %p2506 = scmp.eq.s32.totalorder %s44, 2
        // Predicated region
        $region137: #{bert_classifier_forward.1} parent=123 // pred_check
          %p2507 = pneg %p2506
        $region138: #{bert_classifier_forward.1} parent=123 // pred_check_branch
          %2509 = sbr.rel (%p2507) target = $region140
        $region139: #{bert_classifier_forward.1} parent=123 // pred_region
          %2510 = vst [vmem:[#allocation3 + $0x2] sm:$0x3] %v2500
        $region140: #{bert_classifier_forward.1} parent=123 // pred_fallthru
          _
        %p2511 = scmp.eq.s32.totalorder %s44, 3
        // Predicated region
        $region141: #{bert_classifier_forward.1} parent=123 // pred_check
          %p2512 = pneg %p2511
        $region142: #{bert_classifier_forward.1} parent=123 // pred_check_branch
          %2514 = sbr.rel (%p2512) target = $region144
        $region143: #{bert_classifier_forward.1} parent=123 // pred_region
          %2515 = vst [vmem:[#allocation3 + $0x4] sm:$0x3] %v2500
          %v2516 = vld [vmem:[#allocation3] sm:$0x3f]
          %v2518 = vcombine.high %v2516, %v2516
          %v2520 = vunpack.c.l.s4 1983009808
          %v2521 = vunpack.c.0.s8 %v2520
          %v2522 = vlaneseq
          %v2523 = vshrl.u32 %v2522, 7
          %v2524 = vsub.s32 %v2521, %v2523
          %v2525 = vrot.slane %v2516, %v2524
          %v2527 = vunpack.c.l.s4 1983009808
          %v2528 = vunpack.c.0.s8 %v2527
          %v2529 = vlaneseq
          %v2530 = vshrl.u32 %v2529, 7
          %v2531 = vsub.s32 %v2528, %v2530
          %v2532 = vrot.slane %v2518, %v2531
          %v2533 = vcombine.high %v2525, %v2525
          %v2537 = vpack.c.bf16 %v2525, %v2525
          %v2538 = vpack.c.bf16 %v2533, %v2533
          %v2539 = vpack.c.bf16 %v2532, %v2532
          %v2540 = vld [vmem:[%s16] sm:$0xf]
          %v2541 = vld [vmem:[%s16 + $0x4] sm:$0xf]
          %v2542 = vld [vmem:[%s16 + $0x8] sm:$0xf]
          %v2543 = vld [vmem:[%s16 + $0xc] sm:$0xf]
          %v2544 = vld [vmem:[%s16 + $0x10] sm:$0xf]
          %v2545 = vld [vmem:[%s16 + $0x14] sm:$0xf]
          %v2546 = vld [vmem:[%s16 + $0x18] sm:$0xf]
          %v2547 = vld [vmem:[%s16 + $0x1c] sm:$0xf]
          %v2548 = vld [vmem:[%s16 + $0x20] sm:$0xf]
          %v2549 = vld [vmem:[%s16 + $0x24] sm:$0xf]
          %v2550 = vld [vmem:[%s16 + $0x28] sm:$0xf]
          %v2551 = vld [vmem:[%s16 + $0x2c] sm:$0xf]
          %v2552 = vld [vmem:[%s16 + $0x30] sm:$0xf]
          %v2553 = vld [vmem:[%s16 + $0x34] sm:$0xf]
          %v2554 = vld [vmem:[%s16 + $0x38] sm:$0xf]
          %v2555 = vld [vmem:[%s16 + $0x3c] sm:$0xf]
          %v2556 = vld [vmem:[%s16 + $0x40] sm:$0xf]
          %v2557 = vld [vmem:[%s16 + $0x44] sm:$0xf]
          %v2558 = vld [vmem:[%s16 + $0x48] sm:$0xf]
          %v2559 = vld [vmem:[%s16 + $0x4c] sm:$0xf]
          %v2560 = vld [vmem:[%s16 + $0x50] sm:$0xf]
          %v2561 = vld [vmem:[%s16 + $0x54] sm:$0xf]
          %v2562 = vld [vmem:[%s16 + $0x58] sm:$0xf]
          %v2563 = vld [vmem:[%s16 + $0x5c] sm:$0xf]
          %v2564 = vld [vmem:[%s16 + $0x60] sm:$0xf]
          %v2565 = vld [vmem:[%s16 + $0x64] sm:$0xf]
          %v2566 = vld [vmem:[%s16 + $0x68] sm:$0xf]
          %v2567 = vld [vmem:[%s16 + $0x6c] sm:$0xf]
          %v2568 = vld [vmem:[%s16 + $0x70] sm:$0xf]
          %v2569 = vld [vmem:[%s16 + $0x74] sm:$0xf]
          %v2570 = vld [vmem:[%s16 + $0x78] sm:$0xf]
          %v2571 = vld [vmem:[%s16 + $0x7c] sm:$0xf]
          %v2572 = vld [vmem:[%s16 + $0x80] sm:$0xf]
          %v2573 = vld [vmem:[%s16 + $0x84] sm:$0xf]
          %v2574 = vld [vmem:[%s16 + $0x88] sm:$0xf]
          %v2575 = vld [vmem:[%s16 + $0x8c] sm:$0xf]
          %v2576 = vld [vmem:[%s16 + $0x90] sm:$0xf]
          %v2577 = vld [vmem:[%s16 + $0x94] sm:$0xf]
          %v2578 = vld [vmem:[%s16 + $0x98] sm:$0xf]
          %v2579 = vld [vmem:[%s16 + $0x9c] sm:$0xf]
          %v2580 = vld [vmem:[%s16 + $0xa0] sm:$0xf]
          %v2581 = vld [vmem:[%s16 + $0xa4] sm:$0xf]
          %v2582 = vld [vmem:[%s16 + $0xa8] sm:$0xf]
          %v2583 = vld [vmem:[%s16 + $0xac] sm:$0xf]
          %v2584 = vld [vmem:[%s16 + $0xb0] sm:$0xf]
          %v2585 = vld [vmem:[%s16 + $0xb4] sm:$0xf]
          %v2586 = vld [vmem:[%s16 + $0xb8] sm:$0xf]
          %v2587 = vld [vmem:[%s16 + $0xbc] sm:$0xf]
          %v2588 = vld [vmem:[%s17] sm:$0x1]
          %v2590 = vlaneseq
          %v2591 = vshrl.u32 %v2590, 7
          %v2592 = vsub.s32 0, %v2591
          %v2593 = vrot.slane %v2588, %v2592
          %v2643 = vunpack.c.l.b16 %v2540
          %v2644 = vunpack.c.l.b16 %v2541
          %v2645 = vunpack.c.l.b16 %v2542
          %v2646 = vunpack.c.l.b16 %v2543
          %v2647 = vunpack.c.l.b16 %v2544
          %v2648 = vunpack.c.l.b16 %v2545
          %v2649 = vunpack.c.l.b16 %v2546
          %v2650 = vunpack.c.l.b16 %v2547
          %v2651 = vunpack.c.l.b16 %v2548
          %v2652 = vunpack.c.l.b16 %v2549
          %v2653 = vunpack.c.l.b16 %v2550
          %v2654 = vunpack.c.l.b16 %v2551
          %v2655 = vunpack.c.l.b16 %v2552
          %v2656 = vunpack.c.l.b16 %v2553
          %v2657 = vunpack.c.l.b16 %v2554
          %v2658 = vunpack.c.l.b16 %v2555
          %v2659 = vunpack.c.l.b16 %v2556
          %v2660 = vunpack.c.l.b16 %v2557
          %v2661 = vunpack.c.l.b16 %v2558
          %v2662 = vunpack.c.l.b16 %v2559
          %v2663 = vunpack.c.l.b16 %v2560
          %v2664 = vunpack.c.l.b16 %v2561
          %v2665 = vunpack.c.l.b16 %v2562
          %v2666 = vunpack.c.l.b16 %v2563
          %v2667 = vunpack.c.l.b16 %v2564
          %v2668 = vunpack.c.l.b16 %v2565
          %v2669 = vunpack.c.l.b16 %v2566
          %v2670 = vunpack.c.l.b16 %v2567
          %v2671 = vunpack.c.l.b16 %v2568
          %v2672 = vunpack.c.l.b16 %v2569
          %v2673 = vunpack.c.l.b16 %v2570
          %v2674 = vunpack.c.l.b16 %v2571
          %v2675 = vunpack.c.l.b16 %v2572
          %v2676 = vunpack.c.l.b16 %v2573
          %v2677 = vunpack.c.l.b16 %v2574
          %v2678 = vunpack.c.l.b16 %v2575
          %v2679 = vunpack.c.l.b16 %v2576
          %v2680 = vunpack.c.l.b16 %v2577
          %v2681 = vunpack.c.l.b16 %v2578
          %v2682 = vunpack.c.l.b16 %v2579
          %v2683 = vunpack.c.l.b16 %v2580
          %v2684 = vunpack.c.l.b16 %v2581
          %v2685 = vunpack.c.l.b16 %v2582
          %v2686 = vunpack.c.l.b16 %v2583
          %v2687 = vunpack.c.l.b16 %v2584
          %v2688 = vunpack.c.l.b16 %v2585
          %v2689 = vunpack.c.l.b16 %v2586
          %v2690 = vunpack.c.l.b16 %v2587
          %v2691 = vpack.c.b16 %v2644, %v2643
          %v2692 = vpack.c.b16 %v2646, %v2645
          %v2693 = vpack.c.b16 %v2648, %v2647
          %v2694 = vpack.c.b16 %v2650, %v2649
          %v2695 = vpack.c.b16 %v2652, %v2651
          %v2696 = vpack.c.b16 %v2654, %v2653
          %v2697 = vpack.c.b16 %v2656, %v2655
          %v2698 = vpack.c.b16 %v2658, %v2657
          %v2699 = vpack.c.b16 %v2660, %v2659
          %v2700 = vpack.c.b16 %v2662, %v2661
          %v2701 = vpack.c.b16 %v2664, %v2663
          %v2702 = vpack.c.b16 %v2666, %v2665
          %v2703 = vpack.c.b16 %v2668, %v2667
          %v2704 = vpack.c.b16 %v2670, %v2669
          %v2705 = vpack.c.b16 %v2672, %v2671
          %v2706 = vpack.c.b16 %v2674, %v2673
          %v2707 = vpack.c.b16 %v2676, %v2675
          %v2708 = vpack.c.b16 %v2678, %v2677
          %v2709 = vpack.c.b16 %v2680, %v2679
          %v2710 = vpack.c.b16 %v2682, %v2681
          %v2711 = vpack.c.b16 %v2684, %v2683
          %v2712 = vpack.c.b16 %v2686, %v2685
          %v2713 = vpack.c.b16 %v2688, %v2687
          %v2714 = vpack.c.b16 %v2690, %v2689
          %2739 = vmatprep.subr.bf16.mxu0 0
          %2740 = vmatpush1.bf16.msra.mxu0 %v2698
          %2741 = vmatprep.subr.bf16.mxu0 0
          %2742 = vmatpush1.bf16.msra.mxu0 %v2697
          %2743 = vmatprep.subr.bf16.mxu0 0
          %2744 = vmatpush1.bf16.msra.mxu0 %v2696
          %2745 = vmatprep.subr.bf16.mxu0 0
          %2746 = vmatpush1.bf16.msra.mxu0 %v2695
          %2747 = vmatprep.subr.bf16.mxu0 0
          %2748 = vmatpush1.bf16.msra.mxu0 %v2694
          %2749 = vmatprep.subr.bf16.mxu0 0
          %2750 = vmatpush1.bf16.msra.mxu0 %v2693
          %2751 = vmatprep.subr.bf16.mxu0 0
          %2752 = vmatpush1.bf16.msra.mxu0 %v2692
          %2753 = vmatprep.subr.bf16.mxu0 0
          %2754 = vmatpush1.bf16.msra.mxu0 %v2691
          %2755 = vmatprep.subr.bf16.mxu0 0
          %2756 = vmatpush2.bf16.msra.mxu0 %v2706
          %2757 = vmatprep.subr.bf16.mxu0 0
          %2758 = vmatpush2.bf16.msra.mxu0 %v2705
          %2759 = vmatprep.subr.bf16.mxu0 0
          %2760 = vmatpush2.bf16.msra.mxu0 %v2704
          %2761 = vmatprep.subr.bf16.mxu0 0
          %2762 = vmatpush2.bf16.msra.mxu0 %v2703
          %2763 = vmatprep.subr.bf16.mxu0 0
          %2764 = vmatpush2.bf16.msra.mxu0 %v2702
          %2765 = vmatprep.subr.bf16.mxu0 0
          %2766 = vmatpush2.bf16.msra.mxu0 %v2701
          %2767 = vmatprep.subr.bf16.mxu0 0
          %2768 = vmatpush2.bf16.msra.mxu0 %v2700
          %2769 = vmatprep.subr.bf16.mxu0 0
          %2770 = vmatpush2.bf16.msra.mxu0 %v2699
          %2771 = vmatprep.mubr.bf16.mxu0 %v2538
          %2772 = vmatmul.mubr.bf16.gmra.mxu0 %v2537
          %v2773 = vpop.f32.mrf.mxu0
          %v2774 = vadd.f32 %v2593, %v2773
          %v2775 = vpop.f32.mrf.mxu0
          %v2776 = vpop.f32.mrf.mxu0
          %v2777 = vpop.f32.mrf.mxu0
          %2778 = vdwg.mxu0
          %2779 = vmatprep.subr.bf16.mxu0 0
          %2780 = vmatpush1.bf16.msra.mxu0 %v2714
          %2781 = vmatprep.subr.bf16.mxu0 0
          %2782 = vmatpush1.bf16.msra.mxu0 %v2713
          %2783 = vmatprep.subr.bf16.mxu0 0
          %2784 = vmatpush1.bf16.msra.mxu0 %v2712
          %2785 = vmatprep.subr.bf16.mxu0 0
          %2786 = vmatpush1.bf16.msra.mxu0 %v2711
          %2787 = vmatprep.subr.bf16.mxu0 0
          %2788 = vmatpush1.bf16.msra.mxu0 %v2710
          %2789 = vmatprep.subr.bf16.mxu0 0
          %2790 = vmatpush1.bf16.msra.mxu0 %v2709
          %2791 = vmatprep.subr.bf16.mxu0 0
          %2792 = vmatpush1.bf16.msra.mxu0 %v2708
          %2793 = vmatprep.subr.bf16.mxu0 0
          %2794 = vmatpush1.bf16.msra.mxu0 %v2707
          %2795 = vmatprep.subr.bf16.mxu0 0
          %2796 = vmatpush2.bf16.msra.mxu0 0
          %2797 = vmatprep.subr.bf16.mxu0 0
          %2798 = vmatpush2.bf16.msra.mxu0 0
          %2799 = vmatprep.subr.bf16.mxu0 0
          %2800 = vmatpush2.bf16.msra.mxu0 0
          %2801 = vmatprep.subr.bf16.mxu0 0
          %2802 = vmatpush2.bf16.msra.mxu0 0
          %2803 = vmatprep.subr.bf16.mxu0 0
          %2804 = vmatpush2.bf16.msra.mxu0 0
          %2805 = vmatprep.subr.bf16.mxu0 0
          %2806 = vmatpush2.bf16.msra.mxu0 0
          %2807 = vmatprep.subr.bf16.mxu0 0
          %2808 = vmatpush2.bf16.msra.mxu0 0
          %2809 = vmatprep.subr.bf16.mxu0 0
          %2810 = vmatpush2.bf16.msra.mxu0 0
          %2811 = vmatprep.mubr.bf16.mxu0 0
          %2812 = vmatmul.mubr.bf16.gmra.mxu0 %v2539
          %v2813 = vpop.f32.mrf.mxu0
          %v2814 = vadd.f32 %v2774, %v2813
          %v2815 = vpop.f32.mrf.mxu0
          %v2816 = vpop.f32.mrf.mxu0
          %v2817 = vpop.f32.mrf.mxu0
          %2818 = vdwg.mxu0
          %v2819 = vld [vmem:[%s18] sm:$0x1]
          %v2821 = vlaneseq
          %v2822 = vshrl.u32 %v2821, 7
          %v2823 = vsub.s32 0, %v2822
          %v2824 = vrot.slane %v2819, %v2823
          %v2826 = vmul.f32 %v2814, %v2824
          %v2827 = vld [vmem:[%s19] sm:$0x1]
          %v2829 = vlaneseq
          %v2830 = vshrl.u32 %v2829, 7
          %v2831 = vsub.s32 0, %v2830
          %v2832 = vrot.slane %v2827, %v2831
          %v2834 = vadd.f32 %v2826, %v2832
          %v2835 = vmax.f32 %v2834, 0.0
          %v2836 = vpack.c.bf16 %v2835, %v2835
          %v2837 = vld [vmem:[%s20] sm:$0xf]
          %v2838 = vld [vmem:[%s20 + $0x4] sm:$0xf]
          %v2839 = vld [vmem:[%s20 + $0x8] sm:$0xf]
          %v2840 = vld [vmem:[%s20 + $0xc] sm:$0xf]
          %v2841 = vld [vmem:[%s20 + $0x10] sm:$0xf]
          %v2842 = vld [vmem:[%s20 + $0x14] sm:$0xf]
          %v2843 = vld [vmem:[%s20 + $0x18] sm:$0xf]
          %v2844 = vld [vmem:[%s20 + $0x1c] sm:$0xf]
          %v2845 = vld [vmem:[%s20 + $0x20] sm:$0xf]
          %v2846 = vld [vmem:[%s20 + $0x24] sm:$0xf]
          %v2847 = vld [vmem:[%s20 + $0x28] sm:$0xf]
          %v2848 = vld [vmem:[%s20 + $0x2c] sm:$0xf]
          %v2849 = vld [vmem:[%s20 + $0x30] sm:$0xf]
          %v2850 = vld [vmem:[%s20 + $0x34] sm:$0xf]
          %v2851 = vld [vmem:[%s20 + $0x38] sm:$0xf]
          %v2852 = vld [vmem:[%s20 + $0x3c] sm:$0xf]
          %v2853 = vld [vmem:[%s21] sm:$0x1]
          %v2855 = vlaneseq
          %v2856 = vshrl.u32 %v2855, 7
          %v2857 = vsub.s32 0, %v2856
          %v2858 = vrot.slane %v2853, %v2857
          %v2876 = vunpack.c.l.b16 %v2837
          %v2877 = vunpack.c.l.b16 %v2838
          %v2878 = vunpack.c.l.b16 %v2839
          %v2879 = vunpack.c.l.b16 %v2840
          %v2880 = vunpack.c.l.b16 %v2841
          %v2881 = vunpack.c.l.b16 %v2842
          %v2882 = vunpack.c.l.b16 %v2843
          %v2883 = vunpack.c.l.b16 %v2844
          %v2884 = vunpack.c.l.b16 %v2845
          %v2885 = vunpack.c.l.b16 %v2846
          %v2886 = vunpack.c.l.b16 %v2847
          %v2887 = vunpack.c.l.b16 %v2848
          %v2888 = vunpack.c.l.b16 %v2849
          %v2889 = vunpack.c.l.b16 %v2850
          %v2890 = vunpack.c.l.b16 %v2851
          %v2891 = vunpack.c.l.b16 %v2852
          %v2892 = vpack.c.b16 %v2877, %v2876
          %v2893 = vpack.c.b16 %v2879, %v2878
          %v2894 = vpack.c.b16 %v2881, %v2880
          %v2895 = vpack.c.b16 %v2883, %v2882
          %v2896 = vpack.c.b16 %v2885, %v2884
          %v2897 = vpack.c.b16 %v2887, %v2886
          %v2898 = vpack.c.b16 %v2889, %v2888
          %v2899 = vpack.c.b16 %v2891, %v2890
          %2908 = vmatprep.subr.bf16.mxu0 0
          %2909 = vmatpush1.bf16.msra.mxu0 %v2899
          %2910 = vmatprep.subr.bf16.mxu0 0
          %2911 = vmatpush1.bf16.msra.mxu0 %v2898
          %2912 = vmatprep.subr.bf16.mxu0 0
          %2913 = vmatpush1.bf16.msra.mxu0 %v2897
          %2914 = vmatprep.subr.bf16.mxu0 0
          %2915 = vmatpush1.bf16.msra.mxu0 %v2896
          %2916 = vmatprep.subr.bf16.mxu0 0
          %2917 = vmatpush1.bf16.msra.mxu0 %v2895
          %2918 = vmatprep.subr.bf16.mxu0 0
          %2919 = vmatpush1.bf16.msra.mxu0 %v2894
          %2920 = vmatprep.subr.bf16.mxu0 0
          %2921 = vmatpush1.bf16.msra.mxu0 %v2893
          %2922 = vmatprep.subr.bf16.mxu0 0
          %2923 = vmatpush1.bf16.msra.mxu0 %v2892
          %2924 = vmatprep.subr.bf16.mxu0 0
          %2925 = vmatpush2.bf16.msra.mxu0 0
          %2926 = vmatprep.subr.bf16.mxu0 0
          %2927 = vmatpush2.bf16.msra.mxu0 0
          %2928 = vmatprep.subr.bf16.mxu0 0
          %2929 = vmatpush2.bf16.msra.mxu0 0
          %2930 = vmatprep.subr.bf16.mxu0 0
          %2931 = vmatpush2.bf16.msra.mxu0 0
          %2932 = vmatprep.subr.bf16.mxu0 0
          %2933 = vmatpush2.bf16.msra.mxu0 0
          %2934 = vmatprep.subr.bf16.mxu0 0
          %2935 = vmatpush2.bf16.msra.mxu0 0
          %2936 = vmatprep.subr.bf16.mxu0 0
          %2937 = vmatpush2.bf16.msra.mxu0 0
          %2938 = vmatprep.subr.bf16.mxu0 0
          %2939 = vmatpush2.bf16.msra.mxu0 0
          %2940 = vmatprep.mubr.bf16.mxu0 0
          %2941 = vmatmul.mubr.bf16.gmra.mxu0 %v2836
          %v2942 = vpop.f32.mrf.mxu0
          %v2943 = vadd.f32 %v2858, %v2942
          %v2944 = vpop.f32.mrf.mxu0
          %v2945 = vpop.f32.mrf.mxu0
          %v2946 = vpop.f32.mrf.mxu0
          %2947 = vdwg.mxu0
          %v2948 = vld [vmem:[%s22] sm:$0x1]
          %v2950 = vlaneseq
          %v2951 = vshrl.u32 %v2950, 7
          %v2952 = vsub.s32 0, %v2951
          %v2953 = vrot.slane %v2948, %v2952
          %v2955 = vmul.f32 %v2943, %v2953
          %v2956 = vld [vmem:[%s23] sm:$0x1]
          %v2958 = vlaneseq
          %v2959 = vshrl.u32 %v2958, 7
          %v2960 = vsub.s32 0, %v2959
          %v2961 = vrot.slane %v2956, %v2960
          %v2963 = vadd.f32 %v2955, %v2961
          %v2964 = vmax.f32 %v2963, 0.0
          %v2965 = vpack.c.bf16 %v2964, %v2964
          %v2966 = vld [vmem:[%s24] sm:$0xf]
          %v2967 = vld [vmem:[%s24 + $0x4] sm:$0xf]
          %v2968 = vld [vmem:[%s24 + $0x8] sm:$0xf]
          %v2969 = vld [vmem:[%s24 + $0xc] sm:$0xf]
          %v2970 = vld [vmem:[%s24 + $0x10] sm:$0xf]
          %v2971 = vld [vmem:[%s24 + $0x14] sm:$0xf]
          %v2972 = vld [vmem:[%s24 + $0x18] sm:$0xf]
          %v2973 = vld [vmem:[%s24 + $0x1c] sm:$0xf]
          %v2974 = vld [vmem:[%s24 + $0x20] sm:$0xf]
          %v2975 = vld [vmem:[%s24 + $0x24] sm:$0xf]
          %v2976 = vld [vmem:[%s24 + $0x28] sm:$0xf]
          %v2977 = vld [vmem:[%s24 + $0x2c] sm:$0xf]
          %v2978 = vld [vmem:[%s24 + $0x30] sm:$0xf]
          %v2979 = vld [vmem:[%s24 + $0x34] sm:$0xf]
          %v2980 = vld [vmem:[%s24 + $0x38] sm:$0xf]
          %v2981 = vld [vmem:[%s24 + $0x3c] sm:$0xf]
          %v2982 = vld [vmem:[%s25] sm:$0x1]
          %v2984 = vlaneseq
          %v2985 = vshrl.u32 %v2984, 7
          %v2986 = vsub.s32 0, %v2985
          %v2987 = vrot.slane %v2982, %v2986
          %v3005 = vunpack.c.l.b16 %v2966
          %v3006 = vunpack.c.l.b16 %v2967
          %v3007 = vunpack.c.l.b16 %v2968
          %v3008 = vunpack.c.l.b16 %v2969
          %v3009 = vunpack.c.l.b16 %v2970
          %v3010 = vunpack.c.l.b16 %v2971
          %v3011 = vunpack.c.l.b16 %v2972
          %v3012 = vunpack.c.l.b16 %v2973
          %v3013 = vunpack.c.l.b16 %v2974
          %v3014 = vunpack.c.l.b16 %v2975
          %v3015 = vunpack.c.l.b16 %v2976
          %v3016 = vunpack.c.l.b16 %v2977
          %v3017 = vunpack.c.l.b16 %v2978
          %v3018 = vunpack.c.l.b16 %v2979
          %v3019 = vunpack.c.l.b16 %v2980
          %v3020 = vunpack.c.l.b16 %v2981
          %v3021 = vpack.c.b16 %v3006, %v3005
          %v3022 = vpack.c.b16 %v3008, %v3007
          %v3023 = vpack.c.b16 %v3010, %v3009
          %v3024 = vpack.c.b16 %v3012, %v3011
          %v3025 = vpack.c.b16 %v3014, %v3013
          %v3026 = vpack.c.b16 %v3016, %v3015
          %v3027 = vpack.c.b16 %v3018, %v3017
          %v3028 = vpack.c.b16 %v3020, %v3019
          %3037 = vmatprep.subr.bf16.mxu0 0
          %3038 = vmatpush1.bf16.msra.mxu0 %v3028
          %3039 = vmatprep.subr.bf16.mxu0 0
          %3040 = vmatpush1.bf16.msra.mxu0 %v3027
          %3041 = vmatprep.subr.bf16.mxu0 0
          %3042 = vmatpush1.bf16.msra.mxu0 %v3026
          %3043 = vmatprep.subr.bf16.mxu0 0
          %3044 = vmatpush1.bf16.msra.mxu0 %v3025
          %3045 = vmatprep.subr.bf16.mxu0 0
          %3046 = vmatpush1.bf16.msra.mxu0 %v3024
          %3047 = vmatprep.subr.bf16.mxu0 0
          %3048 = vmatpush1.bf16.msra.mxu0 %v3023
          %3049 = vmatprep.subr.bf16.mxu0 0
          %3050 = vmatpush1.bf16.msra.mxu0 %v3022
          %3051 = vmatprep.subr.bf16.mxu0 0
          %3052 = vmatpush1.bf16.msra.mxu0 %v3021
          %3053 = vmatprep.subr.bf16.mxu0 0
          %3054 = vmatpush2.bf16.msra.mxu0 0
          %3055 = vmatprep.subr.bf16.mxu0 0
          %3056 = vmatpush2.bf16.msra.mxu0 0
          %3057 = vmatprep.subr.bf16.mxu0 0
          %3058 = vmatpush2.bf16.msra.mxu0 0
          %3059 = vmatprep.subr.bf16.mxu0 0
          %3060 = vmatpush2.bf16.msra.mxu0 0
          %3061 = vmatprep.subr.bf16.mxu0 0
          %3062 = vmatpush2.bf16.msra.mxu0 0
          %3063 = vmatprep.subr.bf16.mxu0 0
          %3064 = vmatpush2.bf16.msra.mxu0 0
          %3065 = vmatprep.subr.bf16.mxu0 0
          %3066 = vmatpush2.bf16.msra.mxu0 0
          %3067 = vmatprep.subr.bf16.mxu0 0
          %3068 = vmatpush2.bf16.msra.mxu0 0
          %3069 = vmatprep.mubr.bf16.mxu0 0
          %3070 = vmatmul.mubr.bf16.gmra.mxu0 %v2965
          %v3071 = vpop.f32.mrf.mxu0
          %v3072 = vadd.f32 %v2987, %v3071
          %v3073 = vpop.f32.mrf.mxu0
          %v3074 = vpop.f32.mrf.mxu0
          %v3075 = vpop.f32.mrf.mxu0
          %3076 = vdwg.mxu0
          %vm3077 = vcmask 9216
          %3078 = vst.msk [vmem:[#allocation7] sm:$0x3] %vm3077, %v3072
          %v3079 = vsel %vm3077, %v3072, -inf
          %3080 = vmax.xlane.f32.xlu0 %v3079
          %v3081 = vpop.xlane.xlu0 %3080
          %v3082 = vsub.f32 %v3072, %v3081
          %v3083 = vmul.f32 %v3082, 1.442695
          %v3084 = vpow.pop %v3083
          %v3085 = vsel %vm3077, %v3084, 0.0
          %3086 = vadd.xlane.f32.xlu0 %v3085
          %v3087 = vpop.xlane.xlu0 %3086
          %v3088 = vrcp.pop %v3087
          %v3089 = vmul.f32 %v3084, %v3088
          %3090 = vst.msk [vmem:[#allocation8] sm:$0x3] %vm3077, %v3089
        $region144: #{bert_classifier_forward.1} parent=123 // pred_fallthru
          _
        // Predicated region
        $region145: #{bert_classifier_forward.1} parent=123 // pred_check
          %p3091 = pneg %p663
        $region146: #{bert_classifier_forward.1} parent=123 // pred_check_branch
          %3093 = sbr.rel (%p3091) target = $region148
        $region147: #{bert_classifier_forward.1} parent=123 // pred_region
          %s3095 = ssub.s32 32, 32
          %3096 = vsyncadd [#allocation6], %s3095
          %s3098 = sshll.u32 [#allocation7], 4
          %s3099 = int_to_ptr.vmem [resolvable:$true] %s3098
          %3101 = dma.vmem_to_hbm [thread:$0]  %s3099, 32, %s26, [#allocation6]
        $region148: #{bert_classifier_forward.1} parent=123 // pred_fallthru
          _
        // Predicated region
        $region149: #{bert_classifier_forward.1} parent=123 // pred_check
          %p3102 = pneg %p684
        $region150: #{bert_classifier_forward.1} parent=123 // pred_check_branch
          %3104 = sbr.rel (%p3102) target = $region152
        $region151: #{bert_classifier_forward.1} parent=123 // pred_region
          %s3106 = ssub.s32 32, 32
          %3107 = vsyncadd [#allocation9], %s3106
          %s3109 = sshll.u32 [#allocation8], 4
          %s3110 = int_to_ptr.vmem [resolvable:$true] %s3109
          %3112 = dma.vmem_to_hbm [thread:$0]  %s3110, 32, %s27, [#allocation9]
        $region152: #{bert_classifier_forward.1} parent=123 // pred_fallthru
          _
        // Predicated region
        $region153: #{bert_classifier_forward.1} parent=123 // pred_check
          %p3113 = pneg %p663
        $region154: #{bert_classifier_forward.1} parent=123 // pred_check_branch
          %3115 = sbr.rel (%p3113) target = $region156
        $region155: #{bert_classifier_forward.1} parent=123 // pred_region
          %3116 = dma.done [#allocation6], 32
        $region156: #{bert_classifier_forward.1} parent=123 // pred_fallthru
          _
        // Predicated region
        $region157: #{bert_classifier_forward.1} parent=123 // pred_check
          %p3117 = pneg %p684
        $region158: #{bert_classifier_forward.1} parent=123 // pred_check_branch
          %3119 = sbr.rel (%p3117) target = $region160
        $region159: #{bert_classifier_forward.1} parent=123 // pred_region
          %3120 = dma.done [#allocation9], 32
        $region160: #{bert_classifier_forward.1} parent=123 // pred_fallthru
          _
      $region124: #{bert_classifier_forward.1} parent=5 // pred_fallthru
        _
      %p3121 = scmp.le.s32.totalorder 2, %s39
      // Predicated region
      $region161: #{bert_classifier_forward.1} parent=5 // pred_check
        %p3122 = pneg %p3121
      $region162: #{bert_classifier_forward.1} parent=5 // pred_check_branch
        %3124 = sbr.rel (%p3122) target = $region164
      $region163: #{bert_classifier_forward.1} parent=5 // pred_region
        %s3125 = ssub.s32 %s39, 2
      $region164: #{bert_classifier_forward.1} parent=5 // pred_fallthru
        _
    $region6: #{bert_classifier_forward.1} parent=1 // loop_footer
      %s43 = sadd.s32 1, %s39
    $region7: #{bert_classifier_forward.1} parent=1 // loop_footer_branch
      %38 = sbr.rel target = $region3
    $region8: #{bert_classifier_forward.1} parent=1 // loop_exit
      _
    %3126 = vsyncpa [#allocation5], 1
    %s3127 = scalar_lea.sflag [#allocation5], 1
    %3128 = vsyncpa %s3127, 1
    %3129 = vsyncpa [#allocation6], 1
    %s3130 = scalar_lea.sflag [#allocation6], 1
    %3131 = vsyncpa %s3130, 1
    %3132 = vsyncpa [#allocation9], 1

</llo_original>
